<compile_context>
chip_gen: v7x
topology: tpu7x:2x2x1
jax: 0.10.0
libtpu: 0.0.40
codegen_flags: <defaults>
</compile_context>

<pallas_src>
import functools

import jax
import jax.numpy as jnp
import numpy as np
from jax.experimental import pallas as pl
from jax.experimental.pallas import tpu as pltpu

EPS = 1e-5


# ---------------------------------------------------------------------------
# Kernels
# ---------------------------------------------------------------------------
def _conv_relu_stats_kernel(x_ref, w_ref, b_ref, sc_ref, sh_ref, m_ref,
                            y_ref, psum_ref, psumsq_ref, *, W, compute_dtype):
    """Fused (prev-BN affine) -> Conv3x3 -> bias -> ReLU -> partial BN stats.

    Blocks (one batch element per grid step, pixels lane-dense):
      x_ref     : (1, Cin, H*W)   input activation
      w_ref     : (9, Cout, Cin)  conv weights, tap index k = kh*3 + kw
      b_ref     : (Cout, 1)       conv bias
      sc_ref    : (Cin, 1)        per-channel scale folded from previous BN
      sh_ref    : (Cin, 1)        per-channel shift folded from previous BN
      m_ref     : (9, H*W)        static border-validity mask per tap
      y_ref     : (1, Cout, H*W)  conv+bias+ReLU output (pre-BN)
      psum_ref  : (1, Cout, 1)    per-channel sum of y (this batch element)
      psumsq_ref: (1, Cout, 1)    per-channel sum of y**2
    """
    Cin, HW = x_ref.shape[1], x_ref.shape[2]
    Cout = w_ref.shape[1]

    # Fold the previous stage's BatchNorm affine (identity for stage 1) into
    # the input read.  The border masks below re-zero the conv padding region
    # afterwards, which matches zero-padding the post-BN activation.
    x = x_ref[0] * sc_ref[...] + sh_ref[...]                 # (Cin, HW) f32

    # Zero-extend the flattened pixel axis once with lane-aligned (multiple
    # of 128) chunks so every 3x3 tap is just a static lane slice of the same
    # buffer -- no HBM pad copy, no per-tap reshape of the activation.
    pad = ((W + 1 + 127) // 128) * 128
    zpad = jnp.zeros((Cin, pad), jnp.float32)
    xpad = jnp.concatenate([zpad, x, zpad], axis=1)          # (Cin, HW+2*pad)

    w = w_ref[...]                                           # (9, Cout, Cin)
    masks = m_ref[...]                                       # (9, HW) f32

    acc = jnp.zeros((Cout, HW), jnp.float32)
    for kh in range(3):
        for kw in range(3):
            k = kh * 3 + kw
            s = (kh - 1) * W + (kw - 1)                      # flat pixel shift
            tap = xpad[:, pad + s:pad + s + HW]              # tap[:, p] = x[:, p+s]
            tap = (tap * masks[k:k + 1, :]).astype(compute_dtype)
            acc = acc + jnp.dot(w[k], tap,
                                preferred_element_type=jnp.float32)

    y = jnp.maximum(acc + b_ref[...], 0.0)                   # bias + ReLU, f32

    y_ref[0] = y
    # Streaming BatchNorm statistics: per-channel partial sums, finalized
    # outside the kernel -> the batch grid axis stays fully "parallel".
    psum_ref[0] = jnp.sum(y, axis=1, keepdims=True)
    psumsq_ref[0] = jnp.sum(y * y, axis=1, keepdims=True)


def _bn_affine_kernel(y_ref, sc_ref, sh_ref, o_ref):
    """Elementwise per-channel y * scale + shift (final BN2 application)."""
    o_ref[0] = y_ref[0] * sc_ref[...] + sh_ref[...]


# ---------------------------------------------------------------------------
# Wrappers
# ---------------------------------------------------------------------------
def _make_tap_masks(H, W):
    """(9, H*W) f32 validity masks: tap (kh, kw) is 1 where the shifted source
    pixel lies inside the image (the conv zero-padding region -> 0)."""
    masks = np.zeros((9, H * W), np.float32)
    for kh in range(3):
        for kw in range(3):
            dh, dw = kh - 1, kw - 1
            m = np.zeros((H, W), np.float32)
            m[max(0, -dh):min(H, H - dh), max(0, -dw):min(W, W - dw)] = 1.0
            masks[kh * 3 + kw] = m.reshape(-1)
    return jnp.asarray(masks)


def _conv_stage(x, w_hwio, b, scale_in, shift_in, masks, W, compute_dtype):
    """One Conv3x3 (+ folded previous BN) + ReLU stage with streaming BN stats."""
    N, Cin, HW = x.shape
    KH, KW, _, Cout = w_hwio.shape
    K = KH * KW

    # HWIO (kh,kw,ci,co) -> (k, co, ci); cast the MXU operand to compute_dtype
    # (bf16 by default: peak MXU rate + half the weight/patch VMEM traffic).
    w9 = jnp.transpose(w_hwio.reshape(K, Cin, Cout), (0, 2, 1)).astype(compute_dtype)
    b2 = b.reshape(Cout, 1)

    kernel = functools.partial(_conv_relu_stats_kernel, W=W,
                               compute_dtype=compute_dtype)

    flops = 2 * N * HW * K * Cin * Cout
    bytes_accessed = (x.size * x.dtype.itemsize
                      + w9.size * w9.dtype.itemsize
                      + masks.size * 4
                      + N * Cout * HW * 4        # y output
                      + 2 * N * Cout * 4)        # partial stats

    return pl.pallas_call(
        kernel,
        grid_spec=pltpu.PrefetchScalarGridSpec(
            num_scalar_prefetch=0,
            grid=(N,),
            in_specs=[
                pl.BlockSpec((1, Cin, HW), lambda n: (n, 0, 0)),
                pl.BlockSpec((K, Cout, Cin), lambda n: (0, 0, 0)),
                pl.BlockSpec((Cout, 1), lambda n: (0, 0)),
                pl.BlockSpec((Cin, 1), lambda n: (0, 0)),
                pl.BlockSpec((Cin, 1), lambda n: (0, 0)),
                pl.BlockSpec((K, HW), lambda n: (0, 0)),
            ],
            out_specs=(
                pl.BlockSpec((1, Cout, HW), lambda n: (n, 0, 0)),
                pl.BlockSpec((1, Cout, 1), lambda n: (n, 0, 0)),
                pl.BlockSpec((1, Cout, 1), lambda n: (n, 0, 0)),
            ),
        ),
        out_shape=(
            jax.ShapeDtypeStruct((N, Cout, HW), jnp.float32),
            jax.ShapeDtypeStruct((N, Cout, 1), jnp.float32),
            jax.ShapeDtypeStruct((N, Cout, 1), jnp.float32),
        ),
        compiler_params=pltpu.CompilerParams(
            dimension_semantics=("parallel",),          # shard batch over TCs
            vmem_limit_bytes=32 * 1024 * 1024,
        ),
        cost_estimate=pl.CostEstimate(
            flops=flops, transcendentals=0, bytes_accessed=bytes_accessed),
    )(x, w9, b2, scale_in, shift_in, masks)


def _bn_scale_shift(psum, psumsq, count, gamma, beta):
    """Finalize streaming BN stats -> per-channel (scale, shift), biased var."""
    total = jnp.sum(psum, axis=0)[:, 0]
    totalsq = jnp.sum(psumsq, axis=0)[:, 0]
    mean = total / count
    var = jnp.maximum(totalsq / count - mean * mean, 0.0)
    inv = jax.lax.rsqrt(var + EPS)
    scale = gamma * inv
    shift = beta - mean * scale
    return scale.reshape(-1, 1), shift.reshape(-1, 1)


def _bn_affine(y, scale, shift):
    """Apply the final stage's BN (scale, shift) with a small elementwise kernel."""
    N, C, HW = y.shape
    return pl.pallas_call(
        _bn_affine_kernel,
        grid_spec=pltpu.PrefetchScalarGridSpec(
            num_scalar_prefetch=0,
            grid=(N,),
            in_specs=[
                pl.BlockSpec((1, C, HW), lambda n: (n, 0, 0)),
                pl.BlockSpec((C, 1), lambda n: (0, 0)),
                pl.BlockSpec((C, 1), lambda n: (0, 0)),
            ],
            out_specs=pl.BlockSpec((1, C, HW), lambda n: (n, 0, 0)),
        ),
        out_shape=jax.ShapeDtypeStruct((N, C, HW), jnp.float32),
        compiler_params=pltpu.CompilerParams(
            dimension_semantics=("parallel",)),
    )(y, scale, shift)


def conv_block_forward(x_nchw, params, compute_dtype=jnp.bfloat16):
    """Full ConvBlock forward. Input/output are NCHW like the PyTorch module."""
    N, Cin, H, W = x_nchw.shape
    Cout = params["w1"].shape[-1]
    HW = H * W
    assert HW % 128 == 0, "pixel (H*W) axis must be lane-aligned (multiple of 128)"

    x = x_nchw.reshape(N, Cin, HW)       # NCHW is already channel-sublane / pixel-lane
    masks = _make_tap_masks(H, W)

    # Stage 1: identity pre-affine (conv1 zero-pads the raw input).
    one = jnp.ones((Cin, 1), jnp.float32)
    zero = jnp.zeros((Cin, 1), jnp.float32)
    y1, s1, q1 = _conv_stage(x, params["w1"], params["b1"], one, zero,
                             masks, W, compute_dtype)
    sc1, sh1 = _bn_scale_shift(s1, q1, N * HW, params["g1"], params["be1"])

    # Stage 2: BN1's affine is folded into the input read (no extra HBM pass).
    y2, s2, q2 = _conv_stage(y1, params["w2"], params["b2"], sc1, sh1,
                             masks, W, compute_dtype)
    sc2, sh2 = _bn_scale_shift(s2, q2, N * HW, params["g2"], params["be2"])

    out = _bn_affine(y2, sc2, sh2)       # final BN2 normalize + affine
    return out.reshape(N, Cout, H, W)


# ---------------------------------------------------------------------------
# Pure-JAX reference & parameter init
# ---------------------------------------------------------------------------
def _ref_stage(x, w, b, g, be):
    """Reference for one Conv->ReLU->BN (training stats) stage, NHWC."""
    y = jax.lax.conv_general_dilated(
        x, w, window_strides=(1, 1), padding=[(1, 1), (1, 1)],
        dimension_numbers=("NHWC", "HWIO", "NHWC")) + b
    y = jnp.maximum(y, 0.0)
    mean = y.mean(axis=(0, 1, 2), keepdims=True)
    var = ((y - mean) ** 2).mean(axis=(0, 1, 2), keepdims=True)
    return g * (y - mean) * jax.lax.rsqrt(var + EPS) + be


def _ref_forward(x_nchw, p):
    x = jnp.transpose(x_nchw, (0, 2, 3, 1))
    y = _ref_stage(x, p["w1"], p["b1"], p["g1"], p["be1"])
    y = _ref_stage(y, p["w2"], p["b2"], p["g2"], p["be2"])
    return jnp.transpose(y, (0, 3, 1, 2))


def init_params(key, cin, cout, kh=3, kw=3):
    """Deterministic synthetic parameters (shapes match nn.Conv2d/BatchNorm2d)."""
    ks = jax.random.split(key, 4)
    fan1 = cin * kh * kw
    fan2 = cout * kh * kw
    return {
        "w1": jax.random.normal(ks[0], (kh, kw, cin, cout), jnp.float32)
              / jnp.sqrt(fan1),
        "b1": jax.random.normal(ks[1], (cout,), jnp.float32) * 0.1,
        "g1": jnp.ones((cout,), jnp.float32),
        "be1": jnp.zeros((cout,), jnp.float32),
        "w2": jax.random.normal(ks[2], (kh, kw, cout, cout), jnp.float32)
              / jnp.sqrt(fan2),
        "b2": jax.random.normal(ks[3], (cout,), jnp.float32) * 0.1,
        "g2": jnp.ones((cout,), jnp.float32),
        "be2": jnp.zeros((cout,), jnp.float32),
    }


if __name__ == "__main__":
    key = jax.random.PRNGKey(0)
    kx, kp = jax.random.split(key)

    N, CIN, H, W = 2, 4, 16, 16
    COUT = 8

    x = jax.random.normal(kx, (N, CIN, H, W), jnp.float32)   # NCHW like PyTorch
    params = init_params(kp, CIN, COUT)

    fwd = jax.jit(conv_block_forward, static_argnames=("compute_dtype",))
    ref = jax.block_until_ready(_ref_forward(x, params))

    # f32 MXU operands: tight check against the pure-JAX reference.
    out_f32 = jax.block_until_ready(fwd(x, params, compute_dtype=jnp.float32))
    assert out_f32.shape == (N, COUT, H, W), out_f32.shape
    assert jnp.allclose(out_f32, ref, atol=5e-4, rtol=5e-4), "f32 mismatch vs reference"

    # bf16 MXU operands (default; recommended on v6e/v7x): looser check.
    out_bf16 = jax.block_until_ready(fwd(x, params))
    assert out_bf16.shape == (N, COUT, H, W), out_bf16.shape
    assert jnp.allclose(out_bf16, ref, atol=5e-2, rtol=5e-2), "bf16 mismatch vs reference"

    print("KERNEL_OK")
</pallas_src>

<mosaic_0001>
module attributes {stable_mosaic.version = 11 : i64} {
  func.func @_bn_affine_kernel(%arg0: i32, %arg1: memref<1x8x256xf32, #tpu.memory_space<vmem>>, %arg2: memref<8x1xf32, #tpu.memory_space<vmem>>, %arg3: memref<8x1xf32, #tpu.memory_space<vmem>>, %arg4: memref<1x8x256xf32, #tpu.memory_space<vmem>>) attributes {dimension_semantics = [#tpu.dimension_semantics<parallel>], iteration_bounds = array<i64: 2>, scalar_prefetch = 0 : i64, scratch_operands = 0 : i64, tpu.core_type = #tpu.core_type<tc>, window_params = [{transform_indices = @transform_0, window_bounds = array<i64: 1, 8, 256>}, {pipeline_mode = #tpu.pipeline_mode<synchronous>, transform_indices = @transform_1, window_bounds = array<i64: 8, 1>}, {pipeline_mode = #tpu.pipeline_mode<synchronous>, transform_indices = @transform_2, window_bounds = array<i64: 8, 1>}, {transform_indices = @transform_3, window_bounds = array<i64: 1, 8, 256>}]} {
    %c0 = arith.constant 0 : index
    %c0_0 = arith.constant 0 : index
    %c0_1 = arith.constant 0 : index
    %0 = vector.load %arg1[%c0, %c0_0, %c0_1] : memref<1x8x256xf32, #tpu.memory_space<vmem>>, vector<1x8x256xf32>
    %1 = vector.shape_cast %0 : vector<1x8x256xf32> to vector<8x256xf32>
    %c0_2 = arith.constant 0 : index
    %c0_3 = arith.constant 0 : index
    %2 = vector.load %arg2[%c0_2, %c0_3] : memref<8x1xf32, #tpu.memory_space<vmem>>, vector<8x1xf32>
    %3 = vector.broadcast %2 : vector<8x1xf32> to vector<8x256xf32>
    %4 = arith.mulf %1, %3 : vector<8x256xf32>
    %c0_4 = arith.constant 0 : index
    %c0_5 = arith.constant 0 : index
    %5 = vector.load %arg3[%c0_4, %c0_5] : memref<8x1xf32, #tpu.memory_space<vmem>>, vector<8x1xf32>
    %6 = vector.broadcast %5 : vector<8x1xf32> to vector<8x256xf32>
    %7 = arith.addf %4, %6 : vector<8x256xf32>
    %c0_6 = arith.constant 0 : index
    %c0_7 = arith.constant 0 : index
    %c0_8 = arith.constant 0 : index
    %8 = vector.load %arg4[%c0_6, %c0_7, %c0_8] : memref<1x8x256xf32, #tpu.memory_space<vmem>>, vector<1x8x256xf32>
    %9 = vector.shape_cast %8 : vector<1x8x256xf32> to vector<8x256xf32>
    %10 = vector.shape_cast %7 : vector<8x256xf32> to vector<1x8x256xf32>
    tpu.vector_store %arg4[%c0_6, %c0_7, %c0_8], %10 {strides = array<i32>} : memref<1x8x256xf32, #tpu.memory_space<vmem>>, vector<1x8x256xf32>,
    return
  }
  func.func @transform_0(%arg0: i32) -> (i32, i32, i32) {
    %c0_i32 = arith.constant 0 : i32
    %c0_i32_0 = arith.constant 0 : i32
    %c0_i32_1 = arith.constant 0 : i32
    return %arg0, %c0_i32, %c0_i32_0 : i32, i32, i32
  }
  func.func @transform_1(%arg0: i32) -> (i32, i32) {
    %c0_i32 = arith.constant 0 : i32
    %c0_i32_0 = arith.constant 0 : i32
    %c0_i32_1 = arith.constant 0 : i32
    return %c0_i32, %c0_i32_0 : i32, i32
  }
  func.func @transform_2(%arg0: i32) -> (i32, i32) {
    %c0_i32 = arith.constant 0 : i32
    %c0_i32_0 = arith.constant 0 : i32
    %c0_i32_1 = arith.constant 0 : i32
    return %c0_i32, %c0_i32_0 : i32, i32
  }
  func.func @transform_3(%arg0: i32) -> (i32, i32, i32) {
    %c0_i32 = arith.constant 0 : i32
    %c0_i32_0 = arith.constant 0 : i32
    %c0_i32_1 = arith.constant 0 : i32
    return %arg0, %c0_i32, %c0_i32_0 : i32, i32, i32
  }
}

module attributes {stable_mosaic.version = 11 : i64} {
  func.func @_conv_relu_stats_kernel(%arg0: i32, %arg1: memref<1x4x256xf32, #tpu.memory_space<vmem>>, %arg2: memref<9x8x4xf32, #tpu.memory_space<vmem>>, %arg3: memref<8x1xf32, #tpu.memory_space<vmem>>, %arg4: memref<4x1xf32, #tpu.memory_space<vmem>>, %arg5: memref<4x1xf32, #tpu.memory_space<vmem>>, %arg6: memref<9x256xf32, #tpu.memory_space<vmem>>, %arg7: memref<1x8x256xf32, #tpu.memory_space<vmem>>, %arg8: memref<1x8x1xf32, #tpu.memory_space<vmem>>, %arg9: memref<1x8x1xf32, #tpu.memory_space<vmem>>) attributes {dimension_semantics = [#tpu.dimension_semantics<parallel>], iteration_bounds = array<i64: 2>, scalar_prefetch = 0 : i64, scratch_operands = 0 : i64, tpu.core_type = #tpu.core_type<tc>, window_params = [{transform_indices = @transform_0, window_bounds = array<i64: 1, 4, 256>}, {pipeline_mode = #tpu.pipeline_mode<synchronous>, transform_indices = @transform_1, window_bounds = array<i64: 9, 8, 4>}, {pipeline_mode = #tpu.pipeline_mode<synchronous>, transform_indices = @transform_2, window_bounds = array<i64: 8, 1>}, {pipeline_mode = #tpu.pipeline_mode<synchronous>, transform_indices = @transform_3, window_bounds = array<i64: 4, 1>}, {pipeline_mode = #tpu.pipeline_mode<synchronous>, transform_indices = @transform_4, window_bounds = array<i64: 4, 1>}, {pipeline_mode = #tpu.pipeline_mode<synchronous>, transform_indices = @transform_5, window_bounds = array<i64: 9, 256>}, {transform_indices = @transform_6, window_bounds = array<i64: 1, 8, 256>}, {transform_indices = @transform_7, window_bounds = array<i64: 1, 8, 1>}, {transform_indices = @transform_8, window_bounds = array<i64: 1, 8, 1>}]} {
    %c0 = arith.constant 0 : index
    %c0_0 = arith.constant 0 : index
    %c0_1 = arith.constant 0 : index
    %0 = vector.load %arg1[%c0, %c0_0, %c0_1] : memref<1x4x256xf32, #tpu.memory_space<vmem>>, vector<1x4x256xf32>
    %1 = vector.shape_cast %0 : vector<1x4x256xf32> to vector<4x256xf32>
    %c0_2 = arith.constant 0 : index
    %c0_3 = arith.constant 0 : index
    %2 = vector.load %arg4[%c0_2, %c0_3] : memref<4x1xf32, #tpu.memory_space<vmem>>, vector<4x1xf32>
    %3 = vector.broadcast %2 : vector<4x1xf32> to vector<4x256xf32>
    %4 = arith.mulf %1, %3 : vector<4x256xf32>
    %c0_4 = arith.constant 0 : index
    %c0_5 = arith.constant 0 : index
    %5 = vector.load %arg5[%c0_4, %c0_5] : memref<4x1xf32, #tpu.memory_space<vmem>>, vector<4x1xf32>
    %6 = vector.broadcast %5 : vector<4x1xf32> to vector<4x256xf32>
    %7 = arith.addf %4, %6 : vector<4x256xf32>
    %cst = arith.constant 0.000000e+00 : f32
    %8 = vector.broadcast %cst : f32 to vector<4x128xf32>
    %9 = tpu.concatenate %8, %7, %8 in 1 : vector<4x128xf32>, vector<4x256xf32>, vector<4x128xf32> -> vector<4x512xf32>
    %c0_6 = arith.constant 0 : index
    %c0_7 = arith.constant 0 : index
    %c0_8 = arith.constant 0 : index
    %10 = vector.load %arg2[%c0_6, %c0_7, %c0_8] : memref<9x8x4xf32, #tpu.memory_space<vmem>>, vector<9x8x4xf32>
    %c0_9 = arith.constant 0 : index
    %c0_10 = arith.constant 0 : index
    %11 = vector.load %arg6[%c0_9, %c0_10] : memref<9x256xf32, #tpu.memory_space<vmem>>, vector<9x256xf32>
    %cst_11 = arith.constant 0.000000e+00 : f32
    %12 = vector.broadcast %cst_11 : f32 to vector<8x256xf32>
    %13 = vector.extract_strided_slice %9 {offsets = [0, 111], sizes = [4, 256], strides = [1, 1]} : vector<4x512xf32> to vector<4x256xf32>
    %14 = vector.extract_strided_slice %11 {offsets = [0, 0], sizes = [1, 256], strides = [1, 1]} : vector<9x256xf32> to vector<1x256xf32>
    %15 = vector.broadcast %14 : vector<1x256xf32> to vector<4x256xf32>
    %16 = arith.mulf %13, %15 : vector<4x256xf32>
    %17 = vector.extract_strided_slice %10 {offsets = [0, 0, 0], sizes = [1, 8, 4], strides = [1, 1, 1]} : vector<9x8x4xf32> to vector<1x8x4xf32>
    %18 = vector.shape_cast %17 : vector<1x8x4xf32> to vector<8x4xf32>
    %cst_12 = arith.constant dense<0.000000e+00> : vector<8x256xf32>
    %19 = tpu.matmul %18, %16, %cst_12 {dimension_numbers = #tpu.dot_dimension_numbers<[1], [0], [0], [1], [0, 0, 1, 1], [], []>} : vector<8x4xf32>, vector<4x256xf32>, vector<8x256xf32> -> vector<8x256xf32>
    %20 = arith.addf %12, %19 : vector<8x256xf32>
    %21 = vector.extract_strided_slice %9 {offsets = [0, 112], sizes = [4, 256], strides = [1, 1]} : vector<4x512xf32> to vector<4x256xf32>
    %22 = vector.extract_strided_slice %11 {offsets = [1, 0], sizes = [1, 256], strides = [1, 1]} : vector<9x256xf32> to vector<1x256xf32>
    %23 = vector.broadcast %22 : vector<1x256xf32> to vector<4x256xf32>
    %24 = arith.mulf %21, %23 : vector<4x256xf32>
    %25 = vector.extract_strided_slice %10 {offsets = [1, 0, 0], sizes = [1, 8, 4], strides = [1, 1, 1]} : vector<9x8x4xf32> to vector<1x8x4xf32>
    %26 = vector.shape_cast %25 : vector<1x8x4xf32> to vector<8x4xf32>
    %cst_13 = arith.constant dense<0.000000e+00> : vector<8x256xf32>
    %27 = tpu.matmul %26, %24, %cst_13 {dimension_numbers = #tpu.dot_dimension_numbers<[1], [0], [0], [1], [0, 0, 1, 1], [], []>} : vector<8x4xf32>, vector<4x256xf32>, vector<8x256xf32> -> vector<8x256xf32>
    %28 = arith.addf %20, %27 : vector<8x256xf32>
    %29 = vector.extract_strided_slice %9 {offsets = [0, 113], sizes = [4, 256], strides = [1, 1]} : vector<4x512xf32> to vector<4x256xf32>
    %30 = vector.extract_strided_slice %11 {offsets = [2, 0], sizes = [1, 256], strides = [1, 1]} : vector<9x256xf32> to vector<1x256xf32>
    %31 = vector.broadcast %30 : vector<1x256xf32> to vector<4x256xf32>
    %32 = arith.mulf %29, %31 : vector<4x256xf32>
    %33 = vector.extract_strided_slice %10 {offsets = [2, 0, 0], sizes = [1, 8, 4], strides = [1, 1, 1]} : vector<9x8x4xf32> to vector<1x8x4xf32>
    %34 = vector.shape_cast %33 : vector<1x8x4xf32> to vector<8x4xf32>
    %cst_14 = arith.constant dense<0.000000e+00> : vector<8x256xf32>
    %35 = tpu.matmul %34, %32, %cst_14 {dimension_numbers = #tpu.dot_dimension_numbers<[1], [0], [0], [1], [0, 0, 1, 1], [], []>} : vector<8x4xf32>, vector<4x256xf32>, vector<8x256xf32> -> vector<8x256xf32>
    %36 = arith.addf %28, %35 : vector<8x256xf32>
    %37 = vector.extract_strided_slice %9 {offsets = [0, 127], sizes = [4, 256], strides = [1, 1]} : vector<4x512xf32> to vector<4x256xf32>
    %38 = vector.extract_strided_slice %11 {offsets = [3, 0], sizes = [1, 256], strides = [1, 1]} : vector<9x256xf32> to vector<1x256xf32>
    %39 = vector.broadcast %38 : vector<1x256xf32> to vector<4x256xf32>
    %40 = arith.mulf %37, %39 : vector<4x256xf32>
    %41 = vector.extract_strided_slice %10 {offsets = [3, 0, 0], sizes = [1, 8, 4], strides = [1, 1, 1]} : vector<9x8x4xf32> to vector<1x8x4xf32>
    %42 = vector.shape_cast %41 : vector<1x8x4xf32> to vector<8x4xf32>
    %cst_15 = arith.constant dense<0.000000e+00> : vector<8x256xf32>
    %43 = tpu.matmul %42, %40, %cst_15 {dimension_numbers = #tpu.dot_dimension_numbers<[1], [0], [0], [1], [0, 0, 1, 1], [], []>} : vector<8x4xf32>, vector<4x256xf32>, vector<8x256xf32> -> vector<8x256xf32>
    %44 = arith.addf %36, %43 : vector<8x256xf32>
    %45 = vector.extract_strided_slice %9 {offsets = [0, 128], sizes = [4, 256], strides = [1, 1]} : vector<4x512xf32> to vector<4x256xf32>
    %46 = vector.extract_strided_slice %11 {offsets = [4, 0], sizes = [1, 256], strides = [1, 1]} : vector<9x256xf32> to vector<1x256xf32>
    %47 = vector.broadcast %46 : vector<1x256xf32> to vector<4x256xf32>
    %48 = arith.mulf %45, %47 : vector<4x256xf32>
    %49 = vector.extract_strided_slice %10 {offsets = [4, 0, 0], sizes = [1, 8, 4], strides = [1, 1, 1]} : vector<9x8x4xf32> to vector<1x8x4xf32>
    %50 = vector.shape_cast %49 : vector<1x8x4xf32> to vector<8x4xf32>
    %cst_16 = arith.constant dense<0.000000e+00> : vector<8x256xf32>
    %51 = tpu.matmul %50, %48, %cst_16 {dimension_numbers = #tpu.dot_dimension_numbers<[1], [0], [0], [1], [0, 0, 1, 1], [], []>} : vector<8x4xf32>, vector<4x256xf32>, vector<8x256xf32> -> vector<8x256xf32>
    %52 = arith.addf %44, %51 : vector<8x256xf32>
    %53 = vector.extract_strided_slice %9 {offsets = [0, 129], sizes = [4, 256], strides = [1, 1]} : vector<4x512xf32> to vector<4x256xf32>
    %54 = vector.extract_strided_slice %11 {offsets = [5, 0], sizes = [1, 256], strides = [1, 1]} : vector<9x256xf32> to vector<1x256xf32>
    %55 = vector.broadcast %54 : vector<1x256xf32> to vector<4x256xf32>
    %56 = arith.mulf %53, %55 : vector<4x256xf32>
    %57 = vector.extract_strided_slice %10 {offsets = [5, 0, 0], sizes = [1, 8, 4], strides = [1, 1, 1]} : vector<9x8x4xf32> to vector<1x8x4xf32>
    %58 = vector.shape_cast %57 : vector<1x8x4xf32> to vector<8x4xf32>
    %cst_17 = arith.constant dense<0.000000e+00> : vector<8x256xf32>
    %59 = tpu.matmul %58, %56, %cst_17 {dimension_numbers = #tpu.dot_dimension_numbers<[1], [0], [0], [1], [0, 0, 1, 1], [], []>} : vector<8x4xf32>, vector<4x256xf32>, vector<8x256xf32> -> vector<8x256xf32>
    %60 = arith.addf %52, %59 : vector<8x256xf32>
    %61 = vector.extract_strided_slice %9 {offsets = [0, 143], sizes = [4, 256], strides = [1, 1]} : vector<4x512xf32> to vector<4x256xf32>
    %62 = vector.extract_strided_slice %11 {offsets = [6, 0], sizes = [1, 256], strides = [1, 1]} : vector<9x256xf32> to vector<1x256xf32>
    %63 = vector.broadcast %62 : vector<1x256xf32> to vector<4x256xf32>
    %64 = arith.mulf %61, %63 : vector<4x256xf32>
    %65 = vector.extract_strided_slice %10 {offsets = [6, 0, 0], sizes = [1, 8, 4], strides = [1, 1, 1]} : vector<9x8x4xf32> to vector<1x8x4xf32>
    %66 = vector.shape_cast %65 : vector<1x8x4xf32> to vector<8x4xf32>
    %cst_18 = arith.constant dense<0.000000e+00> : vector<8x256xf32>
    %67 = tpu.matmul %66, %64, %cst_18 {dimension_numbers = #tpu.dot_dimension_numbers<[1], [0], [0], [1], [0, 0, 1, 1], [], []>} : vector<8x4xf32>, vector<4x256xf32>, vector<8x256xf32> -> vector<8x256xf32>
    %68 = arith.addf %60, %67 : vector<8x256xf32>
    %69 = vector.extract_strided_slice %9 {offsets = [0, 144], sizes = [4, 256], strides = [1, 1]} : vector<4x512xf32> to vector<4x256xf32>
    %70 = vector.extract_strided_slice %11 {offsets = [7, 0], sizes = [1, 256], strides = [1, 1]} : vector<9x256xf32> to vector<1x256xf32>
    %71 = vector.broadcast %70 : vector<1x256xf32> to vector<4x256xf32>
    %72 = arith.mulf %69, %71 : vector<4x256xf32>
    %73 = vector.extract_strided_slice %10 {offsets = [7, 0, 0], sizes = [1, 8, 4], strides = [1, 1, 1]} : vector<9x8x4xf32> to vector<1x8x4xf32>
    %74 = vector.shape_cast %73 : vector<1x8x4xf32> to vector<8x4xf32>
    %cst_19 = arith.constant dense<0.000000e+00> : vector<8x256xf32>
    %75 = tpu.matmul %74, %72, %cst_19 {dimension_numbers = #tpu.dot_dimension_numbers<[1], [0], [0], [1], [0, 0, 1, 1], [], []>} : vector<8x4xf32>, vector<4x256xf32>, vector<8x256xf32> -> vector<8x256xf32>
    %76 = arith.addf %68, %75 : vector<8x256xf32>
    %77 = vector.extract_strided_slice %9 {offsets = [0, 145], sizes = [4, 256], strides = [1, 1]} : vector<4x512xf32> to vector<4x256xf32>
    %78 = vector.extract_strided_slice %11 {offsets = [8, 0], sizes = [1, 256], strides = [1, 1]} : vector<9x256xf32> to vector<1x256xf32>
    %79 = vector.broadcast %78 : vector<1x256xf32> to vector<4x256xf32>
    %80 = arith.mulf %77, %79 : vector<4x256xf32>
    %81 = vector.extract_strided_slice %10 {offsets = [8, 0, 0], sizes = [1, 8, 4], strides = [1, 1, 1]} : vector<9x8x4xf32> to vector<1x8x4xf32>
    %82 = vector.shape_cast %81 : vector<1x8x4xf32> to vector<8x4xf32>
    %cst_20 = arith.constant dense<0.000000e+00> : vector<8x256xf32>
    %83 = tpu.matmul %82, %80, %cst_20 {dimension_numbers = #tpu.dot_dimension_numbers<[1], [0], [0], [1], [0, 0, 1, 1], [], []>} : vector<8x4xf32>, vector<4x256xf32>, vector<8x256xf32> -> vector<8x256xf32>
    %84 = arith.addf %76, %83 : vector<8x256xf32>
    %c0_21 = arith.constant 0 : index
    %c0_22 = arith.constant 0 : index
    %85 = vector.load %arg3[%c0_21, %c0_22] : memref<8x1xf32, #tpu.memory_space<vmem>>, vector<8x1xf32>
    %86 = vector.broadcast %85 : vector<8x1xf32> to vector<8x256xf32>
    %87 = arith.addf %84, %86 : vector<8x256xf32>
    %cst_23 = arith.constant 0.000000e+00 : f32
    %88 = vector.broadcast %cst_23 : f32 to vector<8x256xf32>
    %89 = arith.maximumf %87, %88 : vector<8x256xf32>
    %c0_24 = arith.constant 0 : index
    %c0_25 = arith.constant 0 : index
    %c0_26 = arith.constant 0 : index
    %90 = vector.load %arg7[%c0_24, %c0_25, %c0_26] : memref<1x8x256xf32, #tpu.memory_space<vmem>>, vector<1x8x256xf32>
    %91 = vector.shape_cast %90 : vector<1x8x256xf32> to vector<8x256xf32>
    %92 = vector.shape_cast %89 : vector<8x256xf32> to vector<1x8x256xf32>
    tpu.vector_store %arg7[%c0_24, %c0_25, %c0_26], %92 {strides = array<i32>} : memref<1x8x256xf32, #tpu.memory_space<vmem>>, vector<1x8x256xf32>,
    %cst_27 = arith.constant dense<0.000000e+00> : vector<8xf32>
    %93 = vector.multi_reduction <add>, %89, %cst_27 [1] : vector<8x256xf32> to vector<8xf32>
    %94 = vector.shape_cast %93 : vector<8xf32> to vector<8x1xf32>
    %c0_28 = arith.constant 0 : index
    %c0_29 = arith.constant 0 : index
    %c0_30 = arith.constant 0 : index
    %95 = vector.load %arg8[%c0_28, %c0_29, %c0_30] : memref<1x8x1xf32, #tpu.memory_space<vmem>>, vector<1x8x1xf32>
    %96 = vector.shape_cast %95 : vector<1x8x1xf32> to vector<8x1xf32>
    %97 = vector.shape_cast %94 : vector<8x1xf32> to vector<1x8x1xf32>
    tpu.vector_store %arg8[%c0_28, %c0_29, %c0_30], %97 {strides = array<i32>} : memref<1x8x1xf32, #tpu.memory_space<vmem>>, vector<1x8x1xf32>,
    %98 = arith.mulf %89, %89 : vector<8x256xf32>
    %cst_31 = arith.constant dense<0.000000e+00> : vector<8xf32>
    %99 = vector.multi_reduction <add>, %98, %cst_31 [1] : vector<8x256xf32> to vector<8xf32>
    %100 = vector.shape_cast %99 : vector<8xf32> to vector<8x1xf32>
    %c0_32 = arith.constant 0 : index
    %c0_33 = arith.constant 0 : index
    %c0_34 = arith.constant 0 : index
    %101 = vector.load %arg9[%c0_32, %c0_33, %c0_34] : memref<1x8x1xf32, #tpu.memory_space<vmem>>, vector<1x8x1xf32>
    %102 = vector.shape_cast %101 : vector<1x8x1xf32> to vector<8x1xf32>
    %103 = vector.shape_cast %100 : vector<8x1xf32> to vector<1x8x1xf32>
    tpu.vector_store %arg9[%c0_32, %c0_33, %c0_34], %103 {strides = array<i32>} : memref<1x8x1xf32, #tpu.memory_space<vmem>>, vector<1x8x1xf32>,
    return
  }
  func.func @transform_0(%arg0: i32) -> (i32, i32, i32) {
    %c0_i32 = arith.constant 0 : i32
    %c0_i32_0 = arith.constant 0 : i32
    %c0_i32_1 = arith.constant 0 : i32
    return %arg0, %c0_i32, %c0_i32_0 : i32, i32, i32
  }
  func.func @transform_1(%arg0: i32) -> (i32, i32, i32) {
    %c0_i32 = arith.constant 0 : i32
    %c0_i32_0 = arith.constant 0 : i32
    %c0_i32_1 = arith.constant 0 : i32
    %c0_i32_2 = arith.constant 0 : i32
    return %c0_i32, %c0_i32_0, %c0_i32_1 : i32, i32, i32
  }
  func.func @transform_2(%arg0: i32) -> (i32, i32) {
    %c0_i32 = arith.constant 0 : i32
    %c0_i32_0 = arith.constant 0 : i32
    %c0_i32_1 = arith.constant 0 : i32
    return %c0_i32, %c0_i32_0 : i32, i32
  }
  func.func @transform_3(%arg0: i32) -> (i32, i32) {
    %c0_i32 = arith.constant 0 : i32
    %c0_i32_0 = arith.constant 0 : i32
    %c0_i32_1 = arith.constant 0 : i32
    return %c0_i32, %c0_i32_0 : i32, i32
  }
  func.func @transform_4(%arg0: i32) -> (i32, i32) {
    %c0_i32 = arith.constant 0 : i32
    %c0_i32_0 = arith.constant 0 : i32
    %c0_i32_1 = arith.constant 0 : i32
    return %c0_i32, %c0_i32_0 : i32, i32
  }
  func.func @transform_5(%arg0: i32) -> (i32, i32) {
    %c0_i32 = arith.constant 0 : i32
    %c0_i32_0 = arith.constant 0 : i32
    %c0_i32_1 = arith.constant 0 : i32
    return %c0_i32, %c0_i32_0 : i32, i32
  }
  func.func @transform_6(%arg0: i32) -> (i32, i32, i32) {
    %c0_i32 = arith.constant 0 : i32
    %c0_i32_0 = arith.constant 0 : i32
    %c0_i32_1 = arith.constant 0 : i32
    return %arg0, %c0_i32, %c0_i32_0 : i32, i32, i32
  }
  func.func @transform_7(%arg0: i32) -> (i32, i32, i32) {
    %c0_i32 = arith.constant 0 : i32
    %c0_i32_0 = arith.constant 0 : i32
    %c0_i32_1 = arith.constant 0 : i32
    return %arg0, %c0_i32, %c0_i32_0 : i32, i32, i32
  }
  func.func @transform_8(%arg0: i32) -> (i32, i32, i32) {
    %c0_i32 = arith.constant 0 : i32
    %c0_i32_0 = arith.constant 0 : i32
    %c0_i32_1 = arith.constant 0 : i32
    return %arg0, %c0_i32, %c0_i32_0 : i32, i32, i32
  }
}

module attributes {stable_mosaic.version = 11 : i64} {
  func.func @_conv_relu_stats_kernel(%arg0: i32, %arg1: memref<1x8x256xf32, #tpu.memory_space<vmem>>, %arg2: memref<9x8x8xf32, #tpu.memory_space<vmem>>, %arg3: memref<8x1xf32, #tpu.memory_space<vmem>>, %arg4: memref<8x1xf32, #tpu.memory_space<vmem>>, %arg5: memref<8x1xf32, #tpu.memory_space<vmem>>, %arg6: memref<9x256xf32, #tpu.memory_space<vmem>>, %arg7: memref<1x8x256xf32, #tpu.memory_space<vmem>>, %arg8: memref<1x8x1xf32, #tpu.memory_space<vmem>>, %arg9: memref<1x8x1xf32, #tpu.memory_space<vmem>>) attributes {dimension_semantics = [#tpu.dimension_semantics<parallel>], iteration_bounds = array<i64: 2>, scalar_prefetch = 0 : i64, scratch_operands = 0 : i64, tpu.core_type = #tpu.core_type<tc>, window_params = [{transform_indices = @transform_0, window_bounds = array<i64: 1, 8, 256>}, {pipeline_mode = #tpu.pipeline_mode<synchronous>, transform_indices = @transform_1, window_bounds = array<i64: 9, 8, 8>}, {pipeline_mode = #tpu.pipeline_mode<synchronous>, transform_indices = @transform_2, window_bounds = array<i64: 8, 1>}, {pipeline_mode = #tpu.pipeline_mode<synchronous>, transform_indices = @transform_3, window_bounds = array<i64: 8, 1>}, {pipeline_mode = #tpu.pipeline_mode<synchronous>, transform_indices = @transform_4, window_bounds = array<i64: 8, 1>}, {pipeline_mode = #tpu.pipeline_mode<synchronous>, transform_indices = @transform_5, window_bounds = array<i64: 9, 256>}, {transform_indices = @transform_6, window_bounds = array<i64: 1, 8, 256>}, {transform_indices = @transform_7, window_bounds = array<i64: 1, 8, 1>}, {transform_indices = @transform_8, window_bounds = array<i64: 1, 8, 1>}]} {
    %c0 = arith.constant 0 : index
    %c0_0 = arith.constant 0 : index
    %c0_1 = arith.constant 0 : index
    %0 = vector.load %arg1[%c0, %c0_0, %c0_1] : memref<1x8x256xf32, #tpu.memory_space<vmem>>, vector<1x8x256xf32>
    %1 = vector.shape_cast %0 : vector<1x8x256xf32> to vector<8x256xf32>
    %c0_2 = arith.constant 0 : index
    %c0_3 = arith.constant 0 : index
    %2 = vector.load %arg4[%c0_2, %c0_3] : memref<8x1xf32, #tpu.memory_space<vmem>>, vector<8x1xf32>
    %3 = vector.broadcast %2 : vector<8x1xf32> to vector<8x256xf32>
    %4 = arith.mulf %1, %3 : vector<8x256xf32>
    %c0_4 = arith.constant 0 : index
    %c0_5 = arith.constant 0 : index
    %5 = vector.load %arg5[%c0_4, %c0_5] : memref<8x1xf32, #tpu.memory_space<vmem>>, vector<8x1xf32>
    %6 = vector.broadcast %5 : vector<8x1xf32> to vector<8x256xf32>
    %7 = arith.addf %4, %6 : vector<8x256xf32>
    %cst = arith.constant 0.000000e+00 : f32
    %8 = vector.broadcast %cst : f32 to vector<8x128xf32>
    %9 = tpu.concatenate %8, %7, %8 in 1 : vector<8x128xf32>, vector<8x256xf32>, vector<8x128xf32> -> vector<8x512xf32>
    %c0_6 = arith.constant 0 : index
    %c0_7 = arith.constant 0 : index
    %c0_8 = arith.constant 0 : index
    %10 = vector.load %arg2[%c0_6, %c0_7, %c0_8] : memref<9x8x8xf32, #tpu.memory_space<vmem>>, vector<9x8x8xf32>
    %c0_9 = arith.constant 0 : index
    %c0_10 = arith.constant 0 : index
    %11 = vector.load %arg6[%c0_9, %c0_10] : memref<9x256xf32, #tpu.memory_space<vmem>>, vector<9x256xf32>
    %cst_11 = arith.constant 0.000000e+00 : f32
    %12 = vector.broadcast %cst_11 : f32 to vector<8x256xf32>
    %13 = vector.extract_strided_slice %9 {offsets = [0, 111], sizes = [8, 256], strides = [1, 1]} : vector<8x512xf32> to vector<8x256xf32>
    %14 = vector.extract_strided_slice %11 {offsets = [0, 0], sizes = [1, 256], strides = [1, 1]} : vector<9x256xf32> to vector<1x256xf32>
    %15 = vector.broadcast %14 : vector<1x256xf32> to vector<8x256xf32>
    %16 = arith.mulf %13, %15 : vector<8x256xf32>
    %17 = vector.extract_strided_slice %10 {offsets = [0, 0, 0], sizes = [1, 8, 8], strides = [1, 1, 1]} : vector<9x8x8xf32> to vector<1x8x8xf32>
    %18 = vector.shape_cast %17 : vector<1x8x8xf32> to vector<8x8xf32>
    %cst_12 = arith.constant dense<0.000000e+00> : vector<8x256xf32>
    %19 = tpu.matmul %18, %16, %cst_12 {dimension_numbers = #tpu.dot_dimension_numbers<[1], [0], [0], [1], [0, 0, 1, 1], [], []>} : vector<8x8xf32>, vector<8x256xf32>, vector<8x256xf32> -> vector<8x256xf32>
    %20 = arith.addf %12, %19 : vector<8x256xf32>
    %21 = vector.extract_strided_slice %9 {offsets = [0, 112], sizes = [8, 256], strides = [1, 1]} : vector<8x512xf32> to vector<8x256xf32>
    %22 = vector.extract_strided_slice %11 {offsets = [1, 0], sizes = [1, 256], strides = [1, 1]} : vector<9x256xf32> to vector<1x256xf32>
    %23 = vector.broadcast %22 : vector<1x256xf32> to vector<8x256xf32>
    %24 = arith.mulf %21, %23 : vector<8x256xf32>
    %25 = vector.extract_strided_slice %10 {offsets = [1, 0, 0], sizes = [1, 8, 8], strides = [1, 1, 1]} : vector<9x8x8xf32> to vector<1x8x8xf32>
    %26 = vector.shape_cast %25 : vector<1x8x8xf32> to vector<8x8xf32>
    %cst_13 = arith.constant dense<0.000000e+00> : vector<8x256xf32>
    %27 = tpu.matmul %26, %24, %cst_13 {dimension_numbers = #tpu.dot_dimension_numbers<[1], [0], [0], [1], [0, 0, 1, 1], [], []>} : vector<8x8xf32>, vector<8x256xf32>, vector<8x256xf32> -> vector<8x256xf32>
    %28 = arith.addf %20, %27 : vector<8x256xf32>
    %29 = vector.extract_strided_slice %9 {offsets = [0, 113], sizes = [8, 256], strides = [1, 1]} : vector<8x512xf32> to vector<8x256xf32>
    %30 = vector.extract_strided_slice %11 {offsets = [2, 0], sizes = [1, 256], strides = [1, 1]} : vector<9x256xf32> to vector<1x256xf32>
    %31 = vector.broadcast %30 : vector<1x256xf32> to vector<8x256xf32>
    %32 = arith.mulf %29, %31 : vector<8x256xf32>
    %33 = vector.extract_strided_slice %10 {offsets = [2, 0, 0], sizes = [1, 8, 8], strides = [1, 1, 1]} : vector<9x8x8xf32> to vector<1x8x8xf32>
    %34 = vector.shape_cast %33 : vector<1x8x8xf32> to vector<8x8xf32>
    %cst_14 = arith.constant dense<0.000000e+00> : vector<8x256xf32>
    %35 = tpu.matmul %34, %32, %cst_14 {dimension_numbers = #tpu.dot_dimension_numbers<[1], [0], [0], [1], [0, 0, 1, 1], [], []>} : vector<8x8xf32>, vector<8x256xf32>, vector<8x256xf32> -> vector<8x256xf32>
    %36 = arith.addf %28, %35 : vector<8x256xf32>
    %37 = vector.extract_strided_slice %9 {offsets = [0, 127], sizes = [8, 256], strides = [1, 1]} : vector<8x512xf32> to vector<8x256xf32>
    %38 = vector.extract_strided_slice %11 {offsets = [3, 0], sizes = [1, 256], strides = [1, 1]} : vector<9x256xf32> to vector<1x256xf32>
    %39 = vector.broadcast %38 : vector<1x256xf32> to vector<8x256xf32>
    %40 = arith.mulf %37, %39 : vector<8x256xf32>
    %41 = vector.extract_strided_slice %10 {offsets = [3, 0, 0], sizes = [1, 8, 8], strides = [1, 1, 1]} : vector<9x8x8xf32> to vector<1x8x8xf32>
    %42 = vector.shape_cast %41 : vector<1x8x8xf32> to vector<8x8xf32>
    %cst_15 = arith.constant dense<0.000000e+00> : vector<8x256xf32>
    %43 = tpu.matmul %42, %40, %cst_15 {dimension_numbers = #tpu.dot_dimension_numbers<[1], [0], [0], [1], [0, 0, 1, 1], [], []>} : vector<8x8xf32>, vector<8x256xf32>, vector<8x256xf32> -> vector<8x256xf32>
    %44 = arith.addf %36, %43 : vector<8x256xf32>
    %45 = vector.extract_strided_slice %9 {offsets = [0, 128], sizes = [8, 256], strides = [1, 1]} : vector<8x512xf32> to vector<8x256xf32>
    %46 = vector.extract_strided_slice %11 {offsets = [4, 0], sizes = [1, 256], strides = [1, 1]} : vector<9x256xf32> to vector<1x256xf32>
    %47 = vector.broadcast %46 : vector<1x256xf32> to vector<8x256xf32>
    %48 = arith.mulf %45, %47 : vector<8x256xf32>
    %49 = vector.extract_strided_slice %10 {offsets = [4, 0, 0], sizes = [1, 8, 8], strides = [1, 1, 1]} : vector<9x8x8xf32> to vector<1x8x8xf32>
    %50 = vector.shape_cast %49 : vector<1x8x8xf32> to vector<8x8xf32>
    %cst_16 = arith.constant dense<0.000000e+00> : vector<8x256xf32>
    %51 = tpu.matmul %50, %48, %cst_16 {dimension_numbers = #tpu.dot_dimension_numbers<[1], [0], [0], [1], [0, 0, 1, 1], [], []>} : vector<8x8xf32>, vector<8x256xf32>, vector<8x256xf32> -> vector<8x256xf32>
    %52 = arith.addf %44, %51 : vector<8x256xf32>
    %53 = vector.extract_strided_slice %9 {offsets = [0, 129], sizes = [8, 256], strides = [1, 1]} : vector<8x512xf32> to vector<8x256xf32>
    %54 = vector.extract_strided_slice %11 {offsets = [5, 0], sizes = [1, 256], strides = [1, 1]} : vector<9x256xf32> to vector<1x256xf32>
    %55 = vector.broadcast %54 : vector<1x256xf32> to vector<8x256xf32>
    %56 = arith.mulf %53, %55 : vector<8x256xf32>
    %57 = vector.extract_strided_slice %10 {offsets = [5, 0, 0], sizes = [1, 8, 8], strides = [1, 1, 1]} : vector<9x8x8xf32> to vector<1x8x8xf32>
    %58 = vector.shape_cast %57 : vector<1x8x8xf32> to vector<8x8xf32>
    %cst_17 = arith.constant dense<0.000000e+00> : vector<8x256xf32>
    %59 = tpu.matmul %58, %56, %cst_17 {dimension_numbers = #tpu.dot_dimension_numbers<[1], [0], [0], [1], [0, 0, 1, 1], [], []>} : vector<8x8xf32>, vector<8x256xf32>, vector<8x256xf32> -> vector<8x256xf32>
    %60 = arith.addf %52, %59 : vector<8x256xf32>
    %61 = vector.extract_strided_slice %9 {offsets = [0, 143], sizes = [8, 256], strides = [1, 1]} : vector<8x512xf32> to vector<8x256xf32>
    %62 = vector.extract_strided_slice %11 {offsets = [6, 0], sizes = [1, 256], strides = [1, 1]} : vector<9x256xf32> to vector<1x256xf32>
    %63 = vector.broadcast %62 : vector<1x256xf32> to vector<8x256xf32>
    %64 = arith.mulf %61, %63 : vector<8x256xf32>
    %65 = vector.extract_strided_slice %10 {offsets = [6, 0, 0], sizes = [1, 8, 8], strides = [1, 1, 1]} : vector<9x8x8xf32> to vector<1x8x8xf32>
    %66 = vector.shape_cast %65 : vector<1x8x8xf32> to vector<8x8xf32>
    %cst_18 = arith.constant dense<0.000000e+00> : vector<8x256xf32>
    %67 = tpu.matmul %66, %64, %cst_18 {dimension_numbers = #tpu.dot_dimension_numbers<[1], [0], [0], [1], [0, 0, 1, 1], [], []>} : vector<8x8xf32>, vector<8x256xf32>, vector<8x256xf32> -> vector<8x256xf32>
    %68 = arith.addf %60, %67 : vector<8x256xf32>
    %69 = vector.extract_strided_slice %9 {offsets = [0, 144], sizes = [8, 256], strides = [1, 1]} : vector<8x512xf32> to vector<8x256xf32>
    %70 = vector.extract_strided_slice %11 {offsets = [7, 0], sizes = [1, 256], strides = [1, 1]} : vector<9x256xf32> to vector<1x256xf32>
    %71 = vector.broadcast %70 : vector<1x256xf32> to vector<8x256xf32>
    %72 = arith.mulf %69, %71 : vector<8x256xf32>
    %73 = vector.extract_strided_slice %10 {offsets = [7, 0, 0], sizes = [1, 8, 8], strides = [1, 1, 1]} : vector<9x8x8xf32> to vector<1x8x8xf32>
    %74 = vector.shape_cast %73 : vector<1x8x8xf32> to vector<8x8xf32>
    %cst_19 = arith.constant dense<0.000000e+00> : vector<8x256xf32>
    %75 = tpu.matmul %74, %72, %cst_19 {dimension_numbers = #tpu.dot_dimension_numbers<[1], [0], [0], [1], [0, 0, 1, 1], [], []>} : vector<8x8xf32>, vector<8x256xf32>, vector<8x256xf32> -> vector<8x256xf32>
    %76 = arith.addf %68, %75 : vector<8x256xf32>
    %77 = vector.extract_strided_slice %9 {offsets = [0, 145], sizes = [8, 256], strides = [1, 1]} : vector<8x512xf32> to vector<8x256xf32>
    %78 = vector.extract_strided_slice %11 {offsets = [8, 0], sizes = [1, 256], strides = [1, 1]} : vector<9x256xf32> to vector<1x256xf32>
    %79 = vector.broadcast %78 : vector<1x256xf32> to vector<8x256xf32>
    %80 = arith.mulf %77, %79 : vector<8x256xf32>
    %81 = vector.extract_strided_slice %10 {offsets = [8, 0, 0], sizes = [1, 8, 8], strides = [1, 1, 1]} : vector<9x8x8xf32> to vector<1x8x8xf32>
    %82 = vector.shape_cast %81 : vector<1x8x8xf32> to vector<8x8xf32>
    %cst_20 = arith.constant dense<0.000000e+00> : vector<8x256xf32>
    %83 = tpu.matmul %82, %80, %cst_20 {dimension_numbers = #tpu.dot_dimension_numbers<[1], [0], [0], [1], [0, 0, 1, 1], [], []>} : vector<8x8xf32>, vector<8x256xf32>, vector<8x256xf32> -> vector<8x256xf32>
    %84 = arith.addf %76, %83 : vector<8x256xf32>
    %c0_21 = arith.constant 0 : index
    %c0_22 = arith.constant 0 : index
    %85 = vector.load %arg3[%c0_21, %c0_22] : memref<8x1xf32, #tpu.memory_space<vmem>>, vector<8x1xf32>
    %86 = vector.broadcast %85 : vector<8x1xf32> to vector<8x256xf32>
    %87 = arith.addf %84, %86 : vector<8x256xf32>
    %cst_23 = arith.constant 0.000000e+00 : f32
    %88 = vector.broadcast %cst_23 : f32 to vector<8x256xf32>
    %89 = arith.maximumf %87, %88 : vector<8x256xf32>
    %c0_24 = arith.constant 0 : index
    %c0_25 = arith.constant 0 : index
    %c0_26 = arith.constant 0 : index
    %90 = vector.load %arg7[%c0_24, %c0_25, %c0_26] : memref<1x8x256xf32, #tpu.memory_space<vmem>>, vector<1x8x256xf32>
    %91 = vector.shape_cast %90 : vector<1x8x256xf32> to vector<8x256xf32>
    %92 = vector.shape_cast %89 : vector<8x256xf32> to vector<1x8x256xf32>
    tpu.vector_store %arg7[%c0_24, %c0_25, %c0_26], %92 {strides = array<i32>} : memref<1x8x256xf32, #tpu.memory_space<vmem>>, vector<1x8x256xf32>,
    %cst_27 = arith.constant dense<0.000000e+00> : vector<8xf32>
    %93 = vector.multi_reduction <add>, %89, %cst_27 [1] : vector<8x256xf32> to vector<8xf32>
    %94 = vector.shape_cast %93 : vector<8xf32> to vector<8x1xf32>
    %c0_28 = arith.constant 0 : index
    %c0_29 = arith.constant 0 : index
    %c0_30 = arith.constant 0 : index
    %95 = vector.load %arg8[%c0_28, %c0_29, %c0_30] : memref<1x8x1xf32, #tpu.memory_space<vmem>>, vector<1x8x1xf32>
    %96 = vector.shape_cast %95 : vector<1x8x1xf32> to vector<8x1xf32>
    %97 = vector.shape_cast %94 : vector<8x1xf32> to vector<1x8x1xf32>
    tpu.vector_store %arg8[%c0_28, %c0_29, %c0_30], %97 {strides = array<i32>} : memref<1x8x1xf32, #tpu.memory_space<vmem>>, vector<1x8x1xf32>,
    %98 = arith.mulf %89, %89 : vector<8x256xf32>
    %cst_31 = arith.constant dense<0.000000e+00> : vector<8xf32>
    %99 = vector.multi_reduction <add>, %98, %cst_31 [1] : vector<8x256xf32> to vector<8xf32>
    %100 = vector.shape_cast %99 : vector<8xf32> to vector<8x1xf32>
    %c0_32 = arith.constant 0 : index
    %c0_33 = arith.constant 0 : index
    %c0_34 = arith.constant 0 : index
    %101 = vector.load %arg9[%c0_32, %c0_33, %c0_34] : memref<1x8x1xf32, #tpu.memory_space<vmem>>, vector<1x8x1xf32>
    %102 = vector.shape_cast %101 : vector<1x8x1xf32> to vector<8x1xf32>
    %103 = vector.shape_cast %100 : vector<8x1xf32> to vector<1x8x1xf32>
    tpu.vector_store %arg9[%c0_32, %c0_33, %c0_34], %103 {strides = array<i32>} : memref<1x8x1xf32, #tpu.memory_space<vmem>>, vector<1x8x1xf32>,
    return
  }
  func.func @transform_0(%arg0: i32) -> (i32, i32, i32) {
    %c0_i32 = arith.constant 0 : i32
    %c0_i32_0 = arith.constant 0 : i32
    %c0_i32_1 = arith.constant 0 : i32
    return %arg0, %c0_i32, %c0_i32_0 : i32, i32, i32
  }
  func.func @transform_1(%arg0: i32) -> (i32, i32, i32) {
    %c0_i32 = arith.constant 0 : i32
    %c0_i32_0 = arith.constant 0 : i32
    %c0_i32_1 = arith.constant 0 : i32
    %c0_i32_2 = arith.constant 0 : i32
    return %c0_i32, %c0_i32_0, %c0_i32_1 : i32, i32, i32
  }
  func.func @transform_2(%arg0: i32) -> (i32, i32) {
    %c0_i32 = arith.constant 0 : i32
    %c0_i32_0 = arith.constant 0 : i32
    %c0_i32_1 = arith.constant 0 : i32
    return %c0_i32, %c0_i32_0 : i32, i32
  }
  func.func @transform_3(%arg0: i32) -> (i32, i32) {
    %c0_i32 = arith.constant 0 : i32
    %c0_i32_0 = arith.constant 0 : i32
    %c0_i32_1 = arith.constant 0 : i32
    return %c0_i32, %c0_i32_0 : i32, i32
  }
  func.func @transform_4(%arg0: i32) -> (i32, i32) {
    %c0_i32 = arith.constant 0 : i32
    %c0_i32_0 = arith.constant 0 : i32
    %c0_i32_1 = arith.constant 0 : i32
    return %c0_i32, %c0_i32_0 : i32, i32
  }
  func.func @transform_5(%arg0: i32) -> (i32, i32) {
    %c0_i32 = arith.constant 0 : i32
    %c0_i32_0 = arith.constant 0 : i32
    %c0_i32_1 = arith.constant 0 : i32
    return %c0_i32, %c0_i32_0 : i32, i32
  }
  func.func @transform_6(%arg0: i32) -> (i32, i32, i32) {
    %c0_i32 = arith.constant 0 : i32
    %c0_i32_0 = arith.constant 0 : i32
    %c0_i32_1 = arith.constant 0 : i32
    return %arg0, %c0_i32, %c0_i32_0 : i32, i32, i32
  }
  func.func @transform_7(%arg0: i32) -> (i32, i32, i32) {
    %c0_i32 = arith.constant 0 : i32
    %c0_i32_0 = arith.constant 0 : i32
    %c0_i32_1 = arith.constant 0 : i32
    return %arg0, %c0_i32, %c0_i32_0 : i32, i32, i32
  }
  func.func @transform_8(%arg0: i32) -> (i32, i32, i32) {
    %c0_i32 = arith.constant 0 : i32
    %c0_i32_0 = arith.constant 0 : i32
    %c0_i32_1 = arith.constant 0 : i32
    return %arg0, %c0_i32, %c0_i32_0 : i32, i32, i32
  }
}

</mosaic_0001>

<llo_original>
// kernel: conv_block_forward.5
$region0: #{conv_block_forward.5}
  #allocation0 [shape = 'u32[]', space=smem, size = 0x4, offset = 0x4, fixed_abs, tag = 'smem constant byte address 0x4 - core index']
  #allocation1 [shape = 'u32[144,128]{1,0:T(1,128)}', space=vmem, size = 0x12000, scoped, tag = 'internal scratch']
  %s0 = inlined_call_operand.vmem [shape: f32[2,8,256], index: 0, kind: input, shape index: {}]
  %s1 = inlined_call_operand.vmem [shape: f32[8,1], index: 1, kind: input, shape index: {}]
  %s2 = inlined_call_operand.vmem [shape: f32[8,1], index: 2, kind: input, shape index: {}]
  %s3 = inlined_call_operand.vmem [shape: f32[2,8,256], index: 3, kind: output, shape index: {}]
  %s4 = sld [smem:[#allocation0]]
  $region45: #{conv_block_forward.5} parent=0
    _
  %s6 = ssub.s32 1, %s4
  %s7 = scalar_select 0, %s6, %s4
  loop: start=0, step=1, limit=4
  $region2: #{conv_block_forward.5} parent=0 // loop_pre_header
    _
  $region3: #{conv_block_forward.5} parent=0 // loop_header
    %s9 = sphi 0, %s13
    %p10 = scmp.ge.s32.totalorder %s9, 4
    %s19 = sphi 0, %s21
    %s22 = sphi 0, %s19
    %s23 = sphi 0, %s22
    %s39 = sphi 0, %s23
    %s43 = sphi 0, %s43
    %s45 = sphi 0, %s43
    %s46 = sphi 0, %s45
    %s60 = sphi 0, %s46
    %s64 = sphi 0, %s64
    %s66 = sphi 0, %s64
    %s67 = sphi 0, %s66
    %s81 = sphi 0, %s67
    %s87 = sphi 0, %s89
    %s90 = sphi 0, %s87
    %s91 = sphi 0, %s90
    %s107 = sphi 0, %s91
  $region4: #{conv_block_forward.5} parent=0 // loop_header_branch
    %12 = sbr.rel (%p10) target = $region8
  $region5: #{conv_block_forward.5} parent=0 // loop_body
    %s14 = ssub.s32 %s9, 1
    %s15 = ssub.s32 %s9, 2
    %s16 = sadd.s32 %s9, 1
    %s17 = ssub.s32 %s9, %s16
    %p18 = scmp.eq.s32.totalorder %s17, 0
    %s20 = sadd.s32 %s19, 1
    %s21 = scalar_select %p18, %s19, %s20
    %p24 = pneg %p18
    %p25 = scmp.eq.s32.totalorder %s9, 1
    %p26 = por %p24, %p25
    %p27 = scmp.ne.s32.totalorder %s19, %s22
    %p28 = scmp.eq.s32.totalorder %s9, 0
    %p29 = por %p27, %p28
    %p30 = scmp.ne.s32.totalorder %s19, %s22
    %p31 = scmp.eq.s32.totalorder %s14, 1
    %p32 = por %p30, %p31
    %p33 = scmp.ne.s32.totalorder %s22, %s23
    %p34 = scmp.eq.s32.totalorder %s14, 0
    %p35 = por %p33, %p34
    %p36 = scmp.ne.s32.totalorder %s22, %s23
    %p37 = scmp.eq.s32.totalorder %s15, 1
    %p38 = por %p36, %p37
    %p40 = scmp.ne.s32.totalorder %s23, %s39
    %p41 = scmp.eq.s32.totalorder %s15, 0
    %p42 = por %p40, %p41
    %s44 = sadd.s32 %s43, 1
    %p47 = scmp.eq.s32.totalorder %s9, 1
    %p48 = scmp.ne.s32.totalorder %s43, %s45
    %p49 = scmp.eq.s32.totalorder %s9, 0
    %p50 = por %p48, %p49
    %p51 = scmp.ne.s32.totalorder %s43, %s45
    %p52 = scmp.eq.s32.totalorder %s14, 1
    %p53 = por %p51, %p52
    %p54 = scmp.ne.s32.totalorder %s45, %s46
    %p55 = scmp.eq.s32.totalorder %s14, 0
    %p56 = por %p54, %p55
    %p57 = scmp.ne.s32.totalorder %s45, %s46
    %p58 = scmp.eq.s32.totalorder %s15, 1
    %p59 = por %p57, %p58
    %p61 = scmp.ne.s32.totalorder %s46, %s60
    %p62 = scmp.eq.s32.totalorder %s15, 0
    %p63 = por %p61, %p62
    %s65 = sadd.s32 %s64, 1
    %p68 = scmp.eq.s32.totalorder %s9, 1
    %p69 = scmp.ne.s32.totalorder %s64, %s66
    %p70 = scmp.eq.s32.totalorder %s9, 0
    %p71 = por %p69, %p70
    %p72 = scmp.ne.s32.totalorder %s64, %s66
    %p73 = scmp.eq.s32.totalorder %s14, 1
    %p74 = por %p72, %p73
    %p75 = scmp.ne.s32.totalorder %s66, %s67
    %p76 = scmp.eq.s32.totalorder %s14, 0
    %p77 = por %p75, %p76
    %p78 = scmp.ne.s32.totalorder %s66, %s67
    %p79 = scmp.eq.s32.totalorder %s15, 1
    %p80 = por %p78, %p79
    %p82 = scmp.ne.s32.totalorder %s67, %s81
    %p83 = scmp.eq.s32.totalorder %s15, 0
    %p84 = por %p82, %p83
    %s85 = ssub.s32 %s9, %s16
    %p86 = scmp.eq.s32.totalorder %s85, 0
    %s88 = sadd.s32 %s87, 1
    %s89 = scalar_select %p86, %s87, %s88
    %p92 = pneg %p86
    %p93 = scmp.eq.s32.totalorder %s9, 1
    %p94 = por %p92, %p93
    %p95 = scmp.ne.s32.totalorder %s87, %s90
    %p96 = scmp.eq.s32.totalorder %s9, 0
    %p97 = por %p95, %p96
    %p98 = scmp.ne.s32.totalorder %s87, %s90
    %p99 = scmp.eq.s32.totalorder %s14, 1
    %p100 = por %p98, %p99
    %p101 = scmp.ne.s32.totalorder %s90, %s91
    %p102 = scmp.eq.s32.totalorder %s14, 0
    %p103 = por %p101, %p102
    %p104 = scmp.ne.s32.totalorder %s90, %s91
    %p105 = scmp.eq.s32.totalorder %s15, 1
    %p106 = por %p104, %p105
    %p108 = scmp.ne.s32.totalorder %s91, %s107
    %p109 = scmp.eq.s32.totalorder %s15, 0
    %p110 = por %p108, %p109
    %p111 = scmp.le.s32.totalorder 1, %s9
    %p112 = scmp.lt.s32.totalorder %s9, 3
    %p113 = pnand %p111, %p112
    %p114 = pneg %p113
    // Predicated region
    $region9: #{conv_block_forward.5} parent=5 // pred_check
      _
    $region10: #{conv_block_forward.5} parent=5 // pred_check_branch
      %116 = sbr.rel (%p113) target = $region12
    $region11: #{conv_block_forward.5} parent=5 // pred_region
      %s117 = ssub.s32 %s9, 1
      // Predicated region
      $region13: #{conv_block_forward.5} parent=11 // pred_check
        %p118 = pneg %p56
      $region14: #{conv_block_forward.5} parent=11 // pred_check_branch
        %120 = sbr.rel (%p118) target = $region16
      $region15: #{conv_block_forward.5} parent=11 // pred_region
        _
      $region16: #{conv_block_forward.5} parent=11 // pred_fallthru
        _
      // Predicated region
      $region17: #{conv_block_forward.5} parent=11 // pred_check
        %p121 = pneg %p77
      $region18: #{conv_block_forward.5} parent=11 // pred_check_branch
        %123 = sbr.rel (%p121) target = $region20
      $region19: #{conv_block_forward.5} parent=11 // pred_region
        _
      $region20: #{conv_block_forward.5} parent=11 // pred_fallthru
        _
    $region12: #{conv_block_forward.5} parent=5 // pred_fallthru
      _
    %p124 = scmp.lt.s32.totalorder %s9, 2
    // Predicated region
    $region21: #{conv_block_forward.5} parent=5 // pred_check
      %p125 = pneg %p124
    $region22: #{conv_block_forward.5} parent=5 // pred_check_branch
      %127 = sbr.rel (%p125) target = $region24
    $region23: #{conv_block_forward.5} parent=5 // pred_region
      // Predicated region
      $region25: #{conv_block_forward.5} parent=23 // pred_check
        %p128 = pneg %p29
      $region26: #{conv_block_forward.5} parent=23 // pred_check_branch
        %130 = sbr.rel (%p128) target = $region28
      $region27: #{conv_block_forward.5} parent=23 // pred_region
        %p131 = scmp.lt.s32.totalorder %s9, 1
        %s132 = scalar_select %p131, %s9, 1
        %s133 = smul.addr %s132, 2
        %s134 = smul.addr %s133, 8
        %s135 = scalar_lea.vmem %s0, %s134
      $region28: #{conv_block_forward.5} parent=23 // pred_fallthru
        _
    $region24: #{conv_block_forward.5} parent=5 // pred_fallthru
      _
    %p136 = scmp.le.s32.totalorder 1, %s9
    %p137 = scmp.lt.s32.totalorder %s9, 3
    %p138 = pnand %p136, %p137
    %p139 = pneg %p138
    // Predicated region
    $region29: #{conv_block_forward.5} parent=5 // pred_check
      _
    $region30: #{conv_block_forward.5} parent=5 // pred_check_branch
      %141 = sbr.rel (%p138) target = $region32
    $region31: #{conv_block_forward.5} parent=5 // pred_region
      %s142 = ssub.s32 %s9, 1
      %p143 = scmp.lt.s32.totalorder %s14, 1
      %s144 = scalar_select %p143, %s14, 1
      %s145 = smul.addr %s144, 2
      %s146 = smul.addr %s145, 8
      %s147 = scalar_lea.vmem %s0, %s146
      %p148 = pneg %p35
      %p149 = pneg %p32
      %p150 = pneg %p56
      %p151 = pneg %p53
      %p152 = pneg %p77
      %p153 = pneg %p74
      %p154 = pneg %p103
      %p155 = pneg %p100
      %p156 = scmp.lt.s32.totalorder %s14, 1
      %s157 = scalar_select %p156, %s14, 1
      %s158 = smul.addr %s157, 2
      %s159 = smul.addr %s158, 8
      %s160 = scalar_lea.vmem %s3, %s159
      %p161 = scmp.lt.s32.totalorder %s14, 1
      %s162 = scalar_select %p161, %s14, 1
      %s163 = smul.addr %s162, 2
      %s164 = smul.addr %s163, 8
      %s165 = scalar_lea.vmem %s0, %s164
      %p166 = scmp.lt.s32.totalorder %s14, 1
      %s167 = scalar_select %p166, %s14, 1
      %s168 = smul.addr %s167, 2
      %s169 = smul.addr %s168, 8
      %s170 = scalar_lea.vmem %s3, %s169
      %v171 = vld [vmem:[%s165] sm:$0xff]
      %v172 = vld [vmem:[%s165 + $0x8] sm:$0xff]
      %v173 = vld [vmem:[%s1] sm:$0xff]
      %175 = vset.pattern.permute.xlu0 0
      %176 = vperm.xlu0 %175, %v173
      %v177 = vpop.permute.xlu0 %176
      %v179 = vmul.f32 %v171, %v177
      %v180 = vmul.f32 %v172, %v177
      %v181 = vld [vmem:[%s2] sm:$0xff]
      %183 = vset.pattern.permute.xlu0 0
      %184 = vperm.xlu0 %183, %v181
      %v185 = vpop.permute.xlu0 %184
      %v187 = vadd.f32 %v179, %v185
      %v188 = vadd.f32 %v180, %v185
      %189 = vst [vmem:[%s170] sm:$0xff] %v187
      %190 = vst [vmem:[%s170 + $0x8] sm:$0xff] %v188
      %p191 = scmp.lt.s32.totalorder %s14, 1
      %s192 = scalar_select %p191, %s14, 1
      %s193 = smul.addr %s192, 2
      %s194 = smul.addr %s193, 8
      %s195 = scalar_lea.vmem %s3, %s194
      // Predicated region
      $region33: #{conv_block_forward.5} parent=31 // pred_check
        %p196 = pneg %p100
      $region34: #{conv_block_forward.5} parent=31 // pred_check_branch
        %198 = sbr.rel (%p196) target = $region36
      $region35: #{conv_block_forward.5} parent=31 // pred_region
        _
      $region36: #{conv_block_forward.5} parent=31 // pred_fallthru
        _
    $region32: #{conv_block_forward.5} parent=5 // pred_fallthru
      _
    %p199 = scmp.le.s32.totalorder 2, %s9
    // Predicated region
    $region37: #{conv_block_forward.5} parent=5 // pred_check
      %p200 = pneg %p199
    $region38: #{conv_block_forward.5} parent=5 // pred_check_branch
      %202 = sbr.rel (%p200) target = $region40
    $region39: #{conv_block_forward.5} parent=5 // pred_region
      %s203 = ssub.s32 %s9, 2
      // Predicated region
      $region41: #{conv_block_forward.5} parent=39 // pred_check
        %p204 = pneg %p106
      $region42: #{conv_block_forward.5} parent=39 // pred_check_branch
        %206 = sbr.rel (%p204) target = $region44
      $region43: #{conv_block_forward.5} parent=39 // pred_region
        %p207 = scmp.lt.s32.totalorder %s15, 1
        %s208 = scalar_select %p207, %s15, 1
        %s209 = smul.addr %s208, 2
        %s210 = smul.addr %s209, 8
        %s211 = scalar_lea.vmem %s3, %s210
      $region44: #{conv_block_forward.5} parent=39 // pred_fallthru
        _
    $region40: #{conv_block_forward.5} parent=5 // pred_fallthru
      _
  $region6: #{conv_block_forward.5} parent=0 // loop_footer
    %s13 = sadd.s32 1, %s9
  $region7: #{conv_block_forward.5} parent=0 // loop_footer_branch
    %8 = sbr.rel target = $region3
  $region8: #{conv_block_forward.5} parent=0 // loop_exit
    _

// kernel: conv_block_forward.4
$region0: #{conv_block_forward.4}
  #allocation0 [shape = 'u32[]', space=smem, size = 0x4, offset = 0x4, fixed_abs, tag = 'smem constant byte address 0x4 - core index']
  #allocation1 [shape = 'u32[144,128]{1,0:T(1,128)}', space=vmem, size = 0x12000, scoped, tag = 'internal scratch']
  %s0 = inlined_call_operand.vmem [shape: f32[2,8,256], index: 0, kind: input, shape index: {}]
  %s1 = inlined_call_operand.vmem [shape: f32[9,8,8], index: 1, kind: input, shape index: {}]
  %s2 = inlined_call_operand.vmem [shape: f32[8,1], index: 2, kind: input, shape index: {}]
  %s3 = inlined_call_operand.vmem [shape: f32[8,1], index: 3, kind: input, shape index: {}]
  %s4 = inlined_call_operand.vmem [shape: f32[8,1], index: 4, kind: input, shape index: {}]
  %s5 = inlined_call_operand.vmem [shape: f32[9,256], index: 5, kind: input, shape index: {}]
  %s6 = inlined_call_operand.vmem [shape: f32[2,8,256], index: 6, kind: output, shape index: {0}]
  %s7 = inlined_call_operand.vmem [shape: f32[2,8,1], index: 7, kind: output, shape index: {1}]
  %s8 = inlined_call_operand.vmem [shape: f32[2,8,1], index: 8, kind: output, shape index: {2}]
  %9 = xla_tuple %s6, %s7, %s8
  %s10 = sld [smem:[#allocation0]]
  $region73: #{conv_block_forward.4} parent=0
    _
  %s12 = ssub.s32 1, %s10
  %s13 = scalar_select 0, %s12, %s10
  loop: start=0, step=1, limit=4
  $region2: #{conv_block_forward.4} parent=0 // loop_pre_header
    _
  $region3: #{conv_block_forward.4} parent=0 // loop_header
    %s15 = sphi 0, %s19
    %p16 = scmp.ge.s32.totalorder %s15, 4
    %s25 = sphi 0, %s27
    %s28 = sphi 0, %s25
    %s29 = sphi 0, %s28
    %s45 = sphi 0, %s29
    %s49 = sphi 0, %s49
    %s51 = sphi 0, %s49
    %s52 = sphi 0, %s51
    %s66 = sphi 0, %s52
    %s70 = sphi 0, %s70
    %s72 = sphi 0, %s70
    %s73 = sphi 0, %s72
    %s87 = sphi 0, %s73
    %s91 = sphi 0, %s91
    %s93 = sphi 0, %s91
    %s94 = sphi 0, %s93
    %s108 = sphi 0, %s94
    %s112 = sphi 0, %s112
    %s114 = sphi 0, %s112
    %s115 = sphi 0, %s114
    %s129 = sphi 0, %s115
    %s133 = sphi 0, %s133
    %s135 = sphi 0, %s133
    %s136 = sphi 0, %s135
    %s150 = sphi 0, %s136
    %s156 = sphi 0, %s158
    %s159 = sphi 0, %s156
    %s160 = sphi 0, %s159
    %s176 = sphi 0, %s160
    %s182 = sphi 0, %s184
    %s185 = sphi 0, %s182
    %s186 = sphi 0, %s185
    %s202 = sphi 0, %s186
    %s208 = sphi 0, %s210
    %s211 = sphi 0, %s208
    %s212 = sphi 0, %s211
    %s228 = sphi 0, %s212
  $region4: #{conv_block_forward.4} parent=0 // loop_header_branch
    %18 = sbr.rel (%p16) target = $region8
  $region5: #{conv_block_forward.4} parent=0 // loop_body
    %s20 = ssub.s32 %s15, 1
    %s21 = ssub.s32 %s15, 2
    %s22 = sadd.s32 %s15, 1
    %s23 = ssub.s32 %s15, %s22
    %p24 = scmp.eq.s32.totalorder %s23, 0
    %s26 = sadd.s32 %s25, 1
    %s27 = scalar_select %p24, %s25, %s26
    %p30 = pneg %p24
    %p31 = scmp.eq.s32.totalorder %s15, 1
    %p32 = por %p30, %p31
    %p33 = scmp.ne.s32.totalorder %s25, %s28
    %p34 = scmp.eq.s32.totalorder %s15, 0
    %p35 = por %p33, %p34
    %p36 = scmp.ne.s32.totalorder %s25, %s28
    %p37 = scmp.eq.s32.totalorder %s20, 1
    %p38 = por %p36, %p37
    %p39 = scmp.ne.s32.totalorder %s28, %s29
    %p40 = scmp.eq.s32.totalorder %s20, 0
    %p41 = por %p39, %p40
    %p42 = scmp.ne.s32.totalorder %s28, %s29
    %p43 = scmp.eq.s32.totalorder %s21, 1
    %p44 = por %p42, %p43
    %p46 = scmp.ne.s32.totalorder %s29, %s45
    %p47 = scmp.eq.s32.totalorder %s21, 0
    %p48 = por %p46, %p47
    %s50 = sadd.s32 %s49, 1
    %p53 = scmp.eq.s32.totalorder %s15, 1
    %p54 = scmp.ne.s32.totalorder %s49, %s51
    %p55 = scmp.eq.s32.totalorder %s15, 0
    %p56 = por %p54, %p55
    %p57 = scmp.ne.s32.totalorder %s49, %s51
    %p58 = scmp.eq.s32.totalorder %s20, 1
    %p59 = por %p57, %p58
    %p60 = scmp.ne.s32.totalorder %s51, %s52
    %p61 = scmp.eq.s32.totalorder %s20, 0
    %p62 = por %p60, %p61
    %p63 = scmp.ne.s32.totalorder %s51, %s52
    %p64 = scmp.eq.s32.totalorder %s21, 1
    %p65 = por %p63, %p64
    %p67 = scmp.ne.s32.totalorder %s52, %s66
    %p68 = scmp.eq.s32.totalorder %s21, 0
    %p69 = por %p67, %p68
    %s71 = sadd.s32 %s70, 1
    %p74 = scmp.eq.s32.totalorder %s15, 1
    %p75 = scmp.ne.s32.totalorder %s70, %s72
    %p76 = scmp.eq.s32.totalorder %s15, 0
    %p77 = por %p75, %p76
    %p78 = scmp.ne.s32.totalorder %s70, %s72
    %p79 = scmp.eq.s32.totalorder %s20, 1
    %p80 = por %p78, %p79
    %p81 = scmp.ne.s32.totalorder %s72, %s73
    %p82 = scmp.eq.s32.totalorder %s20, 0
    %p83 = por %p81, %p82
    %p84 = scmp.ne.s32.totalorder %s72, %s73
    %p85 = scmp.eq.s32.totalorder %s21, 1
    %p86 = por %p84, %p85
    %p88 = scmp.ne.s32.totalorder %s73, %s87
    %p89 = scmp.eq.s32.totalorder %s21, 0
    %p90 = por %p88, %p89
    %s92 = sadd.s32 %s91, 1
    %p95 = scmp.eq.s32.totalorder %s15, 1
    %p96 = scmp.ne.s32.totalorder %s91, %s93
    %p97 = scmp.eq.s32.totalorder %s15, 0
    %p98 = por %p96, %p97
    %p99 = scmp.ne.s32.totalorder %s91, %s93
    %p100 = scmp.eq.s32.totalorder %s20, 1
    %p101 = por %p99, %p100
    %p102 = scmp.ne.s32.totalorder %s93, %s94
    %p103 = scmp.eq.s32.totalorder %s20, 0
    %p104 = por %p102, %p103
    %p105 = scmp.ne.s32.totalorder %s93, %s94
    %p106 = scmp.eq.s32.totalorder %s21, 1
    %p107 = por %p105, %p106
    %p109 = scmp.ne.s32.totalorder %s94, %s108
    %p110 = scmp.eq.s32.totalorder %s21, 0
    %p111 = por %p109, %p110
    %s113 = sadd.s32 %s112, 1
    %p116 = scmp.eq.s32.totalorder %s15, 1
    %p117 = scmp.ne.s32.totalorder %s112, %s114
    %p118 = scmp.eq.s32.totalorder %s15, 0
    %p119 = por %p117, %p118
    %p120 = scmp.ne.s32.totalorder %s112, %s114
    %p121 = scmp.eq.s32.totalorder %s20, 1
    %p122 = por %p120, %p121
    %p123 = scmp.ne.s32.totalorder %s114, %s115
    %p124 = scmp.eq.s32.totalorder %s20, 0
    %p125 = por %p123, %p124
    %p126 = scmp.ne.s32.totalorder %s114, %s115
    %p127 = scmp.eq.s32.totalorder %s21, 1
    %p128 = por %p126, %p127
    %p130 = scmp.ne.s32.totalorder %s115, %s129
    %p131 = scmp.eq.s32.totalorder %s21, 0
    %p132 = por %p130, %p131
    %s134 = sadd.s32 %s133, 1
    %p137 = scmp.eq.s32.totalorder %s15, 1
    %p138 = scmp.ne.s32.totalorder %s133, %s135
    %p139 = scmp.eq.s32.totalorder %s15, 0
    %p140 = por %p138, %p139
    %p141 = scmp.ne.s32.totalorder %s133, %s135
    %p142 = scmp.eq.s32.totalorder %s20, 1
    %p143 = por %p141, %p142
    %p144 = scmp.ne.s32.totalorder %s135, %s136
    %p145 = scmp.eq.s32.totalorder %s20, 0
    %p146 = por %p144, %p145
    %p147 = scmp.ne.s32.totalorder %s135, %s136
    %p148 = scmp.eq.s32.totalorder %s21, 1
    %p149 = por %p147, %p148
    %p151 = scmp.ne.s32.totalorder %s136, %s150
    %p152 = scmp.eq.s32.totalorder %s21, 0
    %p153 = por %p151, %p152
    %s154 = ssub.s32 %s15, %s22
    %p155 = scmp.eq.s32.totalorder %s154, 0
    %s157 = sadd.s32 %s156, 1
    %s158 = scalar_select %p155, %s156, %s157
    %p161 = pneg %p155
    %p162 = scmp.eq.s32.totalorder %s15, 1
    %p163 = por %p161, %p162
    %p164 = scmp.ne.s32.totalorder %s156, %s159
    %p165 = scmp.eq.s32.totalorder %s15, 0
    %p166 = por %p164, %p165
    %p167 = scmp.ne.s32.totalorder %s156, %s159
    %p168 = scmp.eq.s32.totalorder %s20, 1
    %p169 = por %p167, %p168
    %p170 = scmp.ne.s32.totalorder %s159, %s160
    %p171 = scmp.eq.s32.totalorder %s20, 0
    %p172 = por %p170, %p171
    %p173 = scmp.ne.s32.totalorder %s159, %s160
    %p174 = scmp.eq.s32.totalorder %s21, 1
    %p175 = por %p173, %p174
    %p177 = scmp.ne.s32.totalorder %s160, %s176
    %p178 = scmp.eq.s32.totalorder %s21, 0
    %p179 = por %p177, %p178
    %s180 = ssub.s32 %s15, %s22
    %p181 = scmp.eq.s32.totalorder %s180, 0
    %s183 = sadd.s32 %s182, 1
    %s184 = scalar_select %p181, %s182, %s183
    %p187 = pneg %p181
    %p188 = scmp.eq.s32.totalorder %s15, 1
    %p189 = por %p187, %p188
    %p190 = scmp.ne.s32.totalorder %s182, %s185
    %p191 = scmp.eq.s32.totalorder %s15, 0
    %p192 = por %p190, %p191
    %p193 = scmp.ne.s32.totalorder %s182, %s185
    %p194 = scmp.eq.s32.totalorder %s20, 1
    %p195 = por %p193, %p194
    %p196 = scmp.ne.s32.totalorder %s185, %s186
    %p197 = scmp.eq.s32.totalorder %s20, 0
    %p198 = por %p196, %p197
    %p199 = scmp.ne.s32.totalorder %s185, %s186
    %p200 = scmp.eq.s32.totalorder %s21, 1
    %p201 = por %p199, %p200
    %p203 = scmp.ne.s32.totalorder %s186, %s202
    %p204 = scmp.eq.s32.totalorder %s21, 0
    %p205 = por %p203, %p204
    %s206 = ssub.s32 %s15, %s22
    %p207 = scmp.eq.s32.totalorder %s206, 0
    %s209 = sadd.s32 %s208, 1
    %s210 = scalar_select %p207, %s208, %s209
    %p213 = pneg %p207
    %p214 = scmp.eq.s32.totalorder %s15, 1
    %p215 = por %p213, %p214
    %p216 = scmp.ne.s32.totalorder %s208, %s211
    %p217 = scmp.eq.s32.totalorder %s15, 0
    %p218 = por %p216, %p217
    %p219 = scmp.ne.s32.totalorder %s208, %s211
    %p220 = scmp.eq.s32.totalorder %s20, 1
    %p221 = por %p219, %p220
    %p222 = scmp.ne.s32.totalorder %s211, %s212
    %p223 = scmp.eq.s32.totalorder %s20, 0
    %p224 = por %p222, %p223
    %p225 = scmp.ne.s32.totalorder %s211, %s212
    %p226 = scmp.eq.s32.totalorder %s21, 1
    %p227 = por %p225, %p226
    %p229 = scmp.ne.s32.totalorder %s212, %s228
    %p230 = scmp.eq.s32.totalorder %s21, 0
    %p231 = por %p229, %p230
    %p232 = scmp.le.s32.totalorder 1, %s15
    %p233 = scmp.lt.s32.totalorder %s15, 3
    %p234 = pnand %p232, %p233
    %p235 = pneg %p234
    // Predicated region
    $region9: #{conv_block_forward.4} parent=5 // pred_check
      _
    $region10: #{conv_block_forward.4} parent=5 // pred_check_branch
      %237 = sbr.rel (%p234) target = $region12
    $region11: #{conv_block_forward.4} parent=5 // pred_region
      %s238 = ssub.s32 %s15, 1
      // Predicated region
      $region13: #{conv_block_forward.4} parent=11 // pred_check
        %p239 = pneg %p62
      $region14: #{conv_block_forward.4} parent=11 // pred_check_branch
        %241 = sbr.rel (%p239) target = $region16
      $region15: #{conv_block_forward.4} parent=11 // pred_region
        _
      $region16: #{conv_block_forward.4} parent=11 // pred_fallthru
        _
      // Predicated region
      $region17: #{conv_block_forward.4} parent=11 // pred_check
        %p242 = pneg %p83
      $region18: #{conv_block_forward.4} parent=11 // pred_check_branch
        %244 = sbr.rel (%p242) target = $region20
      $region19: #{conv_block_forward.4} parent=11 // pred_region
        _
      $region20: #{conv_block_forward.4} parent=11 // pred_fallthru
        _
      // Predicated region
      $region21: #{conv_block_forward.4} parent=11 // pred_check
        %p245 = pneg %p104
      $region22: #{conv_block_forward.4} parent=11 // pred_check_branch
        %247 = sbr.rel (%p245) target = $region24
      $region23: #{conv_block_forward.4} parent=11 // pred_region
        _
      $region24: #{conv_block_forward.4} parent=11 // pred_fallthru
        _
      // Predicated region
      $region25: #{conv_block_forward.4} parent=11 // pred_check
        %p248 = pneg %p125
      $region26: #{conv_block_forward.4} parent=11 // pred_check_branch
        %250 = sbr.rel (%p248) target = $region28
      $region27: #{conv_block_forward.4} parent=11 // pred_region
        _
      $region28: #{conv_block_forward.4} parent=11 // pred_fallthru
        _
      // Predicated region
      $region29: #{conv_block_forward.4} parent=11 // pred_check
        %p251 = pneg %p146
      $region30: #{conv_block_forward.4} parent=11 // pred_check_branch
        %253 = sbr.rel (%p251) target = $region32
      $region31: #{conv_block_forward.4} parent=11 // pred_region
        _
      $region32: #{conv_block_forward.4} parent=11 // pred_fallthru
        _
    $region12: #{conv_block_forward.4} parent=5 // pred_fallthru
      _
    %p254 = scmp.lt.s32.totalorder %s15, 2
    // Predicated region
    $region33: #{conv_block_forward.4} parent=5 // pred_check
      %p255 = pneg %p254
    $region34: #{conv_block_forward.4} parent=5 // pred_check_branch
      %257 = sbr.rel (%p255) target = $region36
    $region35: #{conv_block_forward.4} parent=5 // pred_region
      // Predicated region
      $region37: #{conv_block_forward.4} parent=35 // pred_check
        %p258 = pneg %p35
      $region38: #{conv_block_forward.4} parent=35 // pred_check_branch
        %260 = sbr.rel (%p258) target = $region40
      $region39: #{conv_block_forward.4} parent=35 // pred_region
        %p261 = scmp.lt.s32.totalorder %s15, 1
        %s262 = scalar_select %p261, %s15, 1
        %s263 = smul.addr %s262, 2
        %s264 = smul.addr %s263, 8
        %s265 = scalar_lea.vmem %s0, %s264
      $region40: #{conv_block_forward.4} parent=35 // pred_fallthru
        _
    $region36: #{conv_block_forward.4} parent=5 // pred_fallthru
      _
    %p266 = scmp.le.s32.totalorder 1, %s15
    %p267 = scmp.lt.s32.totalorder %s15, 3
    %p268 = pnand %p266, %p267
    %p269 = pneg %p268
    // Predicated region
    $region41: #{conv_block_forward.4} parent=5 // pred_check
      _
    $region42: #{conv_block_forward.4} parent=5 // pred_check_branch
      %271 = sbr.rel (%p268) target = $region44
    $region43: #{conv_block_forward.4} parent=5 // pred_region
      %s272 = ssub.s32 %s15, 1
      %p273 = scmp.lt.s32.totalorder %s20, 1
      %s274 = scalar_select %p273, %s20, 1
      %s275 = smul.addr %s274, 2
      %s276 = smul.addr %s275, 8
      %s277 = scalar_lea.vmem %s0, %s276
      %p278 = pneg %p41
      %p279 = pneg %p38
      %p280 = pneg %p62
      %p281 = pneg %p59
      %p282 = pneg %p83
      %p283 = pneg %p80
      %p284 = pneg %p104
      %p285 = pneg %p101
      %p286 = pneg %p125
      %p287 = pneg %p122
      %p288 = pneg %p146
      %p289 = pneg %p143
      %p290 = pneg %p172
      %p291 = pneg %p169
      %p292 = scmp.lt.s32.totalorder %s20, 1
      %s293 = scalar_select %p292, %s20, 1
      %s294 = smul.addr %s293, 2
      %s295 = smul.addr %s294, 8
      %s296 = scalar_lea.vmem %s6, %s295
      %p297 = pneg %p198
      %p298 = pneg %p195
      %p299 = scmp.lt.s32.totalorder %s20, 1
      %s300 = scalar_select %p299, %s20, 1
      %s301 = smul.addr %s300, 8
      %s302 = scalar_lea.vmem %s7, %s301
      %p303 = pneg %p224
      %p304 = pneg %p221
      %p305 = scmp.lt.s32.totalorder %s20, 1
      %s306 = scalar_select %p305, %s20, 1
      %s307 = smul.addr %s306, 8
      %s308 = scalar_lea.vmem %s8, %s307
      %p309 = scmp.lt.s32.totalorder %s20, 1
      %s310 = scalar_select %p309, %s20, 1
      %s311 = smul.addr %s310, 2
      %s312 = smul.addr %s311, 8
      %s313 = scalar_lea.vmem %s0, %s312
      %p314 = scmp.lt.s32.totalorder %s20, 1
      %s315 = scalar_select %p314, %s20, 1
      %s316 = smul.addr %s315, 2
      %s317 = smul.addr %s316, 8
      %s318 = scalar_lea.vmem %s6, %s317
      %p319 = scmp.lt.s32.totalorder %s20, 1
      %s320 = scalar_select %p319, %s20, 1
      %s321 = smul.addr %s320, 8
      %s322 = scalar_lea.vmem %s7, %s321
      %p323 = scmp.lt.s32.totalorder %s20, 1
      %s324 = scalar_select %p323, %s20, 1
      %s325 = smul.addr %s324, 8
      %s326 = scalar_lea.vmem %s8, %s325
      %v327 = vld [vmem:[%s313] sm:$0xff]
      %v328 = vld [vmem:[%s313 + $0x8] sm:$0xff]
      %v329 = vld [vmem:[%s3] sm:$0xff]
      %331 = vset.pattern.permute.xlu0 0
      %332 = vperm.xlu0 %331, %v329
      %v333 = vpop.permute.xlu0 %332
      %v335 = vmul.f32 %v327, %v333
      %v336 = vmul.f32 %v328, %v333
      %v337 = vld [vmem:[%s4] sm:$0xff]
      %339 = vset.pattern.permute.xlu0 0
      %340 = vperm.xlu0 %339, %v337
      %v341 = vpop.permute.xlu0 %340
      %v343 = vadd.f32 %v335, %v341
      %v344 = vadd.f32 %v336, %v341
      %v345 = vld [vmem:[%s1] sm:$0xff]
      %v346 = vld [vmem:[%s1 + $0x8] sm:$0xff]
      %v347 = vld [vmem:[%s1 + $0x10] sm:$0xff]
      %v348 = vld [vmem:[%s1 + $0x18] sm:$0xff]
      %v349 = vld [vmem:[%s1 + $0x20] sm:$0xff]
      %v350 = vld [vmem:[%s1 + $0x28] sm:$0xff]
      %v351 = vld [vmem:[%s1 + $0x30] sm:$0xff]
      %v352 = vld [vmem:[%s1 + $0x38] sm:$0xff]
      %v353 = vld [vmem:[%s1 + $0x40] sm:$0xff]
      %v354 = vld [vmem:[%s5] sm:$0xff]
      %v355 = vld [vmem:[%s5 + $0x8] sm:$0xff]
      %v356 = vld [vmem:[%s5 + $0x10] sm:$0x1]
      %v357 = vld [vmem:[%s5 + $0x18] sm:$0x1]
      %v358 = vlaneseq
      %v359 = vshrl.u32 %v358, 7
      %v360 = vsub.s32 0, %v359
      %v361 = vrot.slane %v354, %v360
      %v362 = vlaneseq
      %v363 = vshrl.u32 %v362, 7
      %v364 = vsub.s32 0, %v363
      %v365 = vrot.slane %v355, %v364
      %368 = vrot.lane.b32.xlu0 %v361, 111
      %v369 = vpop.permute.xlu0 %368
      %370 = vrot.lane.b32.xlu0 %v365, 111
      %v371 = vpop.permute.xlu0 %370
      %vm372 = vcmask 908288
      %v373 = vsel %vm372, %v369, %v371
      %v377 = vmul.f32 %v369, 0.0
      %v378 = vmul.f32 %v343, %v373
      %v379 = vmul.f32 %v344, %v371
      %v380 = vlaneseq
      %v381 = vshrl.u32 %v380, 7
      %v382 = vsub.s32 1, %v381
      %v383 = vrot.slane %v354, %v382
      %v384 = vlaneseq
      %v385 = vshrl.u32 %v384, 7
      %v386 = vsub.s32 1, %v385
      %v387 = vrot.slane %v355, %v386
      %390 = vrot.lane.b32.xlu0 %v383, 112
      %v391 = vpop.permute.xlu0 %390
      %392 = vrot.lane.b32.xlu0 %v387, 112
      %v393 = vpop.permute.xlu0 %392
      %vm394 = vcmask 916480
      %v395 = vsel %vm394, %v391, %v393
      %v399 = vmul.f32 %v391, 0.0
      %v400 = vmul.f32 %v343, %v395
      %v401 = vmul.f32 %v344, %v393
      %405 = vrot.lane.b32.xlu0 %v399, 16
      %v406 = vpop.permute.xlu0 %405
      %407 = vrot.lane.b32.xlu0 %v400, 16
      %v408 = vpop.permute.xlu0 %407
      %409 = vrot.lane.b32.xlu0 %v401, 16
      %v410 = vpop.permute.xlu0 %409
      %vm411 = vcmask 130048
      %v412 = vsel %vm411, %v406, %v408
      %v413 = vsel %vm411, %v408, %v410
      %vm416 = vcmask 64512
      %v418 = vsel %vm416, %v346, 0
      %420 = vmatprep.subr.mxu0 %v413
      %421 = vmatpush1.msra.mxu0 %v412
      %422 = vmatprep.subr.mxu0 0.0
      %423 = vmatpush1.msra.mxu0 0.0
      %424 = vmatprep.subr.mxu0 0.0
      %425 = vmatpush1.msra.mxu0 0.0
      %426 = vmatprep.subr.mxu0 0.0
      %427 = vmatpush1.msra.mxu0 0.0
      %428 = vmatprep.subr.mxu0 0.0
      %429 = vmatpush1.msra.mxu0 0.0
      %430 = vmatprep.subr.mxu0 0.0
      %431 = vmatpush1.msra.mxu0 0.0
      %432 = vmatprep.subr.mxu0 0.0
      %433 = vmatpush1.msra.mxu0 0.0
      %434 = vmatprep.subr.mxu0 0.0
      %435 = vmatpush1.msra.mxu0 0.0
      %436 = vmatprep.subr.mxu0 0.0
      %437 = vmatpush1.msra.mxu0 0.0
      %438 = vmatprep.subr.mxu0 0.0
      %439 = vmatpush1.msra.mxu0 0.0
      %440 = vmatprep.subr.mxu0 0.0
      %441 = vmatpush1.msra.mxu0 0.0
      %442 = vmatprep.subr.mxu0 0.0
      %443 = vmatpush1.msra.mxu0 0.0
      %444 = vmatprep.subr.mxu0 0.0
      %445 = vmatpush1.msra.mxu0 0.0
      %446 = vmatprep.subr.mxu0 0.0
      %447 = vmatpush1.msra.mxu0 0.0
      %448 = vmatprep.subr.mxu0 0.0
      %449 = vmatpush1.msra.mxu0 0.0
      %450 = vmatprep.subr.mxu0 0.0
      %451 = vmatpush1.msra.mxu0 0.0
      %452 = vmatprep.subr.mxu0 0.0
      %453 = vmatpush1.msra.mxu0 0.0
      %454 = vmatprep.subr.mxu0 0.0
      %455 = vmatpush1.msra.mxu0 0.0
      %456 = vmatprep.subr.mxu0 0.0
      %457 = vmatpush1.msra.mxu0 0.0
      %458 = vmatprep.subr.mxu0 0.0
      %459 = vmatpush1.msra.mxu0 0.0
      %460 = vmatprep.subr.mxu0 0.0
      %461 = vmatpush1.msra.mxu0 0.0
      %462 = vmatprep.subr.mxu0 0.0
      %463 = vmatpush1.msra.mxu0 0.0
      %464 = vmatprep.subr.mxu0 0.0
      %465 = vmatpush1.msra.mxu0 0.0
      %466 = vmatprep.subr.mxu0 0.0
      %467 = vmatpush1.msra.mxu0 0.0
      %468 = vmatprep.subr.mxu0 0.0
      %469 = vmatpush1.msra.mxu0 0.0
      %470 = vmatprep.subr.mxu0 0.0
      %471 = vmatpush1.msra.mxu0 0.0
      %472 = vmatprep.subr.mxu0 0.0
      %473 = vmatpush1.msra.mxu0 0.0
      %474 = vmatprep.subr.mxu0 0.0
      %475 = vmatpush1.msra.mxu0 0.0
      %476 = vmatprep.subr.mxu0 0.0
      %477 = vmatpush1.msra.mxu0 0.0
      %478 = vmatprep.subr.mxu0 0.0
      %479 = vmatpush1.msra.mxu0 0.0
      %480 = vmatprep.subr.mxu0 0.0
      %481 = vmatpush1.msra.mxu0 0.0
      %482 = vmatprep.subr.mxu0 0.0
      %483 = vmatpush1.msra.mxu0 0.0
      %484 = vmatprep.mubr.f32.mxu0 0.0
      %485 = vmatmul.mubr.f32.gmra.mrb[0].mxu0 %v418
      %v486 = vpop.f32.mrb[0].mxu0
      %v487 = vadd.f32 0.0, %v486
      %v488 = vpop.f32.mrb[0].mxu0
      %v489 = vadd.f32 0.0, %v488
      %490 = vdwg.mxu0
      %494 = vrot.lane.b32.xlu0 %v377, 17
      %v495 = vpop.permute.xlu0 %494
      %496 = vrot.lane.b32.xlu0 %v378, 17
      %v497 = vpop.permute.xlu0 %496
      %498 = vrot.lane.b32.xlu0 %v379, 17
      %v499 = vpop.permute.xlu0 %498
      %vm500 = vcmask 138240
      %v501 = vsel %vm500, %v495, %v497
      %v502 = vsel %vm500, %v497, %v499
      %v506 = vsel %vm416, %v345, 0
      %508 = vmatprep.subr.mxu0 %v502
      %509 = vmatpush1.msra.mxu0 %v501
      %510 = vmatprep.subr.mxu0 0.0
      %511 = vmatpush1.msra.mxu0 0.0
      %512 = vmatprep.subr.mxu0 0.0
      %513 = vmatpush1.msra.mxu0 0.0
      %514 = vmatprep.subr.mxu0 0.0
      %515 = vmatpush1.msra.mxu0 0.0
      %516 = vmatprep.subr.mxu0 0.0
      %517 = vmatpush1.msra.mxu0 0.0
      %518 = vmatprep.subr.mxu0 0.0
      %519 = vmatpush1.msra.mxu0 0.0
      %520 = vmatprep.subr.mxu0 0.0
      %521 = vmatpush1.msra.mxu0 0.0
      %522 = vmatprep.subr.mxu0 0.0
      %523 = vmatpush1.msra.mxu0 0.0
      %524 = vmatprep.subr.mxu0 0.0
      %525 = vmatpush1.msra.mxu0 0.0
      %526 = vmatprep.subr.mxu0 0.0
      %527 = vmatpush1.msra.mxu0 0.0
      %528 = vmatprep.subr.mxu0 0.0
      %529 = vmatpush1.msra.mxu0 0.0
      %530 = vmatprep.subr.mxu0 0.0
      %531 = vmatpush1.msra.mxu0 0.0
      %532 = vmatprep.subr.mxu0 0.0
      %533 = vmatpush1.msra.mxu0 0.0
      %534 = vmatprep.subr.mxu0 0.0
      %535 = vmatpush1.msra.mxu0 0.0
      %536 = vmatprep.subr.mxu0 0.0
      %537 = vmatpush1.msra.mxu0 0.0
      %538 = vmatprep.subr.mxu0 0.0
      %539 = vmatpush1.msra.mxu0 0.0
      %540 = vmatprep.subr.mxu0 0.0
      %541 = vmatpush1.msra.mxu0 0.0
      %542 = vmatprep.subr.mxu0 0.0
      %543 = vmatpush1.msra.mxu0 0.0
      %544 = vmatprep.subr.mxu0 0.0
      %545 = vmatpush1.msra.mxu0 0.0
      %546 = vmatprep.subr.mxu0 0.0
      %547 = vmatpush1.msra.mxu0 0.0
      %548 = vmatprep.subr.mxu0 0.0
      %549 = vmatpush1.msra.mxu0 0.0
      %550 = vmatprep.subr.mxu0 0.0
      %551 = vmatpush1.msra.mxu0 0.0
      %552 = vmatprep.subr.mxu0 0.0
      %553 = vmatpush1.msra.mxu0 0.0
      %554 = vmatprep.subr.mxu0 0.0
      %555 = vmatpush1.msra.mxu0 0.0
      %556 = vmatprep.subr.mxu0 0.0
      %557 = vmatpush1.msra.mxu0 0.0
      %558 = vmatprep.subr.mxu0 0.0
      %559 = vmatpush1.msra.mxu0 0.0
      %560 = vmatprep.subr.mxu0 0.0
      %561 = vmatpush1.msra.mxu0 0.0
      %562 = vmatprep.subr.mxu0 0.0
      %563 = vmatpush1.msra.mxu0 0.0
      %564 = vmatprep.subr.mxu0 0.0
      %565 = vmatpush1.msra.mxu0 0.0
      %566 = vmatprep.subr.mxu0 0.0
      %567 = vmatpush1.msra.mxu0 0.0
      %568 = vmatprep.subr.mxu0 0.0
      %569 = vmatpush1.msra.mxu0 0.0
      %570 = vmatprep.subr.mxu0 0.0
      %571 = vmatpush1.msra.mxu0 0.0
      %572 = vmatprep.mubr.f32.mxu0 0.0
      %573 = vmatmul.mubr.f32.gmra.mrb[0].mxu0 %v506
      %v574 = vpop.f32.mrb[0].mxu0
      %v575 = vadd.f32 %v487, %v574
      %v576 = vpop.f32.mrb[0].mxu0
      %v577 = vadd.f32 %v489, %v576
      %578 = vdwg.mxu0
      %v579 = vlaneseq
      %v580 = vshrl.u32 %v579, 7
      %v581 = vsub.s32 2, %v580
      %v582 = vrot.slane %v354, %v581
      %v583 = vlaneseq
      %v584 = vshrl.u32 %v583, 7
      %v585 = vsub.s32 2, %v584
      %v586 = vrot.slane %v355, %v585
      %589 = vrot.lane.b32.xlu0 %v582, 113
      %v590 = vpop.permute.xlu0 %589
      %591 = vrot.lane.b32.xlu0 %v586, 113
      %v592 = vpop.permute.xlu0 %591
      %vm593 = vcmask 924672
      %v594 = vsel %vm593, %v590, %v592
      %v598 = vmul.f32 %v590, 0.0
      %v599 = vmul.f32 %v343, %v594
      %v600 = vmul.f32 %v344, %v592
      %604 = vrot.lane.b32.xlu0 %v598, 15
      %v605 = vpop.permute.xlu0 %604
      %606 = vrot.lane.b32.xlu0 %v599, 15
      %v607 = vpop.permute.xlu0 %606
      %608 = vrot.lane.b32.xlu0 %v600, 15
      %v609 = vpop.permute.xlu0 %608
      %vm610 = vcmask 121856
      %v611 = vsel %vm610, %v605, %v607
      %v612 = vsel %vm610, %v607, %v609
      %v616 = vsel %vm416, %v347, 0
      %618 = vmatprep.subr.mxu0 %v612
      %619 = vmatpush1.msra.mxu0 %v611
      %620 = vmatprep.subr.mxu0 0.0
      %621 = vmatpush1.msra.mxu0 0.0
      %622 = vmatprep.subr.mxu0 0.0
      %623 = vmatpush1.msra.mxu0 0.0
      %624 = vmatprep.subr.mxu0 0.0
      %625 = vmatpush1.msra.mxu0 0.0
      %626 = vmatprep.subr.mxu0 0.0
      %627 = vmatpush1.msra.mxu0 0.0
      %628 = vmatprep.subr.mxu0 0.0
      %629 = vmatpush1.msra.mxu0 0.0
      %630 = vmatprep.subr.mxu0 0.0
      %631 = vmatpush1.msra.mxu0 0.0
      %632 = vmatprep.subr.mxu0 0.0
      %633 = vmatpush1.msra.mxu0 0.0
      %634 = vmatprep.subr.mxu0 0.0
      %635 = vmatpush1.msra.mxu0 0.0
      %636 = vmatprep.subr.mxu0 0.0
      %637 = vmatpush1.msra.mxu0 0.0
      %638 = vmatprep.subr.mxu0 0.0
      %639 = vmatpush1.msra.mxu0 0.0
      %640 = vmatprep.subr.mxu0 0.0
      %641 = vmatpush1.msra.mxu0 0.0
      %642 = vmatprep.subr.mxu0 0.0
      %643 = vmatpush1.msra.mxu0 0.0
      %644 = vmatprep.subr.mxu0 0.0
      %645 = vmatpush1.msra.mxu0 0.0
      %646 = vmatprep.subr.mxu0 0.0
      %647 = vmatpush1.msra.mxu0 0.0
      %648 = vmatprep.subr.mxu0 0.0
      %649 = vmatpush1.msra.mxu0 0.0
      %650 = vmatprep.subr.mxu0 0.0
      %651 = vmatpush1.msra.mxu0 0.0
      %652 = vmatprep.subr.mxu0 0.0
      %653 = vmatpush1.msra.mxu0 0.0
      %654 = vmatprep.subr.mxu0 0.0
      %655 = vmatpush1.msra.mxu0 0.0
      %656 = vmatprep.subr.mxu0 0.0
      %657 = vmatpush1.msra.mxu0 0.0
      %658 = vmatprep.subr.mxu0 0.0
      %659 = vmatpush1.msra.mxu0 0.0
      %660 = vmatprep.subr.mxu0 0.0
      %661 = vmatpush1.msra.mxu0 0.0
      %662 = vmatprep.subr.mxu0 0.0
      %663 = vmatpush1.msra.mxu0 0.0
      %664 = vmatprep.subr.mxu0 0.0
      %665 = vmatpush1.msra.mxu0 0.0
      %666 = vmatprep.subr.mxu0 0.0
      %667 = vmatpush1.msra.mxu0 0.0
      %668 = vmatprep.subr.mxu0 0.0
      %669 = vmatpush1.msra.mxu0 0.0
      %670 = vmatprep.subr.mxu0 0.0
      %671 = vmatpush1.msra.mxu0 0.0
      %672 = vmatprep.subr.mxu0 0.0
      %673 = vmatpush1.msra.mxu0 0.0
      %674 = vmatprep.subr.mxu0 0.0
      %675 = vmatpush1.msra.mxu0 0.0
      %676 = vmatprep.subr.mxu0 0.0
      %677 = vmatpush1.msra.mxu0 0.0
      %678 = vmatprep.subr.mxu0 0.0
      %679 = vmatpush1.msra.mxu0 0.0
      %680 = vmatprep.subr.mxu0 0.0
      %681 = vmatpush1.msra.mxu0 0.0
      %682 = vmatprep.mubr.f32.mxu0 0.0
      %683 = vmatmul.mubr.f32.gmra.mrb[0].mxu0 %v616
      %v684 = vpop.f32.mrb[0].mxu0
      %v685 = vadd.f32 0.0, %v684
      %v686 = vpop.f32.mrb[0].mxu0
      %v687 = vadd.f32 0.0, %v686
      %688 = vdwg.mxu0
      %v689 = vadd.f32 %v575, %v685
      %v690 = vadd.f32 %v577, %v687
      %v691 = vlaneseq
      %v692 = vshrl.u32 %v691, 7
      %v693 = vsub.s32 3, %v692
      %v694 = vrot.slane %v354, %v693
      %v695 = vlaneseq
      %v696 = vshrl.u32 %v695, 7
      %v697 = vsub.s32 3, %v696
      %v698 = vrot.slane %v355, %v697
      %701 = vrot.lane.b32.xlu0 %v694, 127
      %v702 = vpop.permute.xlu0 %701
      %703 = vrot.lane.b32.xlu0 %v698, 127
      %v704 = vpop.permute.xlu0 %703
      %vm705 = vcmask 1039360
      %v706 = vsel %vm705, %v702, %v704
      %v710 = vmul.f32 %v702, 0.0
      %v711 = vmul.f32 %v343, %v706
      %v712 = vmul.f32 %v344, %v704
      %716 = vrot.lane.b32.xlu0 %v710, 1
      %v717 = vpop.permute.xlu0 %716
      %718 = vrot.lane.b32.xlu0 %v711, 1
      %v719 = vpop.permute.xlu0 %718
      %720 = vrot.lane.b32.xlu0 %v712, 1
      %v721 = vpop.permute.xlu0 %720
      %vm722 = vcmask 7168
      %v723 = vsel %vm722, %v717, %v719
      %v724 = vsel %vm722, %v719, %v721
      %v728 = vsel %vm416, %v348, 0
      %730 = vmatprep.subr.mxu0 %v724
      %731 = vmatpush1.msra.mxu0 %v723
      %732 = vmatprep.subr.mxu0 0.0
      %733 = vmatpush1.msra.mxu0 0.0
      %734 = vmatprep.subr.mxu0 0.0
      %735 = vmatpush1.msra.mxu0 0.0
      %736 = vmatprep.subr.mxu0 0.0
      %737 = vmatpush1.msra.mxu0 0.0
      %738 = vmatprep.subr.mxu0 0.0
      %739 = vmatpush1.msra.mxu0 0.0
      %740 = vmatprep.subr.mxu0 0.0
      %741 = vmatpush1.msra.mxu0 0.0
      %742 = vmatprep.subr.mxu0 0.0
      %743 = vmatpush1.msra.mxu0 0.0
      %744 = vmatprep.subr.mxu0 0.0
      %745 = vmatpush1.msra.mxu0 0.0
      %746 = vmatprep.subr.mxu0 0.0
      %747 = vmatpush1.msra.mxu0 0.0
      %748 = vmatprep.subr.mxu0 0.0
      %749 = vmatpush1.msra.mxu0 0.0
      %750 = vmatprep.subr.mxu0 0.0
      %751 = vmatpush1.msra.mxu0 0.0
      %752 = vmatprep.subr.mxu0 0.0
      %753 = vmatpush1.msra.mxu0 0.0
      %754 = vmatprep.subr.mxu0 0.0
      %755 = vmatpush1.msra.mxu0 0.0
      %756 = vmatprep.subr.mxu0 0.0
      %757 = vmatpush1.msra.mxu0 0.0
      %758 = vmatprep.subr.mxu0 0.0
      %759 = vmatpush1.msra.mxu0 0.0
      %760 = vmatprep.subr.mxu0 0.0
      %761 = vmatpush1.msra.mxu0 0.0
      %762 = vmatprep.subr.mxu0 0.0
      %763 = vmatpush1.msra.mxu0 0.0
      %764 = vmatprep.subr.mxu0 0.0
      %765 = vmatpush1.msra.mxu0 0.0
      %766 = vmatprep.subr.mxu0 0.0
      %767 = vmatpush1.msra.mxu0 0.0
      %768 = vmatprep.subr.mxu0 0.0
      %769 = vmatpush1.msra.mxu0 0.0
      %770 = vmatprep.subr.mxu0 0.0
      %771 = vmatpush1.msra.mxu0 0.0
      %772 = vmatprep.subr.mxu0 0.0
      %773 = vmatpush1.msra.mxu0 0.0
      %774 = vmatprep.subr.mxu0 0.0
      %775 = vmatpush1.msra.mxu0 0.0
      %776 = vmatprep.subr.mxu0 0.0
      %777 = vmatpush1.msra.mxu0 0.0
      %778 = vmatprep.subr.mxu0 0.0
      %779 = vmatpush1.msra.mxu0 0.0
      %780 = vmatprep.subr.mxu0 0.0
      %781 = vmatpush1.msra.mxu0 0.0
      %782 = vmatprep.subr.mxu0 0.0
      %783 = vmatpush1.msra.mxu0 0.0
      %784 = vmatprep.subr.mxu0 0.0
      %785 = vmatpush1.msra.mxu0 0.0
      %786 = vmatprep.subr.mxu0 0.0
      %787 = vmatpush1.msra.mxu0 0.0
      %788 = vmatprep.subr.mxu0 0.0
      %789 = vmatpush1.msra.mxu0 0.0
      %790 = vmatprep.subr.mxu0 0.0
      %791 = vmatpush1.msra.mxu0 0.0
      %792 = vmatprep.subr.mxu0 0.0
      %793 = vmatpush1.msra.mxu0 0.0
      %794 = vmatprep.mubr.f32.mxu0 0.0
      %795 = vmatmul.mubr.f32.gmra.mrb[0].mxu0 %v728
      %v796 = vpop.f32.mrb[0].mxu0
      %v797 = vadd.f32 0.0, %v796
      %v798 = vpop.f32.mrb[0].mxu0
      %v799 = vadd.f32 0.0, %v798
      %800 = vdwg.mxu0
      %v801 = vadd.f32 %v689, %v797
      %v802 = vadd.f32 %v690, %v799
      %v803 = vlaneseq
      %v804 = vshrl.u32 %v803, 7
      %v805 = vsub.s32 4, %v804
      %v806 = vrot.slane %v354, %v805
      %v807 = vlaneseq
      %v808 = vshrl.u32 %v807, 7
      %v809 = vsub.s32 4, %v808
      %v810 = vrot.slane %v355, %v809
      %v811 = vmul.f32 %v343, %v806
      %v812 = vmul.f32 %v344, %v810
      %v814 = vsel %vm416, %v349, 0
      %816 = vmatprep.subr.mxu0 %v812
      %817 = vmatpush1.msra.mxu0 %v811
      %818 = vmatprep.subr.mxu0 0.0
      %819 = vmatpush1.msra.mxu0 0.0
      %820 = vmatprep.subr.mxu0 0.0
      %821 = vmatpush1.msra.mxu0 0.0
      %822 = vmatprep.subr.mxu0 0.0
      %823 = vmatpush1.msra.mxu0 0.0
      %824 = vmatprep.subr.mxu0 0.0
      %825 = vmatpush1.msra.mxu0 0.0
      %826 = vmatprep.subr.mxu0 0.0
      %827 = vmatpush1.msra.mxu0 0.0
      %828 = vmatprep.subr.mxu0 0.0
      %829 = vmatpush1.msra.mxu0 0.0
      %830 = vmatprep.subr.mxu0 0.0
      %831 = vmatpush1.msra.mxu0 0.0
      %832 = vmatprep.subr.mxu0 0.0
      %833 = vmatpush1.msra.mxu0 0.0
      %834 = vmatprep.subr.mxu0 0.0
      %835 = vmatpush1.msra.mxu0 0.0
      %836 = vmatprep.subr.mxu0 0.0
      %837 = vmatpush1.msra.mxu0 0.0
      %838 = vmatprep.subr.mxu0 0.0
      %839 = vmatpush1.msra.mxu0 0.0
      %840 = vmatprep.subr.mxu0 0.0
      %841 = vmatpush1.msra.mxu0 0.0
      %842 = vmatprep.subr.mxu0 0.0
      %843 = vmatpush1.msra.mxu0 0.0
      %844 = vmatprep.subr.mxu0 0.0
      %845 = vmatpush1.msra.mxu0 0.0
      %846 = vmatprep.subr.mxu0 0.0
      %847 = vmatpush1.msra.mxu0 0.0
      %848 = vmatprep.subr.mxu0 0.0
      %849 = vmatpush1.msra.mxu0 0.0
      %850 = vmatprep.subr.mxu0 0.0
      %851 = vmatpush1.msra.mxu0 0.0
      %852 = vmatprep.subr.mxu0 0.0
      %853 = vmatpush1.msra.mxu0 0.0
      %854 = vmatprep.subr.mxu0 0.0
      %855 = vmatpush1.msra.mxu0 0.0
      %856 = vmatprep.subr.mxu0 0.0
      %857 = vmatpush1.msra.mxu0 0.0
      %858 = vmatprep.subr.mxu0 0.0
      %859 = vmatpush1.msra.mxu0 0.0
      %860 = vmatprep.subr.mxu0 0.0
      %861 = vmatpush1.msra.mxu0 0.0
      %862 = vmatprep.subr.mxu0 0.0
      %863 = vmatpush1.msra.mxu0 0.0
      %864 = vmatprep.subr.mxu0 0.0
      %865 = vmatpush1.msra.mxu0 0.0
      %866 = vmatprep.subr.mxu0 0.0
      %867 = vmatpush1.msra.mxu0 0.0
      %868 = vmatprep.subr.mxu0 0.0
      %869 = vmatpush1.msra.mxu0 0.0
      %870 = vmatprep.subr.mxu0 0.0
      %871 = vmatpush1.msra.mxu0 0.0
      %872 = vmatprep.subr.mxu0 0.0
      %873 = vmatpush1.msra.mxu0 0.0
      %874 = vmatprep.subr.mxu0 0.0
      %875 = vmatpush1.msra.mxu0 0.0
      %876 = vmatprep.subr.mxu0 0.0
      %877 = vmatpush1.msra.mxu0 0.0
      %878 = vmatprep.subr.mxu0 0.0
      %879 = vmatpush1.msra.mxu0 0.0
      %880 = vmatprep.mubr.f32.mxu0 0.0
      %881 = vmatmul.mubr.f32.gmra.mrb[0].mxu0 %v814
      %v882 = vpop.f32.mrb[0].mxu0
      %v883 = vadd.f32 0.0, %v882
      %v884 = vpop.f32.mrb[0].mxu0
      %v885 = vadd.f32 0.0, %v884
      %886 = vdwg.mxu0
      %v887 = vadd.f32 %v801, %v883
      %v888 = vadd.f32 %v802, %v885
      %v889 = vlaneseq
      %v890 = vshrl.u32 %v889, 7
      %v891 = vsub.s32 5, %v890
      %v892 = vrot.slane %v354, %v891
      %v893 = vlaneseq
      %v894 = vshrl.u32 %v893, 7
      %v895 = vsub.s32 5, %v894
      %v896 = vrot.slane %v355, %v895
      %899 = vrot.lane.b32.xlu0 %v892, 1
      %v900 = vpop.permute.xlu0 %899
      %901 = vrot.lane.b32.xlu0 %v896, 1
      %v902 = vpop.permute.xlu0 %901
      %v903 = vsel %vm722, %v900, %v902
      %v907 = vmul.f32 %v343, %v900
      %v908 = vmul.f32 %v344, %v903
      %v909 = vmul.f32 %v902, 0.0
      %913 = vrot.lane.b32.xlu0 %v907, 127
      %v914 = vpop.permute.xlu0 %913
      %915 = vrot.lane.b32.xlu0 %v908, 127
      %v916 = vpop.permute.xlu0 %915
      %917 = vrot.lane.b32.xlu0 %v909, 127
      %v918 = vpop.permute.xlu0 %917
      %v919 = vsel %vm705, %v914, %v916
      %v920 = vsel %vm705, %v916, %v918
      %v924 = vsel %vm416, %v350, 0
      %926 = vmatprep.subr.mxu0 %v920
      %927 = vmatpush1.msra.mxu0 %v919
      %928 = vmatprep.subr.mxu0 0.0
      %929 = vmatpush1.msra.mxu0 0.0
      %930 = vmatprep.subr.mxu0 0.0
      %931 = vmatpush1.msra.mxu0 0.0
      %932 = vmatprep.subr.mxu0 0.0
      %933 = vmatpush1.msra.mxu0 0.0
      %934 = vmatprep.subr.mxu0 0.0
      %935 = vmatpush1.msra.mxu0 0.0
      %936 = vmatprep.subr.mxu0 0.0
      %937 = vmatpush1.msra.mxu0 0.0
      %938 = vmatprep.subr.mxu0 0.0
      %939 = vmatpush1.msra.mxu0 0.0
      %940 = vmatprep.subr.mxu0 0.0
      %941 = vmatpush1.msra.mxu0 0.0
      %942 = vmatprep.subr.mxu0 0.0
      %943 = vmatpush1.msra.mxu0 0.0
      %944 = vmatprep.subr.mxu0 0.0
      %945 = vmatpush1.msra.mxu0 0.0
      %946 = vmatprep.subr.mxu0 0.0
      %947 = vmatpush1.msra.mxu0 0.0
      %948 = vmatprep.subr.mxu0 0.0
      %949 = vmatpush1.msra.mxu0 0.0
      %950 = vmatprep.subr.mxu0 0.0
      %951 = vmatpush1.msra.mxu0 0.0
      %952 = vmatprep.subr.mxu0 0.0
      %953 = vmatpush1.msra.mxu0 0.0
      %954 = vmatprep.subr.mxu0 0.0
      %955 = vmatpush1.msra.mxu0 0.0
      %956 = vmatprep.subr.mxu0 0.0
      %957 = vmatpush1.msra.mxu0 0.0
      %958 = vmatprep.subr.mxu0 0.0
      %959 = vmatpush1.msra.mxu0 0.0
      %960 = vmatprep.subr.mxu0 0.0
      %961 = vmatpush1.msra.mxu0 0.0
      %962 = vmatprep.subr.mxu0 0.0
      %963 = vmatpush1.msra.mxu0 0.0
      %964 = vmatprep.subr.mxu0 0.0
      %965 = vmatpush1.msra.mxu0 0.0
      %966 = vmatprep.subr.mxu0 0.0
      %967 = vmatpush1.msra.mxu0 0.0
      %968 = vmatprep.subr.mxu0 0.0
      %969 = vmatpush1.msra.mxu0 0.0
      %970 = vmatprep.subr.mxu0 0.0
      %971 = vmatpush1.msra.mxu0 0.0
      %972 = vmatprep.subr.mxu0 0.0
      %973 = vmatpush1.msra.mxu0 0.0
      %974 = vmatprep.subr.mxu0 0.0
      %975 = vmatpush1.msra.mxu0 0.0
      %976 = vmatprep.subr.mxu0 0.0
      %977 = vmatpush1.msra.mxu0 0.0
      %978 = vmatprep.subr.mxu0 0.0
      %979 = vmatpush1.msra.mxu0 0.0
      %980 = vmatprep.subr.mxu0 0.0
      %981 = vmatpush1.msra.mxu0 0.0
      %982 = vmatprep.subr.mxu0 0.0
      %983 = vmatpush1.msra.mxu0 0.0
      %984 = vmatprep.subr.mxu0 0.0
      %985 = vmatpush1.msra.mxu0 0.0
      %986 = vmatprep.subr.mxu0 0.0
      %987 = vmatpush1.msra.mxu0 0.0
      %988 = vmatprep.subr.mxu0 0.0
      %989 = vmatpush1.msra.mxu0 0.0
      %990 = vmatprep.mubr.f32.mxu0 0.0
      %991 = vmatmul.mubr.f32.gmra.mrb[0].mxu0 %v924
      %v992 = vpop.f32.mrb[0].mxu0
      %v993 = vadd.f32 0.0, %v992
      %v994 = vpop.f32.mrb[0].mxu0
      %v995 = vadd.f32 0.0, %v994
      %996 = vdwg.mxu0
      %v997 = vadd.f32 %v887, %v993
      %v998 = vadd.f32 %v888, %v995
      %v999 = vlaneseq
      %v1000 = vshrl.u32 %v999, 7
      %v1001 = vsub.s32 6, %v1000
      %v1002 = vrot.slane %v354, %v1001
      %v1003 = vlaneseq
      %v1004 = vshrl.u32 %v1003, 7
      %v1005 = vsub.s32 6, %v1004
      %v1006 = vrot.slane %v355, %v1005
      %1009 = vrot.lane.b32.xlu0 %v1002, 15
      %v1010 = vpop.permute.xlu0 %1009
      %1011 = vrot.lane.b32.xlu0 %v1006, 15
      %v1012 = vpop.permute.xlu0 %1011
      %v1013 = vsel %vm610, %v1010, %v1012
      %v1017 = vmul.f32 %v343, %v1010
      %v1018 = vmul.f32 %v344, %v1013
      %v1019 = vmul.f32 %v1012, 0.0
      %1023 = vrot.lane.b32.xlu0 %v1017, 113
      %v1024 = vpop.permute.xlu0 %1023
      %1025 = vrot.lane.b32.xlu0 %v1018, 113
      %v1026 = vpop.permute.xlu0 %1025
      %1027 = vrot.lane.b32.xlu0 %v1019, 113
      %v1028 = vpop.permute.xlu0 %1027
      %v1029 = vsel %vm593, %v1024, %v1026
      %v1030 = vsel %vm593, %v1026, %v1028
      %v1034 = vsel %vm416, %v351, 0
      %1036 = vmatprep.subr.mxu0 %v1030
      %1037 = vmatpush1.msra.mxu0 %v1029
      %1038 = vmatprep.subr.mxu0 0.0
      %1039 = vmatpush1.msra.mxu0 0.0
      %1040 = vmatprep.subr.mxu0 0.0
      %1041 = vmatpush1.msra.mxu0 0.0
      %1042 = vmatprep.subr.mxu0 0.0
      %1043 = vmatpush1.msra.mxu0 0.0
      %1044 = vmatprep.subr.mxu0 0.0
      %1045 = vmatpush1.msra.mxu0 0.0
      %1046 = vmatprep.subr.mxu0 0.0
      %1047 = vmatpush1.msra.mxu0 0.0
      %1048 = vmatprep.subr.mxu0 0.0
      %1049 = vmatpush1.msra.mxu0 0.0
      %1050 = vmatprep.subr.mxu0 0.0
      %1051 = vmatpush1.msra.mxu0 0.0
      %1052 = vmatprep.subr.mxu0 0.0
      %1053 = vmatpush1.msra.mxu0 0.0
      %1054 = vmatprep.subr.mxu0 0.0
      %1055 = vmatpush1.msra.mxu0 0.0
      %1056 = vmatprep.subr.mxu0 0.0
      %1057 = vmatpush1.msra.mxu0 0.0
      %1058 = vmatprep.subr.mxu0 0.0
      %1059 = vmatpush1.msra.mxu0 0.0
      %1060 = vmatprep.subr.mxu0 0.0
      %1061 = vmatpush1.msra.mxu0 0.0
      %1062 = vmatprep.subr.mxu0 0.0
      %1063 = vmatpush1.msra.mxu0 0.0
      %1064 = vmatprep.subr.mxu0 0.0
      %1065 = vmatpush1.msra.mxu0 0.0
      %1066 = vmatprep.subr.mxu0 0.0
      %1067 = vmatpush1.msra.mxu0 0.0
      %1068 = vmatprep.subr.mxu0 0.0
      %1069 = vmatpush1.msra.mxu0 0.0
      %1070 = vmatprep.subr.mxu0 0.0
      %1071 = vmatpush1.msra.mxu0 0.0
      %1072 = vmatprep.subr.mxu0 0.0
      %1073 = vmatpush1.msra.mxu0 0.0
      %1074 = vmatprep.subr.mxu0 0.0
      %1075 = vmatpush1.msra.mxu0 0.0
      %1076 = vmatprep.subr.mxu0 0.0
      %1077 = vmatpush1.msra.mxu0 0.0
      %1078 = vmatprep.subr.mxu0 0.0
      %1079 = vmatpush1.msra.mxu0 0.0
      %1080 = vmatprep.subr.mxu0 0.0
      %1081 = vmatpush1.msra.mxu0 0.0
      %1082 = vmatprep.subr.mxu0 0.0
      %1083 = vmatpush1.msra.mxu0 0.0
      %1084 = vmatprep.subr.mxu0 0.0
      %1085 = vmatpush1.msra.mxu0 0.0
      %1086 = vmatprep.subr.mxu0 0.0
      %1087 = vmatpush1.msra.mxu0 0.0
      %1088 = vmatprep.subr.mxu0 0.0
      %1089 = vmatpush1.msra.mxu0 0.0
      %1090 = vmatprep.subr.mxu0 0.0
      %1091 = vmatpush1.msra.mxu0 0.0
      %1092 = vmatprep.subr.mxu0 0.0
      %1093 = vmatpush1.msra.mxu0 0.0
      %1094 = vmatprep.subr.mxu0 0.0
      %1095 = vmatpush1.msra.mxu0 0.0
      %1096 = vmatprep.subr.mxu0 0.0
      %1097 = vmatpush1.msra.mxu0 0.0
      %1098 = vmatprep.subr.mxu0 0.0
      %1099 = vmatpush1.msra.mxu0 0.0
      %1100 = vmatprep.mubr.f32.mxu0 0.0
      %1101 = vmatmul.mubr.f32.gmra.mrb[0].mxu0 %v1034
      %v1102 = vpop.f32.mrb[0].mxu0
      %v1103 = vadd.f32 0.0, %v1102
      %v1104 = vpop.f32.mrb[0].mxu0
      %v1105 = vadd.f32 0.0, %v1104
      %1106 = vdwg.mxu0
      %v1107 = vadd.f32 %v997, %v1103
      %v1108 = vadd.f32 %v998, %v1105
      %v1109 = vlaneseq
      %v1110 = vshrl.u32 %v1109, 7
      %v1111 = vsub.s32 7, %v1110
      %v1112 = vrot.slane %v354, %v1111
      %v1113 = vlaneseq
      %v1114 = vshrl.u32 %v1113, 7
      %v1115 = vsub.s32 7, %v1114
      %v1116 = vrot.slane %v355, %v1115
      %1119 = vrot.lane.b32.xlu0 %v1112, 16
      %v1120 = vpop.permute.xlu0 %1119
      %1121 = vrot.lane.b32.xlu0 %v1116, 16
      %v1122 = vpop.permute.xlu0 %1121
      %v1123 = vsel %vm411, %v1120, %v1122
      %v1127 = vmul.f32 %v343, %v1120
      %v1128 = vmul.f32 %v344, %v1123
      %v1129 = vmul.f32 %v1122, 0.0
      %1133 = vrot.lane.b32.xlu0 %v1127, 112
      %v1134 = vpop.permute.xlu0 %1133
      %1135 = vrot.lane.b32.xlu0 %v1128, 112
      %v1136 = vpop.permute.xlu0 %1135
      %1137 = vrot.lane.b32.xlu0 %v1129, 112
      %v1138 = vpop.permute.xlu0 %1137
      %v1139 = vsel %vm394, %v1134, %v1136
      %v1140 = vsel %vm394, %v1136, %v1138
      %v1144 = vsel %vm416, %v352, 0
      %1146 = vmatprep.subr.mxu0 %v1140
      %1147 = vmatpush1.msra.mxu0 %v1139
      %1148 = vmatprep.subr.mxu0 0.0
      %1149 = vmatpush1.msra.mxu0 0.0
      %1150 = vmatprep.subr.mxu0 0.0
      %1151 = vmatpush1.msra.mxu0 0.0
      %1152 = vmatprep.subr.mxu0 0.0
      %1153 = vmatpush1.msra.mxu0 0.0
      %1154 = vmatprep.subr.mxu0 0.0
      %1155 = vmatpush1.msra.mxu0 0.0
      %1156 = vmatprep.subr.mxu0 0.0
      %1157 = vmatpush1.msra.mxu0 0.0
      %1158 = vmatprep.subr.mxu0 0.0
      %1159 = vmatpush1.msra.mxu0 0.0
      %1160 = vmatprep.subr.mxu0 0.0
      %1161 = vmatpush1.msra.mxu0 0.0
      %1162 = vmatprep.subr.mxu0 0.0
      %1163 = vmatpush1.msra.mxu0 0.0
      %1164 = vmatprep.subr.mxu0 0.0
      %1165 = vmatpush1.msra.mxu0 0.0
      %1166 = vmatprep.subr.mxu0 0.0
      %1167 = vmatpush1.msra.mxu0 0.0
      %1168 = vmatprep.subr.mxu0 0.0
      %1169 = vmatpush1.msra.mxu0 0.0
      %1170 = vmatprep.subr.mxu0 0.0
      %1171 = vmatpush1.msra.mxu0 0.0
      %1172 = vmatprep.subr.mxu0 0.0
      %1173 = vmatpush1.msra.mxu0 0.0
      %1174 = vmatprep.subr.mxu0 0.0
      %1175 = vmatpush1.msra.mxu0 0.0
      %1176 = vmatprep.subr.mxu0 0.0
      %1177 = vmatpush1.msra.mxu0 0.0
      %1178 = vmatprep.subr.mxu0 0.0
      %1179 = vmatpush1.msra.mxu0 0.0
      %1180 = vmatprep.subr.mxu0 0.0
      %1181 = vmatpush1.msra.mxu0 0.0
      %1182 = vmatprep.subr.mxu0 0.0
      %1183 = vmatpush1.msra.mxu0 0.0
      %1184 = vmatprep.subr.mxu0 0.0
      %1185 = vmatpush1.msra.mxu0 0.0
      %1186 = vmatprep.subr.mxu0 0.0
      %1187 = vmatpush1.msra.mxu0 0.0
      %1188 = vmatprep.subr.mxu0 0.0
      %1189 = vmatpush1.msra.mxu0 0.0
      %1190 = vmatprep.subr.mxu0 0.0
      %1191 = vmatpush1.msra.mxu0 0.0
      %1192 = vmatprep.subr.mxu0 0.0
      %1193 = vmatpush1.msra.mxu0 0.0
      %1194 = vmatprep.subr.mxu0 0.0
      %1195 = vmatpush1.msra.mxu0 0.0
      %1196 = vmatprep.subr.mxu0 0.0
      %1197 = vmatpush1.msra.mxu0 0.0
      %1198 = vmatprep.subr.mxu0 0.0
      %1199 = vmatpush1.msra.mxu0 0.0
      %1200 = vmatprep.subr.mxu0 0.0
      %1201 = vmatpush1.msra.mxu0 0.0
      %1202 = vmatprep.subr.mxu0 0.0
      %1203 = vmatpush1.msra.mxu0 0.0
      %1204 = vmatprep.subr.mxu0 0.0
      %1205 = vmatpush1.msra.mxu0 0.0
      %1206 = vmatprep.subr.mxu0 0.0
      %1207 = vmatpush1.msra.mxu0 0.0
      %1208 = vmatprep.subr.mxu0 0.0
      %1209 = vmatpush1.msra.mxu0 0.0
      %1210 = vmatprep.mubr.f32.mxu0 0.0
      %1211 = vmatmul.mubr.f32.gmra.mrb[0].mxu0 %v1144
      %v1212 = vpop.f32.mrb[0].mxu0
      %v1213 = vadd.f32 0.0, %v1212
      %v1214 = vpop.f32.mrb[0].mxu0
      %v1215 = vadd.f32 0.0, %v1214
      %1216 = vdwg.mxu0
      %v1217 = vadd.f32 %v1107, %v1213
      %v1218 = vadd.f32 %v1108, %v1215
      %v1219 = vlaneseq
      %v1220 = vshrl.u32 %v1219, 7
      %v1221 = vsub.s32 0, %v1220
      %v1222 = vrot.slane %v356, %v1221
      %v1223 = vlaneseq
      %v1224 = vshrl.u32 %v1223, 7
      %v1225 = vsub.s32 0, %v1224
      %v1226 = vrot.slane %v357, %v1225
      %1229 = vrot.lane.b32.xlu0 %v1222, 17
      %v1230 = vpop.permute.xlu0 %1229
      %1231 = vrot.lane.b32.xlu0 %v1226, 17
      %v1232 = vpop.permute.xlu0 %1231
      %v1233 = vsel %vm500, %v1230, %v1232
      %v1237 = vmul.f32 %v343, %v1230
      %v1238 = vmul.f32 %v344, %v1233
      %v1239 = vmul.f32 %v1232, 0.0
      %1243 = vrot.lane.b32.xlu0 %v1237, 111
      %v1244 = vpop.permute.xlu0 %1243
      %1245 = vrot.lane.b32.xlu0 %v1238, 111
      %v1246 = vpop.permute.xlu0 %1245
      %1247 = vrot.lane.b32.xlu0 %v1239, 111
      %v1248 = vpop.permute.xlu0 %1247
      %v1249 = vsel %vm372, %v1244, %v1246
      %v1250 = vsel %vm372, %v1246, %v1248
      %v1254 = vsel %vm416, %v353, 0
      %1256 = vmatprep.subr.mxu0 %v1250
      %1257 = vmatpush1.msra.mxu0 %v1249
      %1258 = vmatprep.subr.mxu0 0.0
      %1259 = vmatpush1.msra.mxu0 0.0
      %1260 = vmatprep.subr.mxu0 0.0
      %1261 = vmatpush1.msra.mxu0 0.0
      %1262 = vmatprep.subr.mxu0 0.0
      %1263 = vmatpush1.msra.mxu0 0.0
      %1264 = vmatprep.subr.mxu0 0.0
      %1265 = vmatpush1.msra.mxu0 0.0
      %1266 = vmatprep.subr.mxu0 0.0
      %1267 = vmatpush1.msra.mxu0 0.0
      %1268 = vmatprep.subr.mxu0 0.0
      %1269 = vmatpush1.msra.mxu0 0.0
      %1270 = vmatprep.subr.mxu0 0.0
      %1271 = vmatpush1.msra.mxu0 0.0
      %1272 = vmatprep.subr.mxu0 0.0
      %1273 = vmatpush1.msra.mxu0 0.0
      %1274 = vmatprep.subr.mxu0 0.0
      %1275 = vmatpush1.msra.mxu0 0.0
      %1276 = vmatprep.subr.mxu0 0.0
      %1277 = vmatpush1.msra.mxu0 0.0
      %1278 = vmatprep.subr.mxu0 0.0
      %1279 = vmatpush1.msra.mxu0 0.0
      %1280 = vmatprep.subr.mxu0 0.0
      %1281 = vmatpush1.msra.mxu0 0.0
      %1282 = vmatprep.subr.mxu0 0.0
      %1283 = vmatpush1.msra.mxu0 0.0
      %1284 = vmatprep.subr.mxu0 0.0
      %1285 = vmatpush1.msra.mxu0 0.0
      %1286 = vmatprep.subr.mxu0 0.0
      %1287 = vmatpush1.msra.mxu0 0.0
      %1288 = vmatprep.subr.mxu0 0.0
      %1289 = vmatpush1.msra.mxu0 0.0
      %1290 = vmatprep.subr.mxu0 0.0
      %1291 = vmatpush1.msra.mxu0 0.0
      %1292 = vmatprep.subr.mxu0 0.0
      %1293 = vmatpush1.msra.mxu0 0.0
      %1294 = vmatprep.subr.mxu0 0.0
      %1295 = vmatpush1.msra.mxu0 0.0
      %1296 = vmatprep.subr.mxu0 0.0
      %1297 = vmatpush1.msra.mxu0 0.0
      %1298 = vmatprep.subr.mxu0 0.0
      %1299 = vmatpush1.msra.mxu0 0.0
      %1300 = vmatprep.subr.mxu0 0.0
      %1301 = vmatpush1.msra.mxu0 0.0
      %1302 = vmatprep.subr.mxu0 0.0
      %1303 = vmatpush1.msra.mxu0 0.0
      %1304 = vmatprep.subr.mxu0 0.0
      %1305 = vmatpush1.msra.mxu0 0.0
      %1306 = vmatprep.subr.mxu0 0.0
      %1307 = vmatpush1.msra.mxu0 0.0
      %1308 = vmatprep.subr.mxu0 0.0
      %1309 = vmatpush1.msra.mxu0 0.0
      %1310 = vmatprep.subr.mxu0 0.0
      %1311 = vmatpush1.msra.mxu0 0.0
      %1312 = vmatprep.subr.mxu0 0.0
      %1313 = vmatpush1.msra.mxu0 0.0
      %1314 = vmatprep.subr.mxu0 0.0
      %1315 = vmatpush1.msra.mxu0 0.0
      %1316 = vmatprep.subr.mxu0 0.0
      %1317 = vmatpush1.msra.mxu0 0.0
      %1318 = vmatprep.subr.mxu0 0.0
      %1319 = vmatpush1.msra.mxu0 0.0
      %1320 = vmatprep.mubr.f32.mxu0 0.0
      %1321 = vmatmul.mubr.f32.gmra.mrb[0].mxu0 %v1254
      %v1322 = vpop.f32.mrb[0].mxu0
      %v1323 = vadd.f32 0.0, %v1322
      %v1324 = vpop.f32.mrb[0].mxu0
      %v1325 = vadd.f32 0.0, %v1324
      %1326 = vdwg.mxu0
      %v1327 = vadd.f32 %v1217, %v1323
      %v1328 = vadd.f32 %v1218, %v1325
      %v1329 = vld [vmem:[%s2] sm:$0xff]
      %1331 = vset.pattern.permute.xlu0 0
      %1332 = vperm.xlu0 %1331, %v1329
      %v1333 = vpop.permute.xlu0 %1332
      %v1335 = vadd.f32 %v1327, %v1333
      %v1336 = vadd.f32 %v1328, %v1333
      %v1337 = vmax.f32 %v1335, 0.0
      %v1338 = vmax.f32 %v1336, 0.0
      %1339 = vst [vmem:[%s318] sm:$0xff] %v1337
      %1340 = vst [vmem:[%s318 + $0x8] sm:$0xff] %v1338
      %v1341 = vadd.f32 %v1337, %v1338
      %1342 = vadd.xlane.f32.xlu0 %v1341
      %v1343 = vpop.xlane.xlu0 %1342
      %1344 = vst.msk [vmem:[%s322] sm:$0xff] %vm722, %v1343
      %v1345 = vmul.f32 %v1337, %v1337
      %v1346 = vmul.f32 %v1338, %v1338
      %v1347 = vadd.f32 %v1345, %v1346
      %1348 = vadd.xlane.f32.xlu0 %v1347
      %v1349 = vpop.xlane.xlu0 %1348
      %1350 = vst.msk [vmem:[%s326] sm:$0xff] %vm722, %v1349
      %p1351 = scmp.lt.s32.totalorder %s20, 1
      %s1352 = scalar_select %p1351, %s20, 1
      %s1353 = smul.addr %s1352, 2
      %s1354 = smul.addr %s1353, 8
      %s1355 = scalar_lea.vmem %s6, %s1354
      %p1356 = scmp.lt.s32.totalorder %s20, 1
      %s1357 = scalar_select %p1356, %s20, 1
      %s1358 = smul.addr %s1357, 8
      %s1359 = scalar_lea.vmem %s7, %s1358
      %p1360 = scmp.lt.s32.totalorder %s20, 1
      %s1361 = scalar_select %p1360, %s20, 1
      %s1362 = smul.addr %s1361, 8
      %s1363 = scalar_lea.vmem %s8, %s1362
      // Predicated region
      $region45: #{conv_block_forward.4} parent=43 // pred_check
        %p1364 = pneg %p169
      $region46: #{conv_block_forward.4} parent=43 // pred_check_branch
        %1366 = sbr.rel (%p1364) target = $region48
      $region47: #{conv_block_forward.4} parent=43 // pred_region
        _
      $region48: #{conv_block_forward.4} parent=43 // pred_fallthru
        _
      // Predicated region
      $region49: #{conv_block_forward.4} parent=43 // pred_check
        %p1367 = pneg %p195
      $region50: #{conv_block_forward.4} parent=43 // pred_check_branch
        %1369 = sbr.rel (%p1367) target = $region52
      $region51: #{conv_block_forward.4} parent=43 // pred_region
        _
      $region52: #{conv_block_forward.4} parent=43 // pred_fallthru
        _
      // Predicated region
      $region53: #{conv_block_forward.4} parent=43 // pred_check
        %p1370 = pneg %p221
      $region54: #{conv_block_forward.4} parent=43 // pred_check_branch
        %1372 = sbr.rel (%p1370) target = $region56
      $region55: #{conv_block_forward.4} parent=43 // pred_region
        _
      $region56: #{conv_block_forward.4} parent=43 // pred_fallthru
        _
    $region44: #{conv_block_forward.4} parent=5 // pred_fallthru
      _
    %p1373 = scmp.le.s32.totalorder 2, %s15
    // Predicated region
    $region57: #{conv_block_forward.4} parent=5 // pred_check
      %p1374 = pneg %p1373
    $region58: #{conv_block_forward.4} parent=5 // pred_check_branch
      %1376 = sbr.rel (%p1374) target = $region60
    $region59: #{conv_block_forward.4} parent=5 // pred_region
      %s1377 = ssub.s32 %s15, 2
      // Predicated region
      $region61: #{conv_block_forward.4} parent=59 // pred_check
        %p1378 = pneg %p175
      $region62: #{conv_block_forward.4} parent=59 // pred_check_branch
        %1380 = sbr.rel (%p1378) target = $region64
      $region63: #{conv_block_forward.4} parent=59 // pred_region
        %p1381 = scmp.lt.s32.totalorder %s21, 1
        %s1382 = scalar_select %p1381, %s21, 1
        %s1383 = smul.addr %s1382, 2
        %s1384 = smul.addr %s1383, 8
        %s1385 = scalar_lea.vmem %s6, %s1384
      $region64: #{conv_block_forward.4} parent=59 // pred_fallthru
        _
      // Predicated region
      $region65: #{conv_block_forward.4} parent=59 // pred_check
        %p1386 = pneg %p201
      $region66: #{conv_block_forward.4} parent=59 // pred_check_branch
        %1388 = sbr.rel (%p1386) target = $region68
      $region67: #{conv_block_forward.4} parent=59 // pred_region
        %p1389 = scmp.lt.s32.totalorder %s21, 1
        %s1390 = scalar_select %p1389, %s21, 1
        %s1391 = smul.addr %s1390, 8
        %s1392 = scalar_lea.vmem %s7, %s1391
      $region68: #{conv_block_forward.4} parent=59 // pred_fallthru
        _
      // Predicated region
      $region69: #{conv_block_forward.4} parent=59 // pred_check
        %p1393 = pneg %p227
      $region70: #{conv_block_forward.4} parent=59 // pred_check_branch
        %1395 = sbr.rel (%p1393) target = $region72
      $region71: #{conv_block_forward.4} parent=59 // pred_region
        %p1396 = scmp.lt.s32.totalorder %s21, 1
        %s1397 = scalar_select %p1396, %s21, 1
        %s1398 = smul.addr %s1397, 8
        %s1399 = scalar_lea.vmem %s8, %s1398
      $region72: #{conv_block_forward.4} parent=59 // pred_fallthru
        _
    $region60: #{conv_block_forward.4} parent=5 // pred_fallthru
      _
  $region6: #{conv_block_forward.4} parent=0 // loop_footer
    %s19 = sadd.s32 1, %s15
  $region7: #{conv_block_forward.4} parent=0 // loop_footer_branch
    %14 = sbr.rel target = $region3
  $region8: #{conv_block_forward.4} parent=0 // loop_exit
    _

// kernel: conv_block_forward.3
$region0: #{conv_block_forward.3}
  #allocation0 [shape = 'u32[]', space=smem, size = 0x4, offset = 0x4, fixed_abs, tag = 'smem constant byte address 0x4 - core index']
  #allocation1 [shape = 'u32[144,128]{1,0:T(1,128)}', space=vmem, size = 0x12000, scoped, tag = 'internal scratch']
  %s0 = inlined_call_operand.vmem [shape: f32[2,4,256], index: 0, kind: input, shape index: {}]
  %s1 = inlined_call_operand.vmem [shape: f32[9,8,4], index: 1, kind: input, shape index: {}]
  %s2 = inlined_call_operand.vmem [shape: f32[8,1], index: 2, kind: input, shape index: {}]
  %s3 = inlined_call_operand.vmem [shape: f32[4,1], index: 3, kind: input, shape index: {}]
  %s4 = inlined_call_operand.vmem [shape: f32[4,1], index: 4, kind: input, shape index: {}]
  %s5 = inlined_call_operand.vmem [shape: f32[9,256], index: 5, kind: input, shape index: {}]
  %s6 = inlined_call_operand.vmem [shape: f32[2,8,256], index: 6, kind: output, shape index: {0}]
  %s7 = inlined_call_operand.vmem [shape: f32[2,8,1], index: 7, kind: output, shape index: {1}]
  %s8 = inlined_call_operand.vmem [shape: f32[2,8,1], index: 8, kind: output, shape index: {2}]
  %9 = xla_tuple %s6, %s7, %s8
  %s10 = sld [smem:[#allocation0]]
  $region73: #{conv_block_forward.3} parent=0
    _
  %s12 = ssub.s32 1, %s10
  %s13 = scalar_select 0, %s12, %s10
  loop: start=0, step=1, limit=4
  $region2: #{conv_block_forward.3} parent=0 // loop_pre_header
    _
  $region3: #{conv_block_forward.3} parent=0 // loop_header
    %s15 = sphi 0, %s19
    %p16 = scmp.ge.s32.totalorder %s15, 4
    %s25 = sphi 0, %s27
    %s28 = sphi 0, %s25
    %s29 = sphi 0, %s28
    %s45 = sphi 0, %s29
    %s49 = sphi 0, %s49
    %s51 = sphi 0, %s49
    %s52 = sphi 0, %s51
    %s66 = sphi 0, %s52
    %s70 = sphi 0, %s70
    %s72 = sphi 0, %s70
    %s73 = sphi 0, %s72
    %s87 = sphi 0, %s73
    %s91 = sphi 0, %s91
    %s93 = sphi 0, %s91
    %s94 = sphi 0, %s93
    %s108 = sphi 0, %s94
    %s112 = sphi 0, %s112
    %s114 = sphi 0, %s112
    %s115 = sphi 0, %s114
    %s129 = sphi 0, %s115
    %s133 = sphi 0, %s133
    %s135 = sphi 0, %s133
    %s136 = sphi 0, %s135
    %s150 = sphi 0, %s136
    %s156 = sphi 0, %s158
    %s159 = sphi 0, %s156
    %s160 = sphi 0, %s159
    %s176 = sphi 0, %s160
    %s182 = sphi 0, %s184
    %s185 = sphi 0, %s182
    %s186 = sphi 0, %s185
    %s202 = sphi 0, %s186
    %s208 = sphi 0, %s210
    %s211 = sphi 0, %s208
    %s212 = sphi 0, %s211
    %s228 = sphi 0, %s212
  $region4: #{conv_block_forward.3} parent=0 // loop_header_branch
    %18 = sbr.rel (%p16) target = $region8
  $region5: #{conv_block_forward.3} parent=0 // loop_body
    %s20 = ssub.s32 %s15, 1
    %s21 = ssub.s32 %s15, 2
    %s22 = sadd.s32 %s15, 1
    %s23 = ssub.s32 %s15, %s22
    %p24 = scmp.eq.s32.totalorder %s23, 0
    %s26 = sadd.s32 %s25, 1
    %s27 = scalar_select %p24, %s25, %s26
    %p30 = pneg %p24
    %p31 = scmp.eq.s32.totalorder %s15, 1
    %p32 = por %p30, %p31
    %p33 = scmp.ne.s32.totalorder %s25, %s28
    %p34 = scmp.eq.s32.totalorder %s15, 0
    %p35 = por %p33, %p34
    %p36 = scmp.ne.s32.totalorder %s25, %s28
    %p37 = scmp.eq.s32.totalorder %s20, 1
    %p38 = por %p36, %p37
    %p39 = scmp.ne.s32.totalorder %s28, %s29
    %p40 = scmp.eq.s32.totalorder %s20, 0
    %p41 = por %p39, %p40
    %p42 = scmp.ne.s32.totalorder %s28, %s29
    %p43 = scmp.eq.s32.totalorder %s21, 1
    %p44 = por %p42, %p43
    %p46 = scmp.ne.s32.totalorder %s29, %s45
    %p47 = scmp.eq.s32.totalorder %s21, 0
    %p48 = por %p46, %p47
    %s50 = sadd.s32 %s49, 1
    %p53 = scmp.eq.s32.totalorder %s15, 1
    %p54 = scmp.ne.s32.totalorder %s49, %s51
    %p55 = scmp.eq.s32.totalorder %s15, 0
    %p56 = por %p54, %p55
    %p57 = scmp.ne.s32.totalorder %s49, %s51
    %p58 = scmp.eq.s32.totalorder %s20, 1
    %p59 = por %p57, %p58
    %p60 = scmp.ne.s32.totalorder %s51, %s52
    %p61 = scmp.eq.s32.totalorder %s20, 0
    %p62 = por %p60, %p61
    %p63 = scmp.ne.s32.totalorder %s51, %s52
    %p64 = scmp.eq.s32.totalorder %s21, 1
    %p65 = por %p63, %p64
    %p67 = scmp.ne.s32.totalorder %s52, %s66
    %p68 = scmp.eq.s32.totalorder %s21, 0
    %p69 = por %p67, %p68
    %s71 = sadd.s32 %s70, 1
    %p74 = scmp.eq.s32.totalorder %s15, 1
    %p75 = scmp.ne.s32.totalorder %s70, %s72
    %p76 = scmp.eq.s32.totalorder %s15, 0
    %p77 = por %p75, %p76
    %p78 = scmp.ne.s32.totalorder %s70, %s72
    %p79 = scmp.eq.s32.totalorder %s20, 1
    %p80 = por %p78, %p79
    %p81 = scmp.ne.s32.totalorder %s72, %s73
    %p82 = scmp.eq.s32.totalorder %s20, 0
    %p83 = por %p81, %p82
    %p84 = scmp.ne.s32.totalorder %s72, %s73
    %p85 = scmp.eq.s32.totalorder %s21, 1
    %p86 = por %p84, %p85
    %p88 = scmp.ne.s32.totalorder %s73, %s87
    %p89 = scmp.eq.s32.totalorder %s21, 0
    %p90 = por %p88, %p89
    %s92 = sadd.s32 %s91, 1
    %p95 = scmp.eq.s32.totalorder %s15, 1
    %p96 = scmp.ne.s32.totalorder %s91, %s93
    %p97 = scmp.eq.s32.totalorder %s15, 0
    %p98 = por %p96, %p97
    %p99 = scmp.ne.s32.totalorder %s91, %s93
    %p100 = scmp.eq.s32.totalorder %s20, 1
    %p101 = por %p99, %p100
    %p102 = scmp.ne.s32.totalorder %s93, %s94
    %p103 = scmp.eq.s32.totalorder %s20, 0
    %p104 = por %p102, %p103
    %p105 = scmp.ne.s32.totalorder %s93, %s94
    %p106 = scmp.eq.s32.totalorder %s21, 1
    %p107 = por %p105, %p106
    %p109 = scmp.ne.s32.totalorder %s94, %s108
    %p110 = scmp.eq.s32.totalorder %s21, 0
    %p111 = por %p109, %p110
    %s113 = sadd.s32 %s112, 1
    %p116 = scmp.eq.s32.totalorder %s15, 1
    %p117 = scmp.ne.s32.totalorder %s112, %s114
    %p118 = scmp.eq.s32.totalorder %s15, 0
    %p119 = por %p117, %p118
    %p120 = scmp.ne.s32.totalorder %s112, %s114
    %p121 = scmp.eq.s32.totalorder %s20, 1
    %p122 = por %p120, %p121
    %p123 = scmp.ne.s32.totalorder %s114, %s115
    %p124 = scmp.eq.s32.totalorder %s20, 0
    %p125 = por %p123, %p124
    %p126 = scmp.ne.s32.totalorder %s114, %s115
    %p127 = scmp.eq.s32.totalorder %s21, 1
    %p128 = por %p126, %p127
    %p130 = scmp.ne.s32.totalorder %s115, %s129
    %p131 = scmp.eq.s32.totalorder %s21, 0
    %p132 = por %p130, %p131
    %s134 = sadd.s32 %s133, 1
    %p137 = scmp.eq.s32.totalorder %s15, 1
    %p138 = scmp.ne.s32.totalorder %s133, %s135
    %p139 = scmp.eq.s32.totalorder %s15, 0
    %p140 = por %p138, %p139
    %p141 = scmp.ne.s32.totalorder %s133, %s135
    %p142 = scmp.eq.s32.totalorder %s20, 1
    %p143 = por %p141, %p142
    %p144 = scmp.ne.s32.totalorder %s135, %s136
    %p145 = scmp.eq.s32.totalorder %s20, 0
    %p146 = por %p144, %p145
    %p147 = scmp.ne.s32.totalorder %s135, %s136
    %p148 = scmp.eq.s32.totalorder %s21, 1
    %p149 = por %p147, %p148
    %p151 = scmp.ne.s32.totalorder %s136, %s150
    %p152 = scmp.eq.s32.totalorder %s21, 0
    %p153 = por %p151, %p152
    %s154 = ssub.s32 %s15, %s22
    %p155 = scmp.eq.s32.totalorder %s154, 0
    %s157 = sadd.s32 %s156, 1
    %s158 = scalar_select %p155, %s156, %s157
    %p161 = pneg %p155
    %p162 = scmp.eq.s32.totalorder %s15, 1
    %p163 = por %p161, %p162
    %p164 = scmp.ne.s32.totalorder %s156, %s159
    %p165 = scmp.eq.s32.totalorder %s15, 0
    %p166 = por %p164, %p165
    %p167 = scmp.ne.s32.totalorder %s156, %s159
    %p168 = scmp.eq.s32.totalorder %s20, 1
    %p169 = por %p167, %p168
    %p170 = scmp.ne.s32.totalorder %s159, %s160
    %p171 = scmp.eq.s32.totalorder %s20, 0
    %p172 = por %p170, %p171
    %p173 = scmp.ne.s32.totalorder %s159, %s160
    %p174 = scmp.eq.s32.totalorder %s21, 1
    %p175 = por %p173, %p174
    %p177 = scmp.ne.s32.totalorder %s160, %s176
    %p178 = scmp.eq.s32.totalorder %s21, 0
    %p179 = por %p177, %p178
    %s180 = ssub.s32 %s15, %s22
    %p181 = scmp.eq.s32.totalorder %s180, 0
    %s183 = sadd.s32 %s182, 1
    %s184 = scalar_select %p181, %s182, %s183
    %p187 = pneg %p181
    %p188 = scmp.eq.s32.totalorder %s15, 1
    %p189 = por %p187, %p188
    %p190 = scmp.ne.s32.totalorder %s182, %s185
    %p191 = scmp.eq.s32.totalorder %s15, 0
    %p192 = por %p190, %p191
    %p193 = scmp.ne.s32.totalorder %s182, %s185
    %p194 = scmp.eq.s32.totalorder %s20, 1
    %p195 = por %p193, %p194
    %p196 = scmp.ne.s32.totalorder %s185, %s186
    %p197 = scmp.eq.s32.totalorder %s20, 0
    %p198 = por %p196, %p197
    %p199 = scmp.ne.s32.totalorder %s185, %s186
    %p200 = scmp.eq.s32.totalorder %s21, 1
    %p201 = por %p199, %p200
    %p203 = scmp.ne.s32.totalorder %s186, %s202
    %p204 = scmp.eq.s32.totalorder %s21, 0
    %p205 = por %p203, %p204
    %s206 = ssub.s32 %s15, %s22
    %p207 = scmp.eq.s32.totalorder %s206, 0
    %s209 = sadd.s32 %s208, 1
    %s210 = scalar_select %p207, %s208, %s209
    %p213 = pneg %p207
    %p214 = scmp.eq.s32.totalorder %s15, 1
    %p215 = por %p213, %p214
    %p216 = scmp.ne.s32.totalorder %s208, %s211
    %p217 = scmp.eq.s32.totalorder %s15, 0
    %p218 = por %p216, %p217
    %p219 = scmp.ne.s32.totalorder %s208, %s211
    %p220 = scmp.eq.s32.totalorder %s20, 1
    %p221 = por %p219, %p220
    %p222 = scmp.ne.s32.totalorder %s211, %s212
    %p223 = scmp.eq.s32.totalorder %s20, 0
    %p224 = por %p222, %p223
    %p225 = scmp.ne.s32.totalorder %s211, %s212
    %p226 = scmp.eq.s32.totalorder %s21, 1
    %p227 = por %p225, %p226
    %p229 = scmp.ne.s32.totalorder %s212, %s228
    %p230 = scmp.eq.s32.totalorder %s21, 0
    %p231 = por %p229, %p230
    %p232 = scmp.le.s32.totalorder 1, %s15
    %p233 = scmp.lt.s32.totalorder %s15, 3
    %p234 = pnand %p232, %p233
    %p235 = pneg %p234
    // Predicated region
    $region9: #{conv_block_forward.3} parent=5 // pred_check
      _
    $region10: #{conv_block_forward.3} parent=5 // pred_check_branch
      %237 = sbr.rel (%p234) target = $region12
    $region11: #{conv_block_forward.3} parent=5 // pred_region
      %s238 = ssub.s32 %s15, 1
      // Predicated region
      $region13: #{conv_block_forward.3} parent=11 // pred_check
        %p239 = pneg %p62
      $region14: #{conv_block_forward.3} parent=11 // pred_check_branch
        %241 = sbr.rel (%p239) target = $region16
      $region15: #{conv_block_forward.3} parent=11 // pred_region
        _
      $region16: #{conv_block_forward.3} parent=11 // pred_fallthru
        _
      // Predicated region
      $region17: #{conv_block_forward.3} parent=11 // pred_check
        %p242 = pneg %p83
      $region18: #{conv_block_forward.3} parent=11 // pred_check_branch
        %244 = sbr.rel (%p242) target = $region20
      $region19: #{conv_block_forward.3} parent=11 // pred_region
        _
      $region20: #{conv_block_forward.3} parent=11 // pred_fallthru
        _
      // Predicated region
      $region21: #{conv_block_forward.3} parent=11 // pred_check
        %p245 = pneg %p104
      $region22: #{conv_block_forward.3} parent=11 // pred_check_branch
        %247 = sbr.rel (%p245) target = $region24
      $region23: #{conv_block_forward.3} parent=11 // pred_region
        _
      $region24: #{conv_block_forward.3} parent=11 // pred_fallthru
        _
      // Predicated region
      $region25: #{conv_block_forward.3} parent=11 // pred_check
        %p248 = pneg %p125
      $region26: #{conv_block_forward.3} parent=11 // pred_check_branch
        %250 = sbr.rel (%p248) target = $region28
      $region27: #{conv_block_forward.3} parent=11 // pred_region
        _
      $region28: #{conv_block_forward.3} parent=11 // pred_fallthru
        _
      // Predicated region
      $region29: #{conv_block_forward.3} parent=11 // pred_check
        %p251 = pneg %p146
      $region30: #{conv_block_forward.3} parent=11 // pred_check_branch
        %253 = sbr.rel (%p251) target = $region32
      $region31: #{conv_block_forward.3} parent=11 // pred_region
        _
      $region32: #{conv_block_forward.3} parent=11 // pred_fallthru
        _
    $region12: #{conv_block_forward.3} parent=5 // pred_fallthru
      _
    %p254 = scmp.lt.s32.totalorder %s15, 2
    // Predicated region
    $region33: #{conv_block_forward.3} parent=5 // pred_check
      %p255 = pneg %p254
    $region34: #{conv_block_forward.3} parent=5 // pred_check_branch
      %257 = sbr.rel (%p255) target = $region36
    $region35: #{conv_block_forward.3} parent=5 // pred_region
      // Predicated region
      $region37: #{conv_block_forward.3} parent=35 // pred_check
        %p258 = pneg %p35
      $region38: #{conv_block_forward.3} parent=35 // pred_check_branch
        %260 = sbr.rel (%p258) target = $region40
      $region39: #{conv_block_forward.3} parent=35 // pred_region
        %p261 = scmp.lt.s32.totalorder %s15, 1
        %s262 = scalar_select %p261, %s15, 1
        %s263 = smul.addr %s262, 2
        %s264 = smul.addr %s263, 4
        %s265 = scalar_lea.vmem %s0, %s264
      $region40: #{conv_block_forward.3} parent=35 // pred_fallthru
        _
    $region36: #{conv_block_forward.3} parent=5 // pred_fallthru
      _
    %p266 = scmp.le.s32.totalorder 1, %s15
    %p267 = scmp.lt.s32.totalorder %s15, 3
    %p268 = pnand %p266, %p267
    %p269 = pneg %p268
    // Predicated region
    $region41: #{conv_block_forward.3} parent=5 // pred_check
      _
    $region42: #{conv_block_forward.3} parent=5 // pred_check_branch
      %271 = sbr.rel (%p268) target = $region44
    $region43: #{conv_block_forward.3} parent=5 // pred_region
      %s272 = ssub.s32 %s15, 1
      %p273 = scmp.lt.s32.totalorder %s20, 1
      %s274 = scalar_select %p273, %s20, 1
      %s275 = smul.addr %s274, 2
      %s276 = smul.addr %s275, 4
      %s277 = scalar_lea.vmem %s0, %s276
      %p278 = pneg %p41
      %p279 = pneg %p38
      %p280 = pneg %p62
      %p281 = pneg %p59
      %p282 = pneg %p83
      %p283 = pneg %p80
      %p284 = pneg %p104
      %p285 = pneg %p101
      %p286 = pneg %p125
      %p287 = pneg %p122
      %p288 = pneg %p146
      %p289 = pneg %p143
      %p290 = pneg %p172
      %p291 = pneg %p169
      %p292 = scmp.lt.s32.totalorder %s20, 1
      %s293 = scalar_select %p292, %s20, 1
      %s294 = smul.addr %s293, 2
      %s295 = smul.addr %s294, 8
      %s296 = scalar_lea.vmem %s6, %s295
      %p297 = pneg %p198
      %p298 = pneg %p195
      %p299 = scmp.lt.s32.totalorder %s20, 1
      %s300 = scalar_select %p299, %s20, 1
      %s301 = smul.addr %s300, 8
      %s302 = scalar_lea.vmem %s7, %s301
      %p303 = pneg %p224
      %p304 = pneg %p221
      %p305 = scmp.lt.s32.totalorder %s20, 1
      %s306 = scalar_select %p305, %s20, 1
      %s307 = smul.addr %s306, 8
      %s308 = scalar_lea.vmem %s8, %s307
      %p309 = scmp.lt.s32.totalorder %s20, 1
      %s310 = scalar_select %p309, %s20, 1
      %s311 = smul.addr %s310, 2
      %s312 = smul.addr %s311, 4
      %s313 = scalar_lea.vmem %s0, %s312
      %p314 = scmp.lt.s32.totalorder %s20, 1
      %s315 = scalar_select %p314, %s20, 1
      %s316 = smul.addr %s315, 2
      %s317 = smul.addr %s316, 8
      %s318 = scalar_lea.vmem %s6, %s317
      %p319 = scmp.lt.s32.totalorder %s20, 1
      %s320 = scalar_select %p319, %s20, 1
      %s321 = smul.addr %s320, 8
      %s322 = scalar_lea.vmem %s7, %s321
      %p323 = scmp.lt.s32.totalorder %s20, 1
      %s324 = scalar_select %p323, %s20, 1
      %s325 = smul.addr %s324, 8
      %s326 = scalar_lea.vmem %s8, %s325
      %v327 = vld [vmem:[%s313] sm:$0xff]
      %v328 = vld [vmem:[%s3] sm:$0xf]
      %330 = vset.pattern.permute.xlu0 0
      %331 = vperm.xlu0 %330, %v328
      %v332 = vpop.permute.xlu0 %331
      %v334 = vunpack.c.l.s4 839922192
      %v335 = vunpack.c.0.s8 %v334
      %v336 = vlaneseq
      %v337 = vshrl.u32 %v336, 7
      %v338 = vsub.s32 %v335, %v337
      %v339 = vrot.slane %v332, %v338
      %v341 = vmul.f32 %v327, %v339
      %v342 = vld [vmem:[%s4] sm:$0xf]
      %344 = vset.pattern.permute.xlu0 0
      %345 = vperm.xlu0 %344, %v342
      %v346 = vpop.permute.xlu0 %345
      %v348 = vunpack.c.l.s4 839922192
      %v349 = vunpack.c.0.s8 %v348
      %v350 = vlaneseq
      %v351 = vshrl.u32 %v350, 7
      %v352 = vsub.s32 %v349, %v351
      %v353 = vrot.slane %v346, %v352
      %v355 = vadd.f32 %v341, %v353
      %v357 = vcombine.high %v355, %v355
      %v359 = vld [vmem:[%s1] sm:$0xff]
      %v360 = vld [vmem:[%s1 + $0x8] sm:$0xff]
      %v361 = vld [vmem:[%s1 + $0x10] sm:$0xff]
      %v362 = vld [vmem:[%s1 + $0x18] sm:$0xff]
      %v363 = vld [vmem:[%s1 + $0x20] sm:$0xff]
      %v364 = vld [vmem:[%s1 + $0x28] sm:$0xff]
      %v365 = vld [vmem:[%s1 + $0x30] sm:$0xff]
      %v366 = vld [vmem:[%s1 + $0x38] sm:$0xff]
      %v367 = vld [vmem:[%s1 + $0x40] sm:$0xff]
      %v368 = vld [vmem:[%s5] sm:$0xff]
      %v369 = vld [vmem:[%s5 + $0x8] sm:$0xff]
      %v370 = vld [vmem:[%s5 + $0x10] sm:$0x1]
      %v371 = vld [vmem:[%s5 + $0x18] sm:$0x1]
      %v372 = vlaneseq
      %v373 = vshrl.u32 %v372, 7
      %v374 = vsub.s32 0, %v373
      %v375 = vrot.slane %v368, %v374
      %v376 = vlaneseq
      %v377 = vshrl.u32 %v376, 7
      %v378 = vsub.s32 0, %v377
      %v379 = vrot.slane %v369, %v378
      %382 = vrot.lane.b32.xlu0 %v375, 111
      %v383 = vpop.permute.xlu0 %382
      %384 = vrot.lane.b32.xlu0 %v379, 111
      %v385 = vpop.permute.xlu0 %384
      %vm386 = vcmask 908288
      %v387 = vsel %vm386, %v383, %v385
      %v391 = vmul.f32 %v383, 0.0
      %v392 = vmul.f32 %v355, %v387
      %v393 = vmul.f32 %v357, %v385
      %v394 = vlaneseq
      %v395 = vshrl.u32 %v394, 7
      %v396 = vsub.s32 1, %v395
      %v397 = vrot.slane %v368, %v396
      %v398 = vlaneseq
      %v399 = vshrl.u32 %v398, 7
      %v400 = vsub.s32 1, %v399
      %v401 = vrot.slane %v369, %v400
      %404 = vrot.lane.b32.xlu0 %v397, 112
      %v405 = vpop.permute.xlu0 %404
      %406 = vrot.lane.b32.xlu0 %v401, 112
      %v407 = vpop.permute.xlu0 %406
      %vm408 = vcmask 916480
      %v409 = vsel %vm408, %v405, %v407
      %v413 = vmul.f32 %v405, 0.0
      %v414 = vmul.f32 %v355, %v409
      %v415 = vmul.f32 %v357, %v407
      %419 = vrot.lane.b32.xlu0 %v413, 16
      %v420 = vpop.permute.xlu0 %419
      %421 = vrot.lane.b32.xlu0 %v414, 16
      %v422 = vpop.permute.xlu0 %421
      %423 = vrot.lane.b32.xlu0 %v415, 16
      %v424 = vpop.permute.xlu0 %423
      %vm425 = vcmask 130048
      %v426 = vsel %vm425, %v420, %v422
      %v427 = vsel %vm425, %v422, %v424
      %vm428 = vcmask 31744
      %v430 = vsel %vm428, %v360, 0
      %vm432 = vcmask 1043456
      %v433 = vsel %vm432, %v426, 0
      %v435 = vsel %vm432, %v427, 0
      %437 = vmatprep.subr.mxu0 %v435
      %438 = vmatpush1.msra.mxu0 %v433
      %439 = vmatprep.subr.mxu0 0.0
      %440 = vmatpush1.msra.mxu0 0.0
      %441 = vmatprep.subr.mxu0 0.0
      %442 = vmatpush1.msra.mxu0 0.0
      %443 = vmatprep.subr.mxu0 0.0
      %444 = vmatpush1.msra.mxu0 0.0
      %445 = vmatprep.subr.mxu0 0.0
      %446 = vmatpush1.msra.mxu0 0.0
      %447 = vmatprep.subr.mxu0 0.0
      %448 = vmatpush1.msra.mxu0 0.0
      %449 = vmatprep.subr.mxu0 0.0
      %450 = vmatpush1.msra.mxu0 0.0
      %451 = vmatprep.subr.mxu0 0.0
      %452 = vmatpush1.msra.mxu0 0.0
      %453 = vmatprep.subr.mxu0 0.0
      %454 = vmatpush1.msra.mxu0 0.0
      %455 = vmatprep.subr.mxu0 0.0
      %456 = vmatpush1.msra.mxu0 0.0
      %457 = vmatprep.subr.mxu0 0.0
      %458 = vmatpush1.msra.mxu0 0.0
      %459 = vmatprep.subr.mxu0 0.0
      %460 = vmatpush1.msra.mxu0 0.0
      %461 = vmatprep.subr.mxu0 0.0
      %462 = vmatpush1.msra.mxu0 0.0
      %463 = vmatprep.subr.mxu0 0.0
      %464 = vmatpush1.msra.mxu0 0.0
      %465 = vmatprep.subr.mxu0 0.0
      %466 = vmatpush1.msra.mxu0 0.0
      %467 = vmatprep.subr.mxu0 0.0
      %468 = vmatpush1.msra.mxu0 0.0
      %469 = vmatprep.subr.mxu0 0.0
      %470 = vmatpush1.msra.mxu0 0.0
      %471 = vmatprep.subr.mxu0 0.0
      %472 = vmatpush1.msra.mxu0 0.0
      %473 = vmatprep.subr.mxu0 0.0
      %474 = vmatpush1.msra.mxu0 0.0
      %475 = vmatprep.subr.mxu0 0.0
      %476 = vmatpush1.msra.mxu0 0.0
      %477 = vmatprep.subr.mxu0 0.0
      %478 = vmatpush1.msra.mxu0 0.0
      %479 = vmatprep.subr.mxu0 0.0
      %480 = vmatpush1.msra.mxu0 0.0
      %481 = vmatprep.subr.mxu0 0.0
      %482 = vmatpush1.msra.mxu0 0.0
      %483 = vmatprep.subr.mxu0 0.0
      %484 = vmatpush1.msra.mxu0 0.0
      %485 = vmatprep.subr.mxu0 0.0
      %486 = vmatpush1.msra.mxu0 0.0
      %487 = vmatprep.subr.mxu0 0.0
      %488 = vmatpush1.msra.mxu0 0.0
      %489 = vmatprep.subr.mxu0 0.0
      %490 = vmatpush1.msra.mxu0 0.0
      %491 = vmatprep.subr.mxu0 0.0
      %492 = vmatpush1.msra.mxu0 0.0
      %493 = vmatprep.subr.mxu0 0.0
      %494 = vmatpush1.msra.mxu0 0.0
      %495 = vmatprep.subr.mxu0 0.0
      %496 = vmatpush1.msra.mxu0 0.0
      %497 = vmatprep.subr.mxu0 0.0
      %498 = vmatpush1.msra.mxu0 0.0
      %499 = vmatprep.subr.mxu0 0.0
      %500 = vmatpush1.msra.mxu0 0.0
      %501 = vmatprep.mubr.f32.mxu0 0.0
      %502 = vmatmul.mubr.f32.gmra.mrb[0].mxu0 %v430
      %v503 = vpop.f32.mrb[0].mxu0
      %v504 = vadd.f32 0.0, %v503
      %v505 = vpop.f32.mrb[0].mxu0
      %v506 = vadd.f32 0.0, %v505
      %507 = vdwg.mxu0
      %511 = vrot.lane.b32.xlu0 %v391, 17
      %v512 = vpop.permute.xlu0 %511
      %513 = vrot.lane.b32.xlu0 %v392, 17
      %v514 = vpop.permute.xlu0 %513
      %515 = vrot.lane.b32.xlu0 %v393, 17
      %v516 = vpop.permute.xlu0 %515
      %vm517 = vcmask 138240
      %v518 = vsel %vm517, %v512, %v514
      %v519 = vsel %vm517, %v514, %v516
      %v521 = vsel %vm428, %v359, 0
      %v523 = vsel %vm432, %v518, 0
      %v525 = vsel %vm432, %v519, 0
      %527 = vmatprep.subr.mxu0 %v525
      %528 = vmatpush1.msra.mxu0 %v523
      %529 = vmatprep.subr.mxu0 0.0
      %530 = vmatpush1.msra.mxu0 0.0
      %531 = vmatprep.subr.mxu0 0.0
      %532 = vmatpush1.msra.mxu0 0.0
      %533 = vmatprep.subr.mxu0 0.0
      %534 = vmatpush1.msra.mxu0 0.0
      %535 = vmatprep.subr.mxu0 0.0
      %536 = vmatpush1.msra.mxu0 0.0
      %537 = vmatprep.subr.mxu0 0.0
      %538 = vmatpush1.msra.mxu0 0.0
      %539 = vmatprep.subr.mxu0 0.0
      %540 = vmatpush1.msra.mxu0 0.0
      %541 = vmatprep.subr.mxu0 0.0
      %542 = vmatpush1.msra.mxu0 0.0
      %543 = vmatprep.subr.mxu0 0.0
      %544 = vmatpush1.msra.mxu0 0.0
      %545 = vmatprep.subr.mxu0 0.0
      %546 = vmatpush1.msra.mxu0 0.0
      %547 = vmatprep.subr.mxu0 0.0
      %548 = vmatpush1.msra.mxu0 0.0
      %549 = vmatprep.subr.mxu0 0.0
      %550 = vmatpush1.msra.mxu0 0.0
      %551 = vmatprep.subr.mxu0 0.0
      %552 = vmatpush1.msra.mxu0 0.0
      %553 = vmatprep.subr.mxu0 0.0
      %554 = vmatpush1.msra.mxu0 0.0
      %555 = vmatprep.subr.mxu0 0.0
      %556 = vmatpush1.msra.mxu0 0.0
      %557 = vmatprep.subr.mxu0 0.0
      %558 = vmatpush1.msra.mxu0 0.0
      %559 = vmatprep.subr.mxu0 0.0
      %560 = vmatpush1.msra.mxu0 0.0
      %561 = vmatprep.subr.mxu0 0.0
      %562 = vmatpush1.msra.mxu0 0.0
      %563 = vmatprep.subr.mxu0 0.0
      %564 = vmatpush1.msra.mxu0 0.0
      %565 = vmatprep.subr.mxu0 0.0
      %566 = vmatpush1.msra.mxu0 0.0
      %567 = vmatprep.subr.mxu0 0.0
      %568 = vmatpush1.msra.mxu0 0.0
      %569 = vmatprep.subr.mxu0 0.0
      %570 = vmatpush1.msra.mxu0 0.0
      %571 = vmatprep.subr.mxu0 0.0
      %572 = vmatpush1.msra.mxu0 0.0
      %573 = vmatprep.subr.mxu0 0.0
      %574 = vmatpush1.msra.mxu0 0.0
      %575 = vmatprep.subr.mxu0 0.0
      %576 = vmatpush1.msra.mxu0 0.0
      %577 = vmatprep.subr.mxu0 0.0
      %578 = vmatpush1.msra.mxu0 0.0
      %579 = vmatprep.subr.mxu0 0.0
      %580 = vmatpush1.msra.mxu0 0.0
      %581 = vmatprep.subr.mxu0 0.0
      %582 = vmatpush1.msra.mxu0 0.0
      %583 = vmatprep.subr.mxu0 0.0
      %584 = vmatpush1.msra.mxu0 0.0
      %585 = vmatprep.subr.mxu0 0.0
      %586 = vmatpush1.msra.mxu0 0.0
      %587 = vmatprep.subr.mxu0 0.0
      %588 = vmatpush1.msra.mxu0 0.0
      %589 = vmatprep.subr.mxu0 0.0
      %590 = vmatpush1.msra.mxu0 0.0
      %591 = vmatprep.mubr.f32.mxu0 0.0
      %592 = vmatmul.mubr.f32.gmra.mrb[0].mxu0 %v521
      %v593 = vpop.f32.mrb[0].mxu0
      %v594 = vadd.f32 %v504, %v593
      %v595 = vpop.f32.mrb[0].mxu0
      %v596 = vadd.f32 %v506, %v595
      %597 = vdwg.mxu0
      %v598 = vlaneseq
      %v599 = vshrl.u32 %v598, 7
      %v600 = vsub.s32 2, %v599
      %v601 = vrot.slane %v368, %v600
      %v602 = vlaneseq
      %v603 = vshrl.u32 %v602, 7
      %v604 = vsub.s32 2, %v603
      %v605 = vrot.slane %v369, %v604
      %608 = vrot.lane.b32.xlu0 %v601, 113
      %v609 = vpop.permute.xlu0 %608
      %610 = vrot.lane.b32.xlu0 %v605, 113
      %v611 = vpop.permute.xlu0 %610
      %vm612 = vcmask 924672
      %v613 = vsel %vm612, %v609, %v611
      %v617 = vmul.f32 %v609, 0.0
      %v618 = vmul.f32 %v355, %v613
      %v619 = vmul.f32 %v357, %v611
      %623 = vrot.lane.b32.xlu0 %v617, 15
      %v624 = vpop.permute.xlu0 %623
      %625 = vrot.lane.b32.xlu0 %v618, 15
      %v626 = vpop.permute.xlu0 %625
      %627 = vrot.lane.b32.xlu0 %v619, 15
      %v628 = vpop.permute.xlu0 %627
      %vm629 = vcmask 121856
      %v630 = vsel %vm629, %v624, %v626
      %v631 = vsel %vm629, %v626, %v628
      %v633 = vsel %vm428, %v361, 0
      %v635 = vsel %vm432, %v630, 0
      %v637 = vsel %vm432, %v631, 0
      %639 = vmatprep.subr.mxu0 %v637
      %640 = vmatpush1.msra.mxu0 %v635
      %641 = vmatprep.subr.mxu0 0.0
      %642 = vmatpush1.msra.mxu0 0.0
      %643 = vmatprep.subr.mxu0 0.0
      %644 = vmatpush1.msra.mxu0 0.0
      %645 = vmatprep.subr.mxu0 0.0
      %646 = vmatpush1.msra.mxu0 0.0
      %647 = vmatprep.subr.mxu0 0.0
      %648 = vmatpush1.msra.mxu0 0.0
      %649 = vmatprep.subr.mxu0 0.0
      %650 = vmatpush1.msra.mxu0 0.0
      %651 = vmatprep.subr.mxu0 0.0
      %652 = vmatpush1.msra.mxu0 0.0
      %653 = vmatprep.subr.mxu0 0.0
      %654 = vmatpush1.msra.mxu0 0.0
      %655 = vmatprep.subr.mxu0 0.0
      %656 = vmatpush1.msra.mxu0 0.0
      %657 = vmatprep.subr.mxu0 0.0
      %658 = vmatpush1.msra.mxu0 0.0
      %659 = vmatprep.subr.mxu0 0.0
      %660 = vmatpush1.msra.mxu0 0.0
      %661 = vmatprep.subr.mxu0 0.0
      %662 = vmatpush1.msra.mxu0 0.0
      %663 = vmatprep.subr.mxu0 0.0
      %664 = vmatpush1.msra.mxu0 0.0
      %665 = vmatprep.subr.mxu0 0.0
      %666 = vmatpush1.msra.mxu0 0.0
      %667 = vmatprep.subr.mxu0 0.0
      %668 = vmatpush1.msra.mxu0 0.0
      %669 = vmatprep.subr.mxu0 0.0
      %670 = vmatpush1.msra.mxu0 0.0
      %671 = vmatprep.subr.mxu0 0.0
      %672 = vmatpush1.msra.mxu0 0.0
      %673 = vmatprep.subr.mxu0 0.0
      %674 = vmatpush1.msra.mxu0 0.0
      %675 = vmatprep.subr.mxu0 0.0
      %676 = vmatpush1.msra.mxu0 0.0
      %677 = vmatprep.subr.mxu0 0.0
      %678 = vmatpush1.msra.mxu0 0.0
      %679 = vmatprep.subr.mxu0 0.0
      %680 = vmatpush1.msra.mxu0 0.0
      %681 = vmatprep.subr.mxu0 0.0
      %682 = vmatpush1.msra.mxu0 0.0
      %683 = vmatprep.subr.mxu0 0.0
      %684 = vmatpush1.msra.mxu0 0.0
      %685 = vmatprep.subr.mxu0 0.0
      %686 = vmatpush1.msra.mxu0 0.0
      %687 = vmatprep.subr.mxu0 0.0
      %688 = vmatpush1.msra.mxu0 0.0
      %689 = vmatprep.subr.mxu0 0.0
      %690 = vmatpush1.msra.mxu0 0.0
      %691 = vmatprep.subr.mxu0 0.0
      %692 = vmatpush1.msra.mxu0 0.0
      %693 = vmatprep.subr.mxu0 0.0
      %694 = vmatpush1.msra.mxu0 0.0
      %695 = vmatprep.subr.mxu0 0.0
      %696 = vmatpush1.msra.mxu0 0.0
      %697 = vmatprep.subr.mxu0 0.0
      %698 = vmatpush1.msra.mxu0 0.0
      %699 = vmatprep.subr.mxu0 0.0
      %700 = vmatpush1.msra.mxu0 0.0
      %701 = vmatprep.subr.mxu0 0.0
      %702 = vmatpush1.msra.mxu0 0.0
      %703 = vmatprep.mubr.f32.mxu0 0.0
      %704 = vmatmul.mubr.f32.gmra.mrb[0].mxu0 %v633
      %v705 = vpop.f32.mrb[0].mxu0
      %v706 = vadd.f32 0.0, %v705
      %v707 = vpop.f32.mrb[0].mxu0
      %v708 = vadd.f32 0.0, %v707
      %709 = vdwg.mxu0
      %v710 = vadd.f32 %v594, %v706
      %v711 = vadd.f32 %v596, %v708
      %v712 = vlaneseq
      %v713 = vshrl.u32 %v712, 7
      %v714 = vsub.s32 3, %v713
      %v715 = vrot.slane %v368, %v714
      %v716 = vlaneseq
      %v717 = vshrl.u32 %v716, 7
      %v718 = vsub.s32 3, %v717
      %v719 = vrot.slane %v369, %v718
      %722 = vrot.lane.b32.xlu0 %v715, 127
      %v723 = vpop.permute.xlu0 %722
      %724 = vrot.lane.b32.xlu0 %v719, 127
      %v725 = vpop.permute.xlu0 %724
      %vm726 = vcmask 1039360
      %v727 = vsel %vm726, %v723, %v725
      %v731 = vmul.f32 %v723, 0.0
      %v732 = vmul.f32 %v355, %v727
      %v733 = vmul.f32 %v357, %v725
      %737 = vrot.lane.b32.xlu0 %v731, 1
      %v738 = vpop.permute.xlu0 %737
      %739 = vrot.lane.b32.xlu0 %v732, 1
      %v740 = vpop.permute.xlu0 %739
      %741 = vrot.lane.b32.xlu0 %v733, 1
      %v742 = vpop.permute.xlu0 %741
      %vm743 = vcmask 7168
      %v744 = vsel %vm743, %v738, %v740
      %v745 = vsel %vm743, %v740, %v742
      %v747 = vsel %vm428, %v362, 0
      %v749 = vsel %vm432, %v744, 0
      %v751 = vsel %vm432, %v745, 0
      %753 = vmatprep.subr.mxu0 %v751
      %754 = vmatpush1.msra.mxu0 %v749
      %755 = vmatprep.subr.mxu0 0.0
      %756 = vmatpush1.msra.mxu0 0.0
      %757 = vmatprep.subr.mxu0 0.0
      %758 = vmatpush1.msra.mxu0 0.0
      %759 = vmatprep.subr.mxu0 0.0
      %760 = vmatpush1.msra.mxu0 0.0
      %761 = vmatprep.subr.mxu0 0.0
      %762 = vmatpush1.msra.mxu0 0.0
      %763 = vmatprep.subr.mxu0 0.0
      %764 = vmatpush1.msra.mxu0 0.0
      %765 = vmatprep.subr.mxu0 0.0
      %766 = vmatpush1.msra.mxu0 0.0
      %767 = vmatprep.subr.mxu0 0.0
      %768 = vmatpush1.msra.mxu0 0.0
      %769 = vmatprep.subr.mxu0 0.0
      %770 = vmatpush1.msra.mxu0 0.0
      %771 = vmatprep.subr.mxu0 0.0
      %772 = vmatpush1.msra.mxu0 0.0
      %773 = vmatprep.subr.mxu0 0.0
      %774 = vmatpush1.msra.mxu0 0.0
      %775 = vmatprep.subr.mxu0 0.0
      %776 = vmatpush1.msra.mxu0 0.0
      %777 = vmatprep.subr.mxu0 0.0
      %778 = vmatpush1.msra.mxu0 0.0
      %779 = vmatprep.subr.mxu0 0.0
      %780 = vmatpush1.msra.mxu0 0.0
      %781 = vmatprep.subr.mxu0 0.0
      %782 = vmatpush1.msra.mxu0 0.0
      %783 = vmatprep.subr.mxu0 0.0
      %784 = vmatpush1.msra.mxu0 0.0
      %785 = vmatprep.subr.mxu0 0.0
      %786 = vmatpush1.msra.mxu0 0.0
      %787 = vmatprep.subr.mxu0 0.0
      %788 = vmatpush1.msra.mxu0 0.0
      %789 = vmatprep.subr.mxu0 0.0
      %790 = vmatpush1.msra.mxu0 0.0
      %791 = vmatprep.subr.mxu0 0.0
      %792 = vmatpush1.msra.mxu0 0.0
      %793 = vmatprep.subr.mxu0 0.0
      %794 = vmatpush1.msra.mxu0 0.0
      %795 = vmatprep.subr.mxu0 0.0
      %796 = vmatpush1.msra.mxu0 0.0
      %797 = vmatprep.subr.mxu0 0.0
      %798 = vmatpush1.msra.mxu0 0.0
      %799 = vmatprep.subr.mxu0 0.0
      %800 = vmatpush1.msra.mxu0 0.0
      %801 = vmatprep.subr.mxu0 0.0
      %802 = vmatpush1.msra.mxu0 0.0
      %803 = vmatprep.subr.mxu0 0.0
      %804 = vmatpush1.msra.mxu0 0.0
      %805 = vmatprep.subr.mxu0 0.0
      %806 = vmatpush1.msra.mxu0 0.0
      %807 = vmatprep.subr.mxu0 0.0
      %808 = vmatpush1.msra.mxu0 0.0
      %809 = vmatprep.subr.mxu0 0.0
      %810 = vmatpush1.msra.mxu0 0.0
      %811 = vmatprep.subr.mxu0 0.0
      %812 = vmatpush1.msra.mxu0 0.0
      %813 = vmatprep.subr.mxu0 0.0
      %814 = vmatpush1.msra.mxu0 0.0
      %815 = vmatprep.subr.mxu0 0.0
      %816 = vmatpush1.msra.mxu0 0.0
      %817 = vmatprep.mubr.f32.mxu0 0.0
      %818 = vmatmul.mubr.f32.gmra.mrb[0].mxu0 %v747
      %v819 = vpop.f32.mrb[0].mxu0
      %v820 = vadd.f32 0.0, %v819
      %v821 = vpop.f32.mrb[0].mxu0
      %v822 = vadd.f32 0.0, %v821
      %823 = vdwg.mxu0
      %v824 = vadd.f32 %v710, %v820
      %v825 = vadd.f32 %v711, %v822
      %v826 = vlaneseq
      %v827 = vshrl.u32 %v826, 7
      %v828 = vsub.s32 4, %v827
      %v829 = vrot.slane %v368, %v828
      %v830 = vlaneseq
      %v831 = vshrl.u32 %v830, 7
      %v832 = vsub.s32 4, %v831
      %v833 = vrot.slane %v369, %v832
      %v834 = vmul.f32 %v355, %v829
      %v835 = vmul.f32 %v357, %v833
      %v837 = vsel %vm428, %v363, 0
      %v840 = vsel %vm432, %v834, 0
      %v843 = vsel %vm432, %v835, 0
      %845 = vmatprep.subr.mxu0 %v843
      %846 = vmatpush1.msra.mxu0 %v840
      %847 = vmatprep.subr.mxu0 0.0
      %848 = vmatpush1.msra.mxu0 0.0
      %849 = vmatprep.subr.mxu0 0.0
      %850 = vmatpush1.msra.mxu0 0.0
      %851 = vmatprep.subr.mxu0 0.0
      %852 = vmatpush1.msra.mxu0 0.0
      %853 = vmatprep.subr.mxu0 0.0
      %854 = vmatpush1.msra.mxu0 0.0
      %855 = vmatprep.subr.mxu0 0.0
      %856 = vmatpush1.msra.mxu0 0.0
      %857 = vmatprep.subr.mxu0 0.0
      %858 = vmatpush1.msra.mxu0 0.0
      %859 = vmatprep.subr.mxu0 0.0
      %860 = vmatpush1.msra.mxu0 0.0
      %861 = vmatprep.subr.mxu0 0.0
      %862 = vmatpush1.msra.mxu0 0.0
      %863 = vmatprep.subr.mxu0 0.0
      %864 = vmatpush1.msra.mxu0 0.0
      %865 = vmatprep.subr.mxu0 0.0
      %866 = vmatpush1.msra.mxu0 0.0
      %867 = vmatprep.subr.mxu0 0.0
      %868 = vmatpush1.msra.mxu0 0.0
      %869 = vmatprep.subr.mxu0 0.0
      %870 = vmatpush1.msra.mxu0 0.0
      %871 = vmatprep.subr.mxu0 0.0
      %872 = vmatpush1.msra.mxu0 0.0
      %873 = vmatprep.subr.mxu0 0.0
      %874 = vmatpush1.msra.mxu0 0.0
      %875 = vmatprep.subr.mxu0 0.0
      %876 = vmatpush1.msra.mxu0 0.0
      %877 = vmatprep.subr.mxu0 0.0
      %878 = vmatpush1.msra.mxu0 0.0
      %879 = vmatprep.subr.mxu0 0.0
      %880 = vmatpush1.msra.mxu0 0.0
      %881 = vmatprep.subr.mxu0 0.0
      %882 = vmatpush1.msra.mxu0 0.0
      %883 = vmatprep.subr.mxu0 0.0
      %884 = vmatpush1.msra.mxu0 0.0
      %885 = vmatprep.subr.mxu0 0.0
      %886 = vmatpush1.msra.mxu0 0.0
      %887 = vmatprep.subr.mxu0 0.0
      %888 = vmatpush1.msra.mxu0 0.0
      %889 = vmatprep.subr.mxu0 0.0
      %890 = vmatpush1.msra.mxu0 0.0
      %891 = vmatprep.subr.mxu0 0.0
      %892 = vmatpush1.msra.mxu0 0.0
      %893 = vmatprep.subr.mxu0 0.0
      %894 = vmatpush1.msra.mxu0 0.0
      %895 = vmatprep.subr.mxu0 0.0
      %896 = vmatpush1.msra.mxu0 0.0
      %897 = vmatprep.subr.mxu0 0.0
      %898 = vmatpush1.msra.mxu0 0.0
      %899 = vmatprep.subr.mxu0 0.0
      %900 = vmatpush1.msra.mxu0 0.0
      %901 = vmatprep.subr.mxu0 0.0
      %902 = vmatpush1.msra.mxu0 0.0
      %903 = vmatprep.subr.mxu0 0.0
      %904 = vmatpush1.msra.mxu0 0.0
      %905 = vmatprep.subr.mxu0 0.0
      %906 = vmatpush1.msra.mxu0 0.0
      %907 = vmatprep.subr.mxu0 0.0
      %908 = vmatpush1.msra.mxu0 0.0
      %909 = vmatprep.mubr.f32.mxu0 0.0
      %910 = vmatmul.mubr.f32.gmra.mrb[0].mxu0 %v837
      %v911 = vpop.f32.mrb[0].mxu0
      %v912 = vadd.f32 0.0, %v911
      %v913 = vpop.f32.mrb[0].mxu0
      %v914 = vadd.f32 0.0, %v913
      %915 = vdwg.mxu0
      %v916 = vadd.f32 %v824, %v912
      %v917 = vadd.f32 %v825, %v914
      %v918 = vlaneseq
      %v919 = vshrl.u32 %v918, 7
      %v920 = vsub.s32 5, %v919
      %v921 = vrot.slane %v368, %v920
      %v922 = vlaneseq
      %v923 = vshrl.u32 %v922, 7
      %v924 = vsub.s32 5, %v923
      %v925 = vrot.slane %v369, %v924
      %928 = vrot.lane.b32.xlu0 %v921, 1
      %v929 = vpop.permute.xlu0 %928
      %930 = vrot.lane.b32.xlu0 %v925, 1
      %v931 = vpop.permute.xlu0 %930
      %v932 = vsel %vm743, %v929, %v931
      %v936 = vmul.f32 %v355, %v929
      %v937 = vmul.f32 %v357, %v932
      %v938 = vmul.f32 %v931, 0.0
      %942 = vrot.lane.b32.xlu0 %v936, 127
      %v943 = vpop.permute.xlu0 %942
      %944 = vrot.lane.b32.xlu0 %v937, 127
      %v945 = vpop.permute.xlu0 %944
      %946 = vrot.lane.b32.xlu0 %v938, 127
      %v947 = vpop.permute.xlu0 %946
      %v948 = vsel %vm726, %v943, %v945
      %v949 = vsel %vm726, %v945, %v947
      %v951 = vsel %vm428, %v364, 0
      %v953 = vsel %vm432, %v948, 0
      %v955 = vsel %vm432, %v949, 0
      %957 = vmatprep.subr.mxu0 %v955
      %958 = vmatpush1.msra.mxu0 %v953
      %959 = vmatprep.subr.mxu0 0.0
      %960 = vmatpush1.msra.mxu0 0.0
      %961 = vmatprep.subr.mxu0 0.0
      %962 = vmatpush1.msra.mxu0 0.0
      %963 = vmatprep.subr.mxu0 0.0
      %964 = vmatpush1.msra.mxu0 0.0
      %965 = vmatprep.subr.mxu0 0.0
      %966 = vmatpush1.msra.mxu0 0.0
      %967 = vmatprep.subr.mxu0 0.0
      %968 = vmatpush1.msra.mxu0 0.0
      %969 = vmatprep.subr.mxu0 0.0
      %970 = vmatpush1.msra.mxu0 0.0
      %971 = vmatprep.subr.mxu0 0.0
      %972 = vmatpush1.msra.mxu0 0.0
      %973 = vmatprep.subr.mxu0 0.0
      %974 = vmatpush1.msra.mxu0 0.0
      %975 = vmatprep.subr.mxu0 0.0
      %976 = vmatpush1.msra.mxu0 0.0
      %977 = vmatprep.subr.mxu0 0.0
      %978 = vmatpush1.msra.mxu0 0.0
      %979 = vmatprep.subr.mxu0 0.0
      %980 = vmatpush1.msra.mxu0 0.0
      %981 = vmatprep.subr.mxu0 0.0
      %982 = vmatpush1.msra.mxu0 0.0
      %983 = vmatprep.subr.mxu0 0.0
      %984 = vmatpush1.msra.mxu0 0.0
      %985 = vmatprep.subr.mxu0 0.0
      %986 = vmatpush1.msra.mxu0 0.0
      %987 = vmatprep.subr.mxu0 0.0
      %988 = vmatpush1.msra.mxu0 0.0
      %989 = vmatprep.subr.mxu0 0.0
      %990 = vmatpush1.msra.mxu0 0.0
      %991 = vmatprep.subr.mxu0 0.0
      %992 = vmatpush1.msra.mxu0 0.0
      %993 = vmatprep.subr.mxu0 0.0
      %994 = vmatpush1.msra.mxu0 0.0
      %995 = vmatprep.subr.mxu0 0.0
      %996 = vmatpush1.msra.mxu0 0.0
      %997 = vmatprep.subr.mxu0 0.0
      %998 = vmatpush1.msra.mxu0 0.0
      %999 = vmatprep.subr.mxu0 0.0
      %1000 = vmatpush1.msra.mxu0 0.0
      %1001 = vmatprep.subr.mxu0 0.0
      %1002 = vmatpush1.msra.mxu0 0.0
      %1003 = vmatprep.subr.mxu0 0.0
      %1004 = vmatpush1.msra.mxu0 0.0
      %1005 = vmatprep.subr.mxu0 0.0
      %1006 = vmatpush1.msra.mxu0 0.0
      %1007 = vmatprep.subr.mxu0 0.0
      %1008 = vmatpush1.msra.mxu0 0.0
      %1009 = vmatprep.subr.mxu0 0.0
      %1010 = vmatpush1.msra.mxu0 0.0
      %1011 = vmatprep.subr.mxu0 0.0
      %1012 = vmatpush1.msra.mxu0 0.0
      %1013 = vmatprep.subr.mxu0 0.0
      %1014 = vmatpush1.msra.mxu0 0.0
      %1015 = vmatprep.subr.mxu0 0.0
      %1016 = vmatpush1.msra.mxu0 0.0
      %1017 = vmatprep.subr.mxu0 0.0
      %1018 = vmatpush1.msra.mxu0 0.0
      %1019 = vmatprep.subr.mxu0 0.0
      %1020 = vmatpush1.msra.mxu0 0.0
      %1021 = vmatprep.mubr.f32.mxu0 0.0
      %1022 = vmatmul.mubr.f32.gmra.mrb[0].mxu0 %v951
      %v1023 = vpop.f32.mrb[0].mxu0
      %v1024 = vadd.f32 0.0, %v1023
      %v1025 = vpop.f32.mrb[0].mxu0
      %v1026 = vadd.f32 0.0, %v1025
      %1027 = vdwg.mxu0
      %v1028 = vadd.f32 %v916, %v1024
      %v1029 = vadd.f32 %v917, %v1026
      %v1030 = vlaneseq
      %v1031 = vshrl.u32 %v1030, 7
      %v1032 = vsub.s32 6, %v1031
      %v1033 = vrot.slane %v368, %v1032
      %v1034 = vlaneseq
      %v1035 = vshrl.u32 %v1034, 7
      %v1036 = vsub.s32 6, %v1035
      %v1037 = vrot.slane %v369, %v1036
      %1040 = vrot.lane.b32.xlu0 %v1033, 15
      %v1041 = vpop.permute.xlu0 %1040
      %1042 = vrot.lane.b32.xlu0 %v1037, 15
      %v1043 = vpop.permute.xlu0 %1042
      %v1044 = vsel %vm629, %v1041, %v1043
      %v1048 = vmul.f32 %v355, %v1041
      %v1049 = vmul.f32 %v357, %v1044
      %v1050 = vmul.f32 %v1043, 0.0
      %1054 = vrot.lane.b32.xlu0 %v1048, 113
      %v1055 = vpop.permute.xlu0 %1054
      %1056 = vrot.lane.b32.xlu0 %v1049, 113
      %v1057 = vpop.permute.xlu0 %1056
      %1058 = vrot.lane.b32.xlu0 %v1050, 113
      %v1059 = vpop.permute.xlu0 %1058
      %v1060 = vsel %vm612, %v1055, %v1057
      %v1061 = vsel %vm612, %v1057, %v1059
      %v1063 = vsel %vm428, %v365, 0
      %v1065 = vsel %vm432, %v1060, 0
      %v1067 = vsel %vm432, %v1061, 0
      %1069 = vmatprep.subr.mxu0 %v1067
      %1070 = vmatpush1.msra.mxu0 %v1065
      %1071 = vmatprep.subr.mxu0 0.0
      %1072 = vmatpush1.msra.mxu0 0.0
      %1073 = vmatprep.subr.mxu0 0.0
      %1074 = vmatpush1.msra.mxu0 0.0
      %1075 = vmatprep.subr.mxu0 0.0
      %1076 = vmatpush1.msra.mxu0 0.0
      %1077 = vmatprep.subr.mxu0 0.0
      %1078 = vmatpush1.msra.mxu0 0.0
      %1079 = vmatprep.subr.mxu0 0.0
      %1080 = vmatpush1.msra.mxu0 0.0
      %1081 = vmatprep.subr.mxu0 0.0
      %1082 = vmatpush1.msra.mxu0 0.0
      %1083 = vmatprep.subr.mxu0 0.0
      %1084 = vmatpush1.msra.mxu0 0.0
      %1085 = vmatprep.subr.mxu0 0.0
      %1086 = vmatpush1.msra.mxu0 0.0
      %1087 = vmatprep.subr.mxu0 0.0
      %1088 = vmatpush1.msra.mxu0 0.0
      %1089 = vmatprep.subr.mxu0 0.0
      %1090 = vmatpush1.msra.mxu0 0.0
      %1091 = vmatprep.subr.mxu0 0.0
      %1092 = vmatpush1.msra.mxu0 0.0
      %1093 = vmatprep.subr.mxu0 0.0
      %1094 = vmatpush1.msra.mxu0 0.0
      %1095 = vmatprep.subr.mxu0 0.0
      %1096 = vmatpush1.msra.mxu0 0.0
      %1097 = vmatprep.subr.mxu0 0.0
      %1098 = vmatpush1.msra.mxu0 0.0
      %1099 = vmatprep.subr.mxu0 0.0
      %1100 = vmatpush1.msra.mxu0 0.0
      %1101 = vmatprep.subr.mxu0 0.0
      %1102 = vmatpush1.msra.mxu0 0.0
      %1103 = vmatprep.subr.mxu0 0.0
      %1104 = vmatpush1.msra.mxu0 0.0
      %1105 = vmatprep.subr.mxu0 0.0
      %1106 = vmatpush1.msra.mxu0 0.0
      %1107 = vmatprep.subr.mxu0 0.0
      %1108 = vmatpush1.msra.mxu0 0.0
      %1109 = vmatprep.subr.mxu0 0.0
      %1110 = vmatpush1.msra.mxu0 0.0
      %1111 = vmatprep.subr.mxu0 0.0
      %1112 = vmatpush1.msra.mxu0 0.0
      %1113 = vmatprep.subr.mxu0 0.0
      %1114 = vmatpush1.msra.mxu0 0.0
      %1115 = vmatprep.subr.mxu0 0.0
      %1116 = vmatpush1.msra.mxu0 0.0
      %1117 = vmatprep.subr.mxu0 0.0
      %1118 = vmatpush1.msra.mxu0 0.0
      %1119 = vmatprep.subr.mxu0 0.0
      %1120 = vmatpush1.msra.mxu0 0.0
      %1121 = vmatprep.subr.mxu0 0.0
      %1122 = vmatpush1.msra.mxu0 0.0
      %1123 = vmatprep.subr.mxu0 0.0
      %1124 = vmatpush1.msra.mxu0 0.0
      %1125 = vmatprep.subr.mxu0 0.0
      %1126 = vmatpush1.msra.mxu0 0.0
      %1127 = vmatprep.subr.mxu0 0.0
      %1128 = vmatpush1.msra.mxu0 0.0
      %1129 = vmatprep.subr.mxu0 0.0
      %1130 = vmatpush1.msra.mxu0 0.0
      %1131 = vmatprep.subr.mxu0 0.0
      %1132 = vmatpush1.msra.mxu0 0.0
      %1133 = vmatprep.mubr.f32.mxu0 0.0
      %1134 = vmatmul.mubr.f32.gmra.mrb[0].mxu0 %v1063
      %v1135 = vpop.f32.mrb[0].mxu0
      %v1136 = vadd.f32 0.0, %v1135
      %v1137 = vpop.f32.mrb[0].mxu0
      %v1138 = vadd.f32 0.0, %v1137
      %1139 = vdwg.mxu0
      %v1140 = vadd.f32 %v1028, %v1136
      %v1141 = vadd.f32 %v1029, %v1138
      %v1142 = vlaneseq
      %v1143 = vshrl.u32 %v1142, 7
      %v1144 = vsub.s32 7, %v1143
      %v1145 = vrot.slane %v368, %v1144
      %v1146 = vlaneseq
      %v1147 = vshrl.u32 %v1146, 7
      %v1148 = vsub.s32 7, %v1147
      %v1149 = vrot.slane %v369, %v1148
      %1152 = vrot.lane.b32.xlu0 %v1145, 16
      %v1153 = vpop.permute.xlu0 %1152
      %1154 = vrot.lane.b32.xlu0 %v1149, 16
      %v1155 = vpop.permute.xlu0 %1154
      %v1156 = vsel %vm425, %v1153, %v1155
      %v1160 = vmul.f32 %v355, %v1153
      %v1161 = vmul.f32 %v357, %v1156
      %v1162 = vmul.f32 %v1155, 0.0
      %1166 = vrot.lane.b32.xlu0 %v1160, 112
      %v1167 = vpop.permute.xlu0 %1166
      %1168 = vrot.lane.b32.xlu0 %v1161, 112
      %v1169 = vpop.permute.xlu0 %1168
      %1170 = vrot.lane.b32.xlu0 %v1162, 112
      %v1171 = vpop.permute.xlu0 %1170
      %v1172 = vsel %vm408, %v1167, %v1169
      %v1173 = vsel %vm408, %v1169, %v1171
      %v1175 = vsel %vm428, %v366, 0
      %v1177 = vsel %vm432, %v1172, 0
      %v1179 = vsel %vm432, %v1173, 0
      %1181 = vmatprep.subr.mxu0 %v1179
      %1182 = vmatpush1.msra.mxu0 %v1177
      %1183 = vmatprep.subr.mxu0 0.0
      %1184 = vmatpush1.msra.mxu0 0.0
      %1185 = vmatprep.subr.mxu0 0.0
      %1186 = vmatpush1.msra.mxu0 0.0
      %1187 = vmatprep.subr.mxu0 0.0
      %1188 = vmatpush1.msra.mxu0 0.0
      %1189 = vmatprep.subr.mxu0 0.0
      %1190 = vmatpush1.msra.mxu0 0.0
      %1191 = vmatprep.subr.mxu0 0.0
      %1192 = vmatpush1.msra.mxu0 0.0
      %1193 = vmatprep.subr.mxu0 0.0
      %1194 = vmatpush1.msra.mxu0 0.0
      %1195 = vmatprep.subr.mxu0 0.0
      %1196 = vmatpush1.msra.mxu0 0.0
      %1197 = vmatprep.subr.mxu0 0.0
      %1198 = vmatpush1.msra.mxu0 0.0
      %1199 = vmatprep.subr.mxu0 0.0
      %1200 = vmatpush1.msra.mxu0 0.0
      %1201 = vmatprep.subr.mxu0 0.0
      %1202 = vmatpush1.msra.mxu0 0.0
      %1203 = vmatprep.subr.mxu0 0.0
      %1204 = vmatpush1.msra.mxu0 0.0
      %1205 = vmatprep.subr.mxu0 0.0
      %1206 = vmatpush1.msra.mxu0 0.0
      %1207 = vmatprep.subr.mxu0 0.0
      %1208 = vmatpush1.msra.mxu0 0.0
      %1209 = vmatprep.subr.mxu0 0.0
      %1210 = vmatpush1.msra.mxu0 0.0
      %1211 = vmatprep.subr.mxu0 0.0
      %1212 = vmatpush1.msra.mxu0 0.0
      %1213 = vmatprep.subr.mxu0 0.0
      %1214 = vmatpush1.msra.mxu0 0.0
      %1215 = vmatprep.subr.mxu0 0.0
      %1216 = vmatpush1.msra.mxu0 0.0
      %1217 = vmatprep.subr.mxu0 0.0
      %1218 = vmatpush1.msra.mxu0 0.0
      %1219 = vmatprep.subr.mxu0 0.0
      %1220 = vmatpush1.msra.mxu0 0.0
      %1221 = vmatprep.subr.mxu0 0.0
      %1222 = vmatpush1.msra.mxu0 0.0
      %1223 = vmatprep.subr.mxu0 0.0
      %1224 = vmatpush1.msra.mxu0 0.0
      %1225 = vmatprep.subr.mxu0 0.0
      %1226 = vmatpush1.msra.mxu0 0.0
      %1227 = vmatprep.subr.mxu0 0.0
      %1228 = vmatpush1.msra.mxu0 0.0
      %1229 = vmatprep.subr.mxu0 0.0
      %1230 = vmatpush1.msra.mxu0 0.0
      %1231 = vmatprep.subr.mxu0 0.0
      %1232 = vmatpush1.msra.mxu0 0.0
      %1233 = vmatprep.subr.mxu0 0.0
      %1234 = vmatpush1.msra.mxu0 0.0
      %1235 = vmatprep.subr.mxu0 0.0
      %1236 = vmatpush1.msra.mxu0 0.0
      %1237 = vmatprep.subr.mxu0 0.0
      %1238 = vmatpush1.msra.mxu0 0.0
      %1239 = vmatprep.subr.mxu0 0.0
      %1240 = vmatpush1.msra.mxu0 0.0
      %1241 = vmatprep.subr.mxu0 0.0
      %1242 = vmatpush1.msra.mxu0 0.0
      %1243 = vmatprep.subr.mxu0 0.0
      %1244 = vmatpush1.msra.mxu0 0.0
      %1245 = vmatprep.mubr.f32.mxu0 0.0
      %1246 = vmatmul.mubr.f32.gmra.mrb[0].mxu0 %v1175
      %v1247 = vpop.f32.mrb[0].mxu0
      %v1248 = vadd.f32 0.0, %v1247
      %v1249 = vpop.f32.mrb[0].mxu0
      %v1250 = vadd.f32 0.0, %v1249
      %1251 = vdwg.mxu0
      %v1252 = vadd.f32 %v1140, %v1248
      %v1253 = vadd.f32 %v1141, %v1250
      %v1254 = vlaneseq
      %v1255 = vshrl.u32 %v1254, 7
      %v1256 = vsub.s32 0, %v1255
      %v1257 = vrot.slane %v370, %v1256
      %v1258 = vlaneseq
      %v1259 = vshrl.u32 %v1258, 7
      %v1260 = vsub.s32 0, %v1259
      %v1261 = vrot.slane %v371, %v1260
      %1264 = vrot.lane.b32.xlu0 %v1257, 17
      %v1265 = vpop.permute.xlu0 %1264
      %1266 = vrot.lane.b32.xlu0 %v1261, 17
      %v1267 = vpop.permute.xlu0 %1266
      %v1268 = vsel %vm517, %v1265, %v1267
      %v1272 = vmul.f32 %v355, %v1265
      %v1273 = vmul.f32 %v357, %v1268
      %v1274 = vmul.f32 %v1267, 0.0
      %1278 = vrot.lane.b32.xlu0 %v1272, 111
      %v1279 = vpop.permute.xlu0 %1278
      %1280 = vrot.lane.b32.xlu0 %v1273, 111
      %v1281 = vpop.permute.xlu0 %1280
      %1282 = vrot.lane.b32.xlu0 %v1274, 111
      %v1283 = vpop.permute.xlu0 %1282
      %v1284 = vsel %vm386, %v1279, %v1281
      %v1285 = vsel %vm386, %v1281, %v1283
      %v1287 = vsel %vm428, %v367, 0
      %v1289 = vsel %vm432, %v1284, 0
      %v1291 = vsel %vm432, %v1285, 0
      %1293 = vmatprep.subr.mxu0 %v1291
      %1294 = vmatpush1.msra.mxu0 %v1289
      %1295 = vmatprep.subr.mxu0 0.0
      %1296 = vmatpush1.msra.mxu0 0.0
      %1297 = vmatprep.subr.mxu0 0.0
      %1298 = vmatpush1.msra.mxu0 0.0
      %1299 = vmatprep.subr.mxu0 0.0
      %1300 = vmatpush1.msra.mxu0 0.0
      %1301 = vmatprep.subr.mxu0 0.0
      %1302 = vmatpush1.msra.mxu0 0.0
      %1303 = vmatprep.subr.mxu0 0.0
      %1304 = vmatpush1.msra.mxu0 0.0
      %1305 = vmatprep.subr.mxu0 0.0
      %1306 = vmatpush1.msra.mxu0 0.0
      %1307 = vmatprep.subr.mxu0 0.0
      %1308 = vmatpush1.msra.mxu0 0.0
      %1309 = vmatprep.subr.mxu0 0.0
      %1310 = vmatpush1.msra.mxu0 0.0
      %1311 = vmatprep.subr.mxu0 0.0
      %1312 = vmatpush1.msra.mxu0 0.0
      %1313 = vmatprep.subr.mxu0 0.0
      %1314 = vmatpush1.msra.mxu0 0.0
      %1315 = vmatprep.subr.mxu0 0.0
      %1316 = vmatpush1.msra.mxu0 0.0
      %1317 = vmatprep.subr.mxu0 0.0
      %1318 = vmatpush1.msra.mxu0 0.0
      %1319 = vmatprep.subr.mxu0 0.0
      %1320 = vmatpush1.msra.mxu0 0.0
      %1321 = vmatprep.subr.mxu0 0.0
      %1322 = vmatpush1.msra.mxu0 0.0
      %1323 = vmatprep.subr.mxu0 0.0
      %1324 = vmatpush1.msra.mxu0 0.0
      %1325 = vmatprep.subr.mxu0 0.0
      %1326 = vmatpush1.msra.mxu0 0.0
      %1327 = vmatprep.subr.mxu0 0.0
      %1328 = vmatpush1.msra.mxu0 0.0
      %1329 = vmatprep.subr.mxu0 0.0
      %1330 = vmatpush1.msra.mxu0 0.0
      %1331 = vmatprep.subr.mxu0 0.0
      %1332 = vmatpush1.msra.mxu0 0.0
      %1333 = vmatprep.subr.mxu0 0.0
      %1334 = vmatpush1.msra.mxu0 0.0
      %1335 = vmatprep.subr.mxu0 0.0
      %1336 = vmatpush1.msra.mxu0 0.0
      %1337 = vmatprep.subr.mxu0 0.0
      %1338 = vmatpush1.msra.mxu0 0.0
      %1339 = vmatprep.subr.mxu0 0.0
      %1340 = vmatpush1.msra.mxu0 0.0
      %1341 = vmatprep.subr.mxu0 0.0
      %1342 = vmatpush1.msra.mxu0 0.0
      %1343 = vmatprep.subr.mxu0 0.0
      %1344 = vmatpush1.msra.mxu0 0.0
      %1345 = vmatprep.subr.mxu0 0.0
      %1346 = vmatpush1.msra.mxu0 0.0
      %1347 = vmatprep.subr.mxu0 0.0
      %1348 = vmatpush1.msra.mxu0 0.0
      %1349 = vmatprep.subr.mxu0 0.0
      %1350 = vmatpush1.msra.mxu0 0.0
      %1351 = vmatprep.subr.mxu0 0.0
      %1352 = vmatpush1.msra.mxu0 0.0
      %1353 = vmatprep.subr.mxu0 0.0
      %1354 = vmatpush1.msra.mxu0 0.0
      %1355 = vmatprep.subr.mxu0 0.0
      %1356 = vmatpush1.msra.mxu0 0.0
      %1357 = vmatprep.mubr.f32.mxu0 0.0
      %1358 = vmatmul.mubr.f32.gmra.mrb[0].mxu0 %v1287
      %v1359 = vpop.f32.mrb[0].mxu0
      %v1360 = vadd.f32 0.0, %v1359
      %v1361 = vpop.f32.mrb[0].mxu0
      %v1362 = vadd.f32 0.0, %v1361
      %1363 = vdwg.mxu0
      %v1364 = vadd.f32 %v1252, %v1360
      %v1365 = vadd.f32 %v1253, %v1362
      %v1366 = vld [vmem:[%s2] sm:$0xff]
      %1368 = vset.pattern.permute.xlu0 0
      %1369 = vperm.xlu0 %1368, %v1366
      %v1370 = vpop.permute.xlu0 %1369
      %v1372 = vadd.f32 %v1364, %v1370
      %v1373 = vadd.f32 %v1365, %v1370
      %v1374 = vmax.f32 %v1372, 0.0
      %v1375 = vmax.f32 %v1373, 0.0
      %1376 = vst [vmem:[%s318] sm:$0xff] %v1374
      %1377 = vst [vmem:[%s318 + $0x8] sm:$0xff] %v1375
      %v1378 = vadd.f32 %v1374, %v1375
      %1379 = vadd.xlane.f32.xlu0 %v1378
      %v1380 = vpop.xlane.xlu0 %1379
      %1381 = vst.msk [vmem:[%s322] sm:$0xff] %vm743, %v1380
      %v1382 = vmul.f32 %v1374, %v1374
      %v1383 = vmul.f32 %v1375, %v1375
      %v1384 = vadd.f32 %v1382, %v1383
      %1385 = vadd.xlane.f32.xlu0 %v1384
      %v1386 = vpop.xlane.xlu0 %1385
      %1387 = vst.msk [vmem:[%s326] sm:$0xff] %vm743, %v1386
      %p1388 = scmp.lt.s32.totalorder %s20, 1
      %s1389 = scalar_select %p1388, %s20, 1
      %s1390 = smul.addr %s1389, 2
      %s1391 = smul.addr %s1390, 8
      %s1392 = scalar_lea.vmem %s6, %s1391
      %p1393 = scmp.lt.s32.totalorder %s20, 1
      %s1394 = scalar_select %p1393, %s20, 1
      %s1395 = smul.addr %s1394, 8
      %s1396 = scalar_lea.vmem %s7, %s1395
      %p1397 = scmp.lt.s32.totalorder %s20, 1
      %s1398 = scalar_select %p1397, %s20, 1
      %s1399 = smul.addr %s1398, 8
      %s1400 = scalar_lea.vmem %s8, %s1399
      // Predicated region
      $region45: #{conv_block_forward.3} parent=43 // pred_check
        %p1401 = pneg %p169
      $region46: #{conv_block_forward.3} parent=43 // pred_check_branch
        %1403 = sbr.rel (%p1401) target = $region48
      $region47: #{conv_block_forward.3} parent=43 // pred_region
        _
      $region48: #{conv_block_forward.3} parent=43 // pred_fallthru
        _
      // Predicated region
      $region49: #{conv_block_forward.3} parent=43 // pred_check
        %p1404 = pneg %p195
      $region50: #{conv_block_forward.3} parent=43 // pred_check_branch
        %1406 = sbr.rel (%p1404) target = $region52
      $region51: #{conv_block_forward.3} parent=43 // pred_region
        _
      $region52: #{conv_block_forward.3} parent=43 // pred_fallthru
        _
      // Predicated region
      $region53: #{conv_block_forward.3} parent=43 // pred_check
        %p1407 = pneg %p221
      $region54: #{conv_block_forward.3} parent=43 // pred_check_branch
        %1409 = sbr.rel (%p1407) target = $region56
      $region55: #{conv_block_forward.3} parent=43 // pred_region
        _
      $region56: #{conv_block_forward.3} parent=43 // pred_fallthru
        _
    $region44: #{conv_block_forward.3} parent=5 // pred_fallthru
      _
    %p1410 = scmp.le.s32.totalorder 2, %s15
    // Predicated region
    $region57: #{conv_block_forward.3} parent=5 // pred_check
      %p1411 = pneg %p1410
    $region58: #{conv_block_forward.3} parent=5 // pred_check_branch
      %1413 = sbr.rel (%p1411) target = $region60
    $region59: #{conv_block_forward.3} parent=5 // pred_region
      %s1414 = ssub.s32 %s15, 2
      // Predicated region
      $region61: #{conv_block_forward.3} parent=59 // pred_check
        %p1415 = pneg %p175
      $region62: #{conv_block_forward.3} parent=59 // pred_check_branch
        %1417 = sbr.rel (%p1415) target = $region64
      $region63: #{conv_block_forward.3} parent=59 // pred_region
        %p1418 = scmp.lt.s32.totalorder %s21, 1
        %s1419 = scalar_select %p1418, %s21, 1
        %s1420 = smul.addr %s1419, 2
        %s1421 = smul.addr %s1420, 8
        %s1422 = scalar_lea.vmem %s6, %s1421
      $region64: #{conv_block_forward.3} parent=59 // pred_fallthru
        _
      // Predicated region
      $region65: #{conv_block_forward.3} parent=59 // pred_check
        %p1423 = pneg %p201
      $region66: #{conv_block_forward.3} parent=59 // pred_check_branch
        %1425 = sbr.rel (%p1423) target = $region68
      $region67: #{conv_block_forward.3} parent=59 // pred_region
        %p1426 = scmp.lt.s32.totalorder %s21, 1
        %s1427 = scalar_select %p1426, %s21, 1
        %s1428 = smul.addr %s1427, 8
        %s1429 = scalar_lea.vmem %s7, %s1428
      $region68: #{conv_block_forward.3} parent=59 // pred_fallthru
        _
      // Predicated region
      $region69: #{conv_block_forward.3} parent=59 // pred_check
        %p1430 = pneg %p227
      $region70: #{conv_block_forward.3} parent=59 // pred_check_branch
        %1432 = sbr.rel (%p1430) target = $region72
      $region71: #{conv_block_forward.3} parent=59 // pred_region
        %p1433 = scmp.lt.s32.totalorder %s21, 1
        %s1434 = scalar_select %p1433, %s21, 1
        %s1435 = smul.addr %s1434, 8
        %s1436 = scalar_lea.vmem %s8, %s1435
      $region72: #{conv_block_forward.3} parent=59 // pred_fallthru
        _
    $region60: #{conv_block_forward.3} parent=5 // pred_fallthru
      _
  $region6: #{conv_block_forward.3} parent=0 // loop_footer
    %s19 = sadd.s32 1, %s15
  $region7: #{conv_block_forward.3} parent=0 // loop_footer_branch
    %14 = sbr.rel target = $region3
  $region8: #{conv_block_forward.3} parent=0 // loop_exit
    _

</llo_original>
